<compile_context>
chip_gen: v7x
topology: tpu7x:2x2x1
jax: 0.10.0
libtpu: 0.0.40
codegen_flags: <defaults>
</compile_context>

<pallas_src>
import functools
import math

import jax
import jax.numpy as jnp
from jax import lax
from jax.experimental import pallas as pl
from jax.experimental.pallas import tpu as pltpu

LANE = 128


def _round_up(x, m):
    return ((x + m - 1) // m) * m


# ----------------------------------------------------------------------------
# Fused Pallas kernel
# ----------------------------------------------------------------------------
def _conv_same_block(x3d, w_ref, b_ref, *, L):
    """'same' Conv1d on a (B_blk, L, Cin) block (channels-last), f32 accum.

    w_ref: (K, Cin, Cout_pad)   b_ref: (1, Cout_pad)

    When Cin is a multiple of 128 the conv is a single im2col matmul
    (contraction K*Cin). Otherwise (only conv1, tiny Cin) it uses K
    batch-folded shifted-tap matmuls, which lower unconditionally.
    """
    Bblk = x3d.shape[0]
    Cin = x3d.shape[2]
    K, _, Coutp = w_ref.shape
    left = (K - 1) // 2
    right = (K - 1) - left

    # Zero halo rows in VMEM (no wrapper-side jnp.pad / HBM copies).
    parts = []
    if left > 0:
        parts.append(jnp.zeros((Bblk, left, Cin), jnp.float32))
    parts.append(x3d)
    if right > 0:
        parts.append(jnp.zeros((Bblk, right, Cin), jnp.float32))
    xp = jnp.concatenate(parts, axis=1) if len(parts) > 1 else x3d

    if Cin % LANE == 0:
        # im2col: one big matmul, contraction = K * Cin.
        cols = jnp.concatenate([xp[:, j:j + L, :] for j in range(K)], axis=-1)
        cols2d = cols.reshape(Bblk * L, K * Cin)
        w2d = w_ref[...].reshape(K * Cin, Coutp)
        y = jnp.dot(cols2d, w2d, preferred_element_type=jnp.float32)
    else:
        # K shifted taps, batch folded into M (only the tiny first layer).
        y = jnp.zeros((Bblk * L, Coutp), jnp.float32)
        for j in range(K):
            y = y + jnp.dot(
                xp[:, j:j + L, :].reshape(Bblk * L, Cin),
                w_ref[j],
                preferred_element_type=jnp.float32,
            )
    y = y + b_ref[...]
    return y.reshape(Bblk, L, Coutp)


def _fused_net_kernel(x_ref, w1_ref, b1_ref, w2_ref, b2_ref, w3_ref, b3_ref,
                      wfc_ref, bfc_ref, o_ref, *, L, D, activation):
    x = x_ref[...].astype(jnp.float32)                   # (B_blk, L, Cin)

    y1 = _conv_same_block(x, w1_ref, b1_ref, L=L)        # (B_blk, L, 128)
    y2 = _conv_same_block(y1, w2_ref, b2_ref, L=L)       # (B_blk, L, 128)
    y3 = _conv_same_block(y2, w3_ref, b3_ref, L=L)       # (B_blk, L, 128)

    ydec = y3[:, L - D:, :]                              # (B_blk, D, 128)
    if activation == "relu":
        ydec = jnp.maximum(ydec, 0.0)
    elif activation == "tanh":
        ydec = jnp.tanh(ydec)
    # "none" -> identity

    # FC head as ONE MXU matmul: concat the D time-slabs along lanes
    # (padded channels are exact zeros, so they contribute nothing).
    Bblk = ydec.shape[0]
    flat = jnp.concatenate([ydec[:, t, :] for t in range(D)], axis=-1)
    flat = flat.reshape(Bblk, D * ydec.shape[2])         # (B_blk, D*128)
    out = jnp.dot(flat, wfc_ref[...],
                  preferred_element_type=jnp.float32) + bfc_ref[...]
    o_ref[...] = out.astype(o_ref.dtype)


# ----------------------------------------------------------------------------
# Parameter construction (torch layout) + one-time packing for the kernel
# ----------------------------------------------------------------------------
def init_net_params(key, feat_dim, decode_len):
    dim1, dim2, dim3 = 100, 50, 25

    def conv_init(key, cout, cin, k):
        kw, kb = jax.random.split(key)
        bound = 1.0 / math.sqrt(cin * k)
        w = jax.random.uniform(kw, (cout, cin, k), jnp.float32, -bound, bound)
        b = jax.random.uniform(kb, (cout,), jnp.float32, -bound, bound)
        return w, b

    def linear_init(key, out_f, in_f):
        kw, kb = jax.random.split(key)
        bound = 1.0 / math.sqrt(in_f)
        w = jax.random.uniform(kw, (out_f, in_f), jnp.float32, -bound, bound)
        b = jax.random.uniform(kb, (out_f,), jnp.float32, -bound, bound)
        return w, b

    k1, k2, k3, k4 = jax.random.split(key, 4)
    return {
        "conv1": conv_init(k1, dim1, feat_dim, 4),
        "conv2": conv_init(k2, dim2, dim1, 8),
        "conv3": conv_init(k3, dim3, dim2, 16),
        "fc": linear_init(k4, decode_len, dim3 * decode_len),
    }


def pack_net_params(params, decode_len):
    """One-time: transpose + zero-pad weights to the DMA-ready kernel layout."""
    (w1, b1), (w2, b2), (w3, b3) = params["conv1"], params["conv2"], params["conv3"]
    wfc, bfc = params["fc"]
    C1, C2, C3 = w1.shape[0], w2.shape[0], w3.shape[0]
    C1p, C2p, C3p = (_round_up(c, LANE) for c in (C1, C2, C3))

    def pack_conv(w, b, cin_pad):
        cout, cin, k = w.shape
        coutp = _round_up(cout, LANE)
        wk = jnp.transpose(w, (2, 1, 0))                       # (K, Cin, Cout)
        wk = jnp.pad(wk, ((0, 0), (0, cin_pad - cin), (0, coutp - cout)))
        bb = jnp.pad(b, (0, coutp - cout)).reshape(1, coutp)
        return wk.astype(jnp.float32), bb.astype(jnp.float32)

    pw1, pb1 = pack_conv(w1, b1, w1.shape[1])   # conv1 keeps raw feat_dim in
    pw2, pb2 = pack_conv(w2, b2, C1p)
    pw3, pb3 = pack_conv(w3, b3, C2p)

    out_dim, fin = wfc.shape
    assert fin == C3 * decode_len
    outp = _round_up(out_dim, LANE)
    # Flatten order in the module: index = t * C3 + c  (time-major).
    wfc3 = wfc.reshape(out_dim, decode_len, C3)                 # (Out, D, C3)
    wfc3 = jnp.pad(wfc3, ((0, outp - out_dim), (0, 0), (0, C3p - C3)))
    wfc2 = jnp.transpose(wfc3, (1, 2, 0)).reshape(decode_len * C3p, outp)
    pbfc = jnp.pad(bfc, (0, outp - out_dim)).reshape(1, outp)

    return {
        "w1": pw1, "b1": pb1, "w2": pw2, "b2": pb2, "w3": pw3, "b3": pb3,
        "wfc": wfc2.astype(jnp.float32), "bfc": pbfc.astype(jnp.float32),
        "out_dim": out_dim,
    }


# ----------------------------------------------------------------------------
# Forward pass: single fused pallas_call
# ----------------------------------------------------------------------------
def net_forward(packed, X, decode_len, activation="relu", batch_block=None):
    """X: (B, encode_len, feat_dim) — same input as the PyTorch module."""
    if activation not in ("relu", "tanh", "none"):
        raise ValueError(f"Unrecognized activation: {activation}")
    B, L, Cin = X.shape
    OutP = packed["bfc"].shape[1]
    if batch_block is None:
        # VMEM-friendly default (M = B_blk * L per conv matmul). Fine for all
        # of v5e/v6e/v7x at these layer widths; sweep for very large batches.
        batch_block = min(B, 32)
    Bb = int(batch_block)

    kernel = functools.partial(_fused_net_kernel, L=L, D=decode_len,
                               activation=activation)
    out_padded = pl.pallas_call(
        kernel,
        out_shape=jax.ShapeDtypeStruct((B, OutP), X.dtype),
        grid=(pl.cdiv(B, Bb),),
        in_specs=[
            pl.BlockSpec((Bb, L, Cin), lambda bi: (bi, 0, 0)),
            # Weights/biases: full block + constant index_map -> VMEM resident.
            pl.BlockSpec(packed["w1"].shape, lambda bi: (0, 0, 0)),
            pl.BlockSpec(packed["b1"].shape, lambda bi: (0, 0)),
            pl.BlockSpec(packed["w2"].shape, lambda bi: (0, 0, 0)),
            pl.BlockSpec(packed["b2"].shape, lambda bi: (0, 0)),
            pl.BlockSpec(packed["w3"].shape, lambda bi: (0, 0, 0)),
            pl.BlockSpec(packed["b3"].shape, lambda bi: (0, 0)),
            pl.BlockSpec(packed["wfc"].shape, lambda bi: (0, 0)),
            pl.BlockSpec(packed["bfc"].shape, lambda bi: (0, 0)),
        ],
        out_specs=pl.BlockSpec((Bb, OutP), lambda bi: (bi, 0)),
        compiler_params=pltpu.CompilerParams(
            dimension_semantics=("parallel",)),
    )(X, packed["w1"], packed["b1"], packed["w2"], packed["b2"],
      packed["w3"], packed["b3"], packed["wfc"], packed["bfc"])

    return out_padded[:, :packed["out_dim"]]


# ----------------------------------------------------------------------------
# Pure-JAX reference (correctness check only)
# ----------------------------------------------------------------------------
def _ref_conv1d_same(x, w, b):
    cout, cin, k = w.shape
    left = (k - 1) // 2
    right = (k - 1) - left
    wk = jnp.transpose(w, (2, 1, 0))                           # (K, Cin, Cout)
    y = lax.conv_general_dilated(
        x, wk, window_strides=(1,), padding=[(left, right)],
        dimension_numbers=("NWC", "WIO", "NWC"))
    return y + b


def net_forward_ref(params, X, decode_len, activation="relu"):
    x = _ref_conv1d_same(X, *params["conv1"])
    x = _ref_conv1d_same(x, *params["conv2"])
    x = _ref_conv1d_same(x, *params["conv3"])
    x = x[:, -decode_len:, :]
    x = x.reshape(x.shape[0], -1)
    if activation == "relu":
        x = jnp.maximum(x, 0.0)
    elif activation == "tanh":
        x = jnp.tanh(x)
    w, b = params["fc"]
    return x @ w.T + b


# ----------------------------------------------------------------------------
if __name__ == "__main__":
    batch = 2
    feat_dim = 4
    encode_len = 16
    decode_len = 8
    activation = "relu"

    key = jax.random.PRNGKey(0)
    kx, kp = jax.random.split(key)
    X = jax.random.normal(kx, (batch, encode_len, feat_dim), jnp.float32)
    params = init_net_params(kp, feat_dim, decode_len)
    packed = pack_net_params(params, decode_len)

    out = net_forward(packed, X, decode_len, activation)
    out = jax.block_until_ready(out)

    ref = net_forward_ref(params, X, decode_len, activation)
    assert out.shape == (batch, decode_len)
    assert jnp.allclose(out, ref, atol=1e-4, rtol=1e-4), "mismatch vs reference"

    print("KERNEL_OK")
</pallas_src>

<mosaic_0001>
module attributes {stable_mosaic.version = 11 : i64} {
  func.func @_fused_net_kernel(%arg0: i32, %arg1: memref<2x16x4xf32, #tpu.memory_space<vmem>>, %arg2: memref<4x4x128xf32, #tpu.memory_space<vmem>>, %arg3: memref<1x128xf32, #tpu.memory_space<vmem>>, %arg4: memref<8x128x128xf32, #tpu.memory_space<vmem>>, %arg5: memref<1x128xf32, #tpu.memory_space<vmem>>, %arg6: memref<16x128x128xf32, #tpu.memory_space<vmem>>, %arg7: memref<1x128xf32, #tpu.memory_space<vmem>>, %arg8: memref<1024x128xf32, #tpu.memory_space<vmem>>, %arg9: memref<1x128xf32, #tpu.memory_space<vmem>>, %arg10: memref<2x128xf32, #tpu.memory_space<vmem>>) attributes {dimension_semantics = [#tpu.dimension_semantics<parallel>], iteration_bounds = array<i64: 1>, scalar_prefetch = 0 : i64, scratch_operands = 0 : i64, tpu.core_type = #tpu.core_type<tc>, window_params = [{transform_indices = @transform_0, window_bounds = array<i64: 2, 16, 4>}, {pipeline_mode = #tpu.pipeline_mode<synchronous>, transform_indices = @transform_1, window_bounds = array<i64: 4, 4, 128>}, {pipeline_mode = #tpu.pipeline_mode<synchronous>, transform_indices = @transform_2, window_bounds = array<i64: 1, 128>}, {pipeline_mode = #tpu.pipeline_mode<synchronous>, transform_indices = @transform_3, window_bounds = array<i64: 8, 128, 128>}, {pipeline_mode = #tpu.pipeline_mode<synchronous>, transform_indices = @transform_4, window_bounds = array<i64: 1, 128>}, {pipeline_mode = #tpu.pipeline_mode<synchronous>, transform_indices = @transform_5, window_bounds = array<i64: 16, 128, 128>}, {pipeline_mode = #tpu.pipeline_mode<synchronous>, transform_indices = @transform_6, window_bounds = array<i64: 1, 128>}, {pipeline_mode = #tpu.pipeline_mode<synchronous>, transform_indices = @transform_7, window_bounds = array<i64: 1024, 128>}, {pipeline_mode = #tpu.pipeline_mode<synchronous>, transform_indices = @transform_8, window_bounds = array<i64: 1, 128>}, {transform_indices = @transform_9, window_bounds = array<i64: 2, 128>}]} {
    %c0 = arith.constant 0 : index
    %c0_0 = arith.constant 0 : index
    %c0_1 = arith.constant 0 : index
    %0 = vector.load %arg1[%c0, %c0_0, %c0_1] : memref<2x16x4xf32, #tpu.memory_space<vmem>>, vector<2x16x4xf32>
    %cst = arith.constant 0.000000e+00 : f32
    %1 = vector.broadcast %cst : f32 to vector<2x1x4xf32>
    %cst_2 = arith.constant 0.000000e+00 : f32
    %2 = vector.broadcast %cst_2 : f32 to vector<2x2x4xf32>
    %3 = tpu.concatenate %1, %0, %2 in 1 : vector<2x1x4xf32>, vector<2x16x4xf32>, vector<2x2x4xf32> -> vector<2x19x4xf32>
    %cst_3 = arith.constant 0.000000e+00 : f32
    %4 = vector.broadcast %cst_3 : f32 to vector<32x128xf32>
    %5 = vector.extract_strided_slice %3 {offsets = [0, 0, 0], sizes = [2, 16, 4], strides = [1, 1, 1]} : vector<2x19x4xf32> to vector<2x16x4xf32>
    %6 = vector.shape_cast %5 : vector<2x16x4xf32> to vector<32x4xf32>
    %c0_4 = arith.constant 0 : index
    %c0_5 = arith.constant 0 : index
    %c0_6 = arith.constant 0 : index
    %7 = vector.load %arg2[%c0_4, %c0_5, %c0_6] : memref<4x4x128xf32, #tpu.memory_space<vmem>>, vector<1x4x128xf32>
    %8 = vector.shape_cast %7 : vector<1x4x128xf32> to vector<4x128xf32>
    %cst_7 = arith.constant dense<0.000000e+00> : vector<32x128xf32>
    %9 = tpu.matmul %6, %8, %cst_7 {dimension_numbers = #tpu.dot_dimension_numbers<[1], [0], [0], [1], [0, 0, 1, 1], [], []>} : vector<32x4xf32>, vector<4x128xf32>, vector<32x128xf32> -> vector<32x128xf32>
    %10 = arith.addf %4, %9 : vector<32x128xf32>
    %11 = vector.extract_strided_slice %3 {offsets = [0, 1, 0], sizes = [2, 16, 4], strides = [1, 1, 1]} : vector<2x19x4xf32> to vector<2x16x4xf32>
    %12 = vector.shape_cast %11 : vector<2x16x4xf32> to vector<32x4xf32>
    %c1 = arith.constant 1 : index
    %c0_8 = arith.constant 0 : index
    %c0_9 = arith.constant 0 : index
    %13 = vector.load %arg2[%c1, %c0_8, %c0_9] : memref<4x4x128xf32, #tpu.memory_space<vmem>>, vector<1x4x128xf32>
    %14 = vector.shape_cast %13 : vector<1x4x128xf32> to vector<4x128xf32>
    %cst_10 = arith.constant dense<0.000000e+00> : vector<32x128xf32>
    %15 = tpu.matmul %12, %14, %cst_10 {dimension_numbers = #tpu.dot_dimension_numbers<[1], [0], [0], [1], [0, 0, 1, 1], [], []>} : vector<32x4xf32>, vector<4x128xf32>, vector<32x128xf32> -> vector<32x128xf32>
    %16 = arith.addf %10, %15 : vector<32x128xf32>
    %17 = vector.extract_strided_slice %3 {offsets = [0, 2, 0], sizes = [2, 16, 4], strides = [1, 1, 1]} : vector<2x19x4xf32> to vector<2x16x4xf32>
    %18 = vector.shape_cast %17 : vector<2x16x4xf32> to vector<32x4xf32>
    %c2 = arith.constant 2 : index
    %c0_11 = arith.constant 0 : index
    %c0_12 = arith.constant 0 : index
    %19 = vector.load %arg2[%c2, %c0_11, %c0_12] : memref<4x4x128xf32, #tpu.memory_space<vmem>>, vector<1x4x128xf32>
    %20 = vector.shape_cast %19 : vector<1x4x128xf32> to vector<4x128xf32>
    %cst_13 = arith.constant dense<0.000000e+00> : vector<32x128xf32>
    %21 = tpu.matmul %18, %20, %cst_13 {dimension_numbers = #tpu.dot_dimension_numbers<[1], [0], [0], [1], [0, 0, 1, 1], [], []>} : vector<32x4xf32>, vector<4x128xf32>, vector<32x128xf32> -> vector<32x128xf32>
    %22 = arith.addf %16, %21 : vector<32x128xf32>
    %23 = vector.extract_strided_slice %3 {offsets = [0, 3, 0], sizes = [2, 16, 4], strides = [1, 1, 1]} : vector<2x19x4xf32> to vector<2x16x4xf32>
    %24 = vector.shape_cast %23 : vector<2x16x4xf32> to vector<32x4xf32>
    %c3 = arith.constant 3 : index
    %c0_14 = arith.constant 0 : index
    %c0_15 = arith.constant 0 : index
    %25 = vector.load %arg2[%c3, %c0_14, %c0_15] : memref<4x4x128xf32, #tpu.memory_space<vmem>>, vector<1x4x128xf32>
    %26 = vector.shape_cast %25 : vector<1x4x128xf32> to vector<4x128xf32>
    %cst_16 = arith.constant dense<0.000000e+00> : vector<32x128xf32>
    %27 = tpu.matmul %24, %26, %cst_16 {dimension_numbers = #tpu.dot_dimension_numbers<[1], [0], [0], [1], [0, 0, 1, 1], [], []>} : vector<32x4xf32>, vector<4x128xf32>, vector<32x128xf32> -> vector<32x128xf32>
    %28 = arith.addf %22, %27 : vector<32x128xf32>
    %c0_17 = arith.constant 0 : index
    %c0_18 = arith.constant 0 : index
    %29 = vector.load %arg3[%c0_17, %c0_18] : memref<1x128xf32, #tpu.memory_space<vmem>>, vector<1x128xf32>
    %30 = vector.broadcast %29 : vector<1x128xf32> to vector<32x128xf32>
    %31 = arith.addf %28, %30 : vector<32x128xf32>
    %32 = vector.shape_cast %31 : vector<32x128xf32> to vector<2x16x128xf32>
    %cst_19 = arith.constant 0.000000e+00 : f32
    %33 = vector.broadcast %cst_19 : f32 to vector<2x3x128xf32>
    %cst_20 = arith.constant 0.000000e+00 : f32
    %34 = vector.broadcast %cst_20 : f32 to vector<2x4x128xf32>
    %35 = tpu.concatenate %33, %32, %34 in 1 : vector<2x3x128xf32>, vector<2x16x128xf32>, vector<2x4x128xf32> -> vector<2x23x128xf32>
    %36 = vector.extract_strided_slice %35 {offsets = [0, 0, 0], sizes = [2, 16, 128], strides = [1, 1, 1]} : vector<2x23x128xf32> to vector<2x16x128xf32>
    %37 = vector.extract_strided_slice %35 {offsets = [0, 1, 0], sizes = [2, 16, 128], strides = [1, 1, 1]} : vector<2x23x128xf32> to vector<2x16x128xf32>
    %38 = vector.extract_strided_slice %35 {offsets = [0, 2, 0], sizes = [2, 16, 128], strides = [1, 1, 1]} : vector<2x23x128xf32> to vector<2x16x128xf32>
    %39 = vector.extract_strided_slice %35 {offsets = [0, 3, 0], sizes = [2, 16, 128], strides = [1, 1, 1]} : vector<2x23x128xf32> to vector<2x16x128xf32>
    %40 = vector.extract_strided_slice %35 {offsets = [0, 4, 0], sizes = [2, 16, 128], strides = [1, 1, 1]} : vector<2x23x128xf32> to vector<2x16x128xf32>
    %41 = vector.extract_strided_slice %35 {offsets = [0, 5, 0], sizes = [2, 16, 128], strides = [1, 1, 1]} : vector<2x23x128xf32> to vector<2x16x128xf32>
    %42 = vector.extract_strided_slice %35 {offsets = [0, 6, 0], sizes = [2, 16, 128], strides = [1, 1, 1]} : vector<2x23x128xf32> to vector<2x16x128xf32>
    %43 = vector.extract_strided_slice %35 {offsets = [0, 7, 0], sizes = [2, 16, 128], strides = [1, 1, 1]} : vector<2x23x128xf32> to vector<2x16x128xf32>
    %44 = tpu.concatenate %36, %37, %38, %39, %40, %41, %42, %43 in 2 : vector<2x16x128xf32>, vector<2x16x128xf32>, vector<2x16x128xf32>, vector<2x16x128xf32>, vector<2x16x128xf32>, vector<2x16x128xf32>, vector<2x16x128xf32>, vector<2x16x128xf32> -> vector<2x16x1024xf32>
    %45 = vector.shape_cast %44 : vector<2x16x1024xf32> to vector<32x1024xf32>
    %c0_21 = arith.constant 0 : index
    %c0_22 = arith.constant 0 : index
    %c0_23 = arith.constant 0 : index
    %46 = vector.load %arg4[%c0_21, %c0_22, %c0_23] : memref<8x128x128xf32, #tpu.memory_space<vmem>>, vector<8x128x128xf32>
    %47 = vector.shape_cast %46 : vector<8x128x128xf32> to vector<1024x128xf32>
    %cst_24 = arith.constant dense<0.000000e+00> : vector<32x128xf32>
    %48 = tpu.matmul %45, %47, %cst_24 {dimension_numbers = #tpu.dot_dimension_numbers<[1], [0], [0], [1], [0, 0, 1, 1], [], []>} : vector<32x1024xf32>, vector<1024x128xf32>, vector<32x128xf32> -> vector<32x128xf32>
    %c0_25 = arith.constant 0 : index
    %c0_26 = arith.constant 0 : index
    %49 = vector.load %arg5[%c0_25, %c0_26] : memref<1x128xf32, #tpu.memory_space<vmem>>, vector<1x128xf32>
    %50 = vector.broadcast %49 : vector<1x128xf32> to vector<32x128xf32>
    %51 = arith.addf %48, %50 : vector<32x128xf32>
    %52 = vector.shape_cast %51 : vector<32x128xf32> to vector<2x16x128xf32>
    %cst_27 = arith.constant 0.000000e+00 : f32
    %53 = vector.broadcast %cst_27 : f32 to vector<2x7x128xf32>
    %cst_28 = arith.constant 0.000000e+00 : f32
    %54 = vector.broadcast %cst_28 : f32 to vector<2x8x128xf32>
    %55 = tpu.concatenate %53, %52, %54 in 1 : vector<2x7x128xf32>, vector<2x16x128xf32>, vector<2x8x128xf32> -> vector<2x31x128xf32>
    %56 = vector.extract_strided_slice %55 {offsets = [0, 0, 0], sizes = [2, 16, 128], strides = [1, 1, 1]} : vector<2x31x128xf32> to vector<2x16x128xf32>
    %57 = vector.extract_strided_slice %55 {offsets = [0, 1, 0], sizes = [2, 16, 128], strides = [1, 1, 1]} : vector<2x31x128xf32> to vector<2x16x128xf32>
    %58 = vector.extract_strided_slice %55 {offsets = [0, 2, 0], sizes = [2, 16, 128], strides = [1, 1, 1]} : vector<2x31x128xf32> to vector<2x16x128xf32>
    %59 = vector.extract_strided_slice %55 {offsets = [0, 3, 0], sizes = [2, 16, 128], strides = [1, 1, 1]} : vector<2x31x128xf32> to vector<2x16x128xf32>
    %60 = vector.extract_strided_slice %55 {offsets = [0, 4, 0], sizes = [2, 16, 128], strides = [1, 1, 1]} : vector<2x31x128xf32> to vector<2x16x128xf32>
    %61 = vector.extract_strided_slice %55 {offsets = [0, 5, 0], sizes = [2, 16, 128], strides = [1, 1, 1]} : vector<2x31x128xf32> to vector<2x16x128xf32>
    %62 = vector.extract_strided_slice %55 {offsets = [0, 6, 0], sizes = [2, 16, 128], strides = [1, 1, 1]} : vector<2x31x128xf32> to vector<2x16x128xf32>
    %63 = vector.extract_strided_slice %55 {offsets = [0, 7, 0], sizes = [2, 16, 128], strides = [1, 1, 1]} : vector<2x31x128xf32> to vector<2x16x128xf32>
    %64 = vector.extract_strided_slice %55 {offsets = [0, 8, 0], sizes = [2, 16, 128], strides = [1, 1, 1]} : vector<2x31x128xf32> to vector<2x16x128xf32>
    %65 = vector.extract_strided_slice %55 {offsets = [0, 9, 0], sizes = [2, 16, 128], strides = [1, 1, 1]} : vector<2x31x128xf32> to vector<2x16x128xf32>
    %66 = vector.extract_strided_slice %55 {offsets = [0, 10, 0], sizes = [2, 16, 128], strides = [1, 1, 1]} : vector<2x31x128xf32> to vector<2x16x128xf32>
    %67 = vector.extract_strided_slice %55 {offsets = [0, 11, 0], sizes = [2, 16, 128], strides = [1, 1, 1]} : vector<2x31x128xf32> to vector<2x16x128xf32>
    %68 = vector.extract_strided_slice %55 {offsets = [0, 12, 0], sizes = [2, 16, 128], strides = [1, 1, 1]} : vector<2x31x128xf32> to vector<2x16x128xf32>
    %69 = vector.extract_strided_slice %55 {offsets = [0, 13, 0], sizes = [2, 16, 128], strides = [1, 1, 1]} : vector<2x31x128xf32> to vector<2x16x128xf32>
    %70 = vector.extract_strided_slice %55 {offsets = [0, 14, 0], sizes = [2, 16, 128], strides = [1, 1, 1]} : vector<2x31x128xf32> to vector<2x16x128xf32>
    %71 = vector.extract_strided_slice %55 {offsets = [0, 15, 0], sizes = [2, 16, 128], strides = [1, 1, 1]} : vector<2x31x128xf32> to vector<2x16x128xf32>
    %72 = tpu.concatenate %56, %57, %58, %59, %60, %61, %62, %63, %64, %65, %66, %67, %68, %69, %70, %71 in 2 : vector<2x16x128xf32>, vector<2x16x128xf32>, vector<2x16x128xf32>, vector<2x16x128xf32>, vector<2x16x128xf32>, vector<2x16x128xf32>, vector<2x16x128xf32>, vector<2x16x128xf32>, vector<2x16x128xf32>, vector<2x16x128xf32>, vector<2x16x128xf32>, vector<2x16x128xf32>, vector<2x16x128xf32>, vector<2x16x128xf32>, vector<2x16x128xf32>, vector<2x16x128xf32> -> vector<2x16x2048xf32>
    %73 = vector.shape_cast %72 : vector<2x16x2048xf32> to vector<32x2048xf32>
    %c0_29 = arith.constant 0 : index
    %c0_30 = arith.constant 0 : index
    %c0_31 = arith.constant 0 : index
    %74 = vector.load %arg6[%c0_29, %c0_30, %c0_31] : memref<16x128x128xf32, #tpu.memory_space<vmem>>, vector<16x128x128xf32>
    %75 = vector.shape_cast %74 : vector<16x128x128xf32> to vector<2048x128xf32>
    %cst_32 = arith.constant dense<0.000000e+00> : vector<32x128xf32>
    %76 = tpu.matmul %73, %75, %cst_32 {dimension_numbers = #tpu.dot_dimension_numbers<[1], [0], [0], [1], [0, 0, 1, 1], [], []>} : vector<32x2048xf32>, vector<2048x128xf32>, vector<32x128xf32> -> vector<32x128xf32>
    %c0_33 = arith.constant 0 : index
    %c0_34 = arith.constant 0 : index
    %77 = vector.load %arg7[%c0_33, %c0_34] : memref<1x128xf32, #tpu.memory_space<vmem>>, vector<1x128xf32>
    %78 = vector.broadcast %77 : vector<1x128xf32> to vector<32x128xf32>
    %79 = arith.addf %76, %78 : vector<32x128xf32>
    %80 = vector.shape_cast %79 : vector<32x128xf32> to vector<2x16x128xf32>
    %81 = vector.extract_strided_slice %80 {offsets = [0, 8, 0], sizes = [2, 8, 128], strides = [1, 1, 1]} : vector<2x16x128xf32> to vector<2x8x128xf32>
    %cst_35 = arith.constant 0.000000e+00 : f32
    %82 = vector.broadcast %cst_35 : f32 to vector<2x8x128xf32>
    %83 = arith.maximumf %81, %82 : vector<2x8x128xf32>
    %84 = vector.extract_strided_slice %83 {offsets = [0, 0, 0], sizes = [2, 1, 128], strides = [1, 1, 1]} : vector<2x8x128xf32> to vector<2x1x128xf32>
    %85 = vector.shape_cast %84 : vector<2x1x128xf32> to vector<2x128xf32>
    %86 = vector.extract_strided_slice %83 {offsets = [0, 1, 0], sizes = [2, 1, 128], strides = [1, 1, 1]} : vector<2x8x128xf32> to vector<2x1x128xf32>
    %87 = vector.shape_cast %86 : vector<2x1x128xf32> to vector<2x128xf32>
    %88 = vector.extract_strided_slice %83 {offsets = [0, 2, 0], sizes = [2, 1, 128], strides = [1, 1, 1]} : vector<2x8x128xf32> to vector<2x1x128xf32>
    %89 = vector.shape_cast %88 : vector<2x1x128xf32> to vector<2x128xf32>
    %90 = vector.extract_strided_slice %83 {offsets = [0, 3, 0], sizes = [2, 1, 128], strides = [1, 1, 1]} : vector<2x8x128xf32> to vector<2x1x128xf32>
    %91 = vector.shape_cast %90 : vector<2x1x128xf32> to vector<2x128xf32>
    %92 = vector.extract_strided_slice %83 {offsets = [0, 4, 0], sizes = [2, 1, 128], strides = [1, 1, 1]} : vector<2x8x128xf32> to vector<2x1x128xf32>
    %93 = vector.shape_cast %92 : vector<2x1x128xf32> to vector<2x128xf32>
    %94 = vector.extract_strided_slice %83 {offsets = [0, 5, 0], sizes = [2, 1, 128], strides = [1, 1, 1]} : vector<2x8x128xf32> to vector<2x1x128xf32>
    %95 = vector.shape_cast %94 : vector<2x1x128xf32> to vector<2x128xf32>
    %96 = vector.extract_strided_slice %83 {offsets = [0, 6, 0], sizes = [2, 1, 128], strides = [1, 1, 1]} : vector<2x8x128xf32> to vector<2x1x128xf32>
    %97 = vector.shape_cast %96 : vector<2x1x128xf32> to vector<2x128xf32>
    %98 = vector.extract_strided_slice %83 {offsets = [0, 7, 0], sizes = [2, 1, 128], strides = [1, 1, 1]} : vector<2x8x128xf32> to vector<2x1x128xf32>
    %99 = vector.shape_cast %98 : vector<2x1x128xf32> to vector<2x128xf32>
    %100 = tpu.concatenate %85, %87, %89, %91, %93, %95, %97, %99 in 1 : vector<2x128xf32>, vector<2x128xf32>, vector<2x128xf32>, vector<2x128xf32>, vector<2x128xf32>, vector<2x128xf32>, vector<2x128xf32>, vector<2x128xf32> -> vector<2x1024xf32>
    %c0_36 = arith.constant 0 : index
    %c0_37 = arith.constant 0 : index
    %101 = vector.load %arg8[%c0_36, %c0_37] : memref<1024x128xf32, #tpu.memory_space<vmem>>, vector<1024x128xf32>
    %cst_38 = arith.constant dense<0.000000e+00> : vector<2x128xf32>
    %102 = tpu.matmul %100, %101, %cst_38 {dimension_numbers = #tpu.dot_dimension_numbers<[1], [0], [0], [1], [0, 0, 1, 1], [], []>} : vector<2x1024xf32>, vector<1024x128xf32>, vector<2x128xf32> -> vector<2x128xf32>
    %c0_39 = arith.constant 0 : index
    %c0_40 = arith.constant 0 : index
    %103 = vector.load %arg9[%c0_39, %c0_40] : memref<1x128xf32, #tpu.memory_space<vmem>>, vector<1x128xf32>
    %104 = vector.broadcast %103 : vector<1x128xf32> to vector<2x128xf32>
    %105 = arith.addf %102, %104 : vector<2x128xf32>
    %c0_41 = arith.constant 0 : index
    %c0_42 = arith.constant 0 : index
    %106 = vector.load %arg10[%c0_41, %c0_42] : memref<2x128xf32, #tpu.memory_space<vmem>>, vector<2x128xf32>
    tpu.vector_store %arg10[%c0_41, %c0_42], %105 {strides = array<i32>} : memref<2x128xf32, #tpu.memory_space<vmem>>, vector<2x128xf32>,
    return
  }
  func.func @transform_0(%arg0: i32) -> (i32, i32, i32) {
    %c0_i32 = arith.constant 0 : i32
    %c0_i32_0 = arith.constant 0 : i32
    %c0_i32_1 = arith.constant 0 : i32
    return %arg0, %c0_i32, %c0_i32_0 : i32, i32, i32
  }
  func.func @transform_1(%arg0: i32) -> (i32, i32, i32) {
    %c0_i32 = arith.constant 0 : i32
    %c0_i32_0 = arith.constant 0 : i32
    %c0_i32_1 = arith.constant 0 : i32
    %c0_i32_2 = arith.constant 0 : i32
    return %c0_i32, %c0_i32_0, %c0_i32_1 : i32, i32, i32
  }
  func.func @transform_2(%arg0: i32) -> (i32, i32) {
    %c0_i32 = arith.constant 0 : i32
    %c0_i32_0 = arith.constant 0 : i32
    %c0_i32_1 = arith.constant 0 : i32
    return %c0_i32, %c0_i32_0 : i32, i32
  }
  func.func @transform_3(%arg0: i32) -> (i32, i32, i32) {
    %c0_i32 = arith.constant 0 : i32
    %c0_i32_0 = arith.constant 0 : i32
    %c0_i32_1 = arith.constant 0 : i32
    %c0_i32_2 = arith.constant 0 : i32
    return %c0_i32, %c0_i32_0, %c0_i32_1 : i32, i32, i32
  }
  func.func @transform_4(%arg0: i32) -> (i32, i32) {
    %c0_i32 = arith.constant 0 : i32
    %c0_i32_0 = arith.constant 0 : i32
    %c0_i32_1 = arith.constant 0 : i32
    return %c0_i32, %c0_i32_0 : i32, i32
  }
  func.func @transform_5(%arg0: i32) -> (i32, i32, i32) {
    %c0_i32 = arith.constant 0 : i32
    %c0_i32_0 = arith.constant 0 : i32
    %c0_i32_1 = arith.constant 0 : i32
    %c0_i32_2 = arith.constant 0 : i32
    return %c0_i32, %c0_i32_0, %c0_i32_1 : i32, i32, i32
  }
  func.func @transform_6(%arg0: i32) -> (i32, i32) {
    %c0_i32 = arith.constant 0 : i32
    %c0_i32_0 = arith.constant 0 : i32
    %c0_i32_1 = arith.constant 0 : i32
    return %c0_i32, %c0_i32_0 : i32, i32
  }
  func.func @transform_7(%arg0: i32) -> (i32, i32) {
    %c0_i32 = arith.constant 0 : i32
    %c0_i32_0 = arith.constant 0 : i32
    %c0_i32_1 = arith.constant 0 : i32
    return %c0_i32, %c0_i32_0 : i32, i32
  }
  func.func @transform_8(%arg0: i32) -> (i32, i32) {
    %c0_i32 = arith.constant 0 : i32
    %c0_i32_0 = arith.constant 0 : i32
    %c0_i32_1 = arith.constant 0 : i32
    return %c0_i32, %c0_i32_0 : i32, i32
  }
  func.func @transform_9(%arg0: i32) -> (i32, i32) {
    %c0_i32 = arith.constant 0 : i32
    %c0_i32_0 = arith.constant 0 : i32
    return %arg0, %c0_i32 : i32, i32
  }
}

</mosaic_0001>

<llo_original>
// kernel: tpu_custom_call.1
$region0: #{tpu_custom_call.1}
  #allocation0 [shape = 'u32[]', space=smem, size = 0x4, offset = 0x4, fixed_abs, tag = 'smem constant byte address 0x4 - core index']
  #allocation1 [shape = 'u32[144,128]{1,0:T(1,128)}', space=vmem, size = 0x12000, scoped, tag = 'internal scratch']
  %s0 = inlined_call_operand.vmem [shape: f32[2,16,4], index: 0, kind: input, shape index: {}]
  %s1 = inlined_call_operand.vmem [shape: f32[4,4,128], index: 1, kind: input, shape index: {}]
  %s2 = inlined_call_operand.vmem [shape: f32[1,128], index: 2, kind: input, shape index: {}]
  %s3 = inlined_call_operand.hbm [shape: f32[8,128,128], index: 3, kind: input, shape index: {}]
  %s4 = inlined_call_operand.vmem [shape: f32[1,128], index: 4, kind: input, shape index: {}]
  %s5 = inlined_call_operand.hbm [shape: f32[16,128,128], index: 5, kind: input, shape index: {}]
  %s6 = inlined_call_operand.vmem [shape: f32[1,128], index: 6, kind: input, shape index: {}]
  %s7 = inlined_call_operand.hbm [shape: f32[1024,128], index: 7, kind: input, shape index: {}]
  %s8 = inlined_call_operand.vmem [shape: f32[1,128], index: 8, kind: input, shape index: {}]
  %s9 = inlined_call_operand.hbm [shape: f32[2,128], index: 9, kind: output, shape index: {}]
  %s10 = sld [smem:[#allocation0]]
  $region58: #{tpu_custom_call.1} parent=0
    _
  %s12 = ssub.s32 1, %s10
  %s13 = scalar_select 0, %s12, %s10
  $region1: #{tpu_custom_call.1} parent=0
    #allocation2 [shape = 'u8[524288]{0}', space=vmem, size = 0x80000, scoped, tag = 'input window, operand 3, single buffered']
    #allocation3 [shape = 's32[1]{0}', space=sflag, size = 0x4, scoped, tag = 'scoped memory for tpu_custom_call.1']
    #allocation4 [shape = 's32[1]{0}', space=sflag, size = 0x4, scoped, tag = 'scoped memory for tpu_custom_call.1']
    #allocation5 [shape = 'u8[1048576]{0}', space=vmem, size = 0x100000, scoped, tag = 'input window, operand 5, single buffered']
    #allocation6 [shape = 's32[1]{0}', space=sflag, size = 0x4, scoped, tag = 'scoped memory for tpu_custom_call.1']
    #allocation7 [shape = 'u8[524288]{0}', space=vmem, size = 0x80000, scoped, tag = 'input window, operand 7, single buffered']
    #allocation8 [shape = 'u8[1024]{0}', space=vmem, size = 0x400, scoped, tag = 'output window, operand 0, single buffered']
    %14 = vsyncpa [#allocation3], 0
    %15 = vsyncpa [#allocation6], 0
    %16 = vsyncpa [#allocation4], 0
    // Predicated region
    $region2: #{tpu_custom_call.1} parent=1 // pred_check
      _
    $region3: #{tpu_custom_call.1} parent=1 // pred_check_branch
      %18 = sbr.rel (0) target = $region5
    $region4: #{tpu_custom_call.1} parent=1 // pred_region
      _
    $region5: #{tpu_custom_call.1} parent=1 // pred_fallthru
      _
    // Predicated region
    $region6: #{tpu_custom_call.1} parent=1 // pred_check
      _
    $region7: #{tpu_custom_call.1} parent=1 // pred_check_branch
      %20 = sbr.rel (0) target = $region9
    $region8: #{tpu_custom_call.1} parent=1 // pred_region
      _
    $region9: #{tpu_custom_call.1} parent=1 // pred_fallthru
      _
    // Predicated region
    $region10: #{tpu_custom_call.1} parent=1 // pred_check
      _
    $region11: #{tpu_custom_call.1} parent=1 // pred_check_branch
      %22 = sbr.rel (0) target = $region13
    $region12: #{tpu_custom_call.1} parent=1 // pred_region
      _
    $region13: #{tpu_custom_call.1} parent=1 // pred_fallthru
      _
    // Predicated region
    $region14: #{tpu_custom_call.1} parent=1 // pred_check
      _
    $region15: #{tpu_custom_call.1} parent=1 // pred_check_branch
      %24 = sbr.rel (0) target = $region17
    $region16: #{tpu_custom_call.1} parent=1 // pred_region
      %s26 = ssub.s32 16384, 16384
      %27 = vsyncadd [#allocation3], %s26
      %s28 = sshll.u32 [#allocation2], 4
      %s29 = int_to_ptr.vmem [resolvable:$true] %s28
      %34 = dma.hbm_to_vmem [thread:$0]  %s3, 16384, %s29, [#allocation3], 128, 128, 8
    $region17: #{tpu_custom_call.1} parent=1 // pred_fallthru
      _
    // Predicated region
    $region18: #{tpu_custom_call.1} parent=1 // pred_check
      _
    $region19: #{tpu_custom_call.1} parent=1 // pred_check_branch
      %36 = sbr.rel (0) target = $region21
    $region20: #{tpu_custom_call.1} parent=1 // pred_region
      _
    $region21: #{tpu_custom_call.1} parent=1 // pred_fallthru
      _
    // Predicated region
    $region22: #{tpu_custom_call.1} parent=1 // pred_check
      _
    $region23: #{tpu_custom_call.1} parent=1 // pred_check_branch
      %38 = sbr.rel (0) target = $region25
    $region24: #{tpu_custom_call.1} parent=1 // pred_region
      %s40 = ssub.s32 32768, 32768
      %41 = vsyncadd [#allocation6], %s40
      %s42 = sshll.u32 [#allocation5], 4
      %s43 = int_to_ptr.vmem [resolvable:$true] %s42
      %48 = dma.hbm_to_vmem [thread:$0]  %s5, 32768, %s43, [#allocation6], 128, 128, 8
    $region25: #{tpu_custom_call.1} parent=1 // pred_fallthru
      _
    // Predicated region
    $region26: #{tpu_custom_call.1} parent=1 // pred_check
      _
    $region27: #{tpu_custom_call.1} parent=1 // pred_check_branch
      %50 = sbr.rel (0) target = $region29
    $region28: #{tpu_custom_call.1} parent=1 // pred_region
      _
    $region29: #{tpu_custom_call.1} parent=1 // pred_fallthru
      _
    // Predicated region
    $region30: #{tpu_custom_call.1} parent=1 // pred_check
      _
    $region31: #{tpu_custom_call.1} parent=1 // pred_check_branch
      %52 = sbr.rel (0) target = $region33
    $region32: #{tpu_custom_call.1} parent=1 // pred_region
      %s54 = ssub.s32 16384, 16384
      %55 = vsyncadd [#allocation6], %s54
      %s56 = sshll.u32 [#allocation7], 4
      %s57 = int_to_ptr.vmem [resolvable:$true] %s56
      %62 = dma.hbm_to_vmem [thread:$0]  %s7, 16384, %s57, [#allocation6], 128, 128, 8
    $region33: #{tpu_custom_call.1} parent=1 // pred_fallthru
      _
    // Predicated region
    $region34: #{tpu_custom_call.1} parent=1 // pred_check
      _
    $region35: #{tpu_custom_call.1} parent=1 // pred_check_branch
      %64 = sbr.rel (0) target = $region37
    $region36: #{tpu_custom_call.1} parent=1 // pred_region
      _
    $region37: #{tpu_custom_call.1} parent=1 // pred_fallthru
      _
    // Predicated region
    $region38: #{tpu_custom_call.1} parent=1 // pred_check
      _
    $region39: #{tpu_custom_call.1} parent=1 // pred_check_branch
      %66 = sbr.rel (0) target = $region41
    $region40: #{tpu_custom_call.1} parent=1 // pred_region
      %67 = dma.done [#allocation3], 16384
    $region41: #{tpu_custom_call.1} parent=1 // pred_fallthru
      _
    // Predicated region
    $region42: #{tpu_custom_call.1} parent=1 // pred_check
      _
    $region43: #{tpu_custom_call.1} parent=1 // pred_check_branch
      %69 = sbr.rel (0) target = $region45
    $region44: #{tpu_custom_call.1} parent=1 // pred_region
      %70 = dma.done [#allocation6], 32768
    $region45: #{tpu_custom_call.1} parent=1 // pred_fallthru
      _
    // Predicated region
    $region46: #{tpu_custom_call.1} parent=1 // pred_check
      _
    $region47: #{tpu_custom_call.1} parent=1 // pred_check_branch
      %72 = sbr.rel (0) target = $region49
    $region48: #{tpu_custom_call.1} parent=1 // pred_region
      %73 = dma.done [#allocation6], 16384
    $region49: #{tpu_custom_call.1} parent=1 // pred_fallthru
      _
    %v74 = vld [vmem:[%s0] sm:$0xff]
    %v75 = vld [vmem:[%s0 + $0x8] sm:$0xff]
    %v76 = vld [vmem:[%s0 + $0x10] sm:$0xff]
    %v77 = vld [vmem:[%s0 + $0x18] sm:$0xff]
    %vm82 = vcmask 1040384
    %v83 = vrot.slane %v74, 7
    %v84 = vrot.slane %v75, 7
    %v85 = vsel %vm82, %v83, %v84
    %v86 = vrot.slane %v76, 7
    %v87 = vrot.slane %v77, 7
    %v88 = vsel %vm82, %v86, %v87
    %v93 = vsel %vm82, 0.0, %v83
    %v94 = vsel %vm82, 0.0, %v86
    %v95 = vsel %vm82, %v84, 0.0
    %v96 = vsel %vm82, %v87, 0.0
    %v97 = vld [vmem:[%s1] sm:$0xf]
    %vm102 = vcmask 1046528
    %v103 = vrot.slane %v93, 1
    %v104 = vrot.slane %v85, 1
    %v105 = vsel %vm102, %v103, %v104
    %v106 = vrot.slane %v95, 1
    %v107 = vsel %vm102, %v104, %v106
    %v108 = vrot.slane %v94, 1
    %v109 = vrot.slane %v88, 1
    %v110 = vsel %vm102, %v108, %v109
    %v111 = vrot.slane %v96, 1
    %v112 = vsel %vm102, %v109, %v111
    %s113 = scalar_lea.vmem %s1, 4
    %v114 = vld [vmem:[%s113] sm:$0xf]
    %vm115 = vcmask 31744
    %v116 = vsel %vm115, %v105, 0
    %v118 = vsel %vm115, %v107, 0
    %v120 = vsel %vm115, %v110, 0
    %v122 = vsel %vm115, %v112, 0
    %vm124 = vcmask 1043456
    %v126 = vsel %vm124, %v114, 0
    %128 = vmatprep.subr.mxu0 0.0
    %129 = vmatpush1.msra.mxu0 %v126
    %130 = vmatprep.subr.mxu0 0.0
    %131 = vmatpush1.msra.mxu0 0.0
    %132 = vmatprep.subr.mxu0 0.0
    %133 = vmatpush1.msra.mxu0 0.0
    %134 = vmatprep.subr.mxu0 0.0
    %135 = vmatpush1.msra.mxu0 0.0
    %136 = vmatprep.subr.mxu0 0.0
    %137 = vmatpush1.msra.mxu0 0.0
    %138 = vmatprep.subr.mxu0 0.0
    %139 = vmatpush1.msra.mxu0 0.0
    %140 = vmatprep.subr.mxu0 0.0
    %141 = vmatpush1.msra.mxu0 0.0
    %142 = vmatprep.subr.mxu0 0.0
    %143 = vmatpush1.msra.mxu0 0.0
    %144 = vmatprep.subr.mxu0 0.0
    %145 = vmatpush1.msra.mxu0 0.0
    %146 = vmatprep.subr.mxu0 0.0
    %147 = vmatpush1.msra.mxu0 0.0
    %148 = vmatprep.subr.mxu0 0.0
    %149 = vmatpush1.msra.mxu0 0.0
    %150 = vmatprep.subr.mxu0 0.0
    %151 = vmatpush1.msra.mxu0 0.0
    %152 = vmatprep.subr.mxu0 0.0
    %153 = vmatpush1.msra.mxu0 0.0
    %154 = vmatprep.subr.mxu0 0.0
    %155 = vmatpush1.msra.mxu0 0.0
    %156 = vmatprep.subr.mxu0 0.0
    %157 = vmatpush1.msra.mxu0 0.0
    %158 = vmatprep.subr.mxu0 0.0
    %159 = vmatpush1.msra.mxu0 0.0
    %160 = vmatprep.subr.mxu0 0.0
    %161 = vmatpush1.msra.mxu0 0.0
    %162 = vmatprep.subr.mxu0 0.0
    %163 = vmatpush1.msra.mxu0 0.0
    %164 = vmatprep.subr.mxu0 0.0
    %165 = vmatpush1.msra.mxu0 0.0
    %166 = vmatprep.subr.mxu0 0.0
    %167 = vmatpush1.msra.mxu0 0.0
    %168 = vmatprep.subr.mxu0 0.0
    %169 = vmatpush1.msra.mxu0 0.0
    %170 = vmatprep.subr.mxu0 0.0
    %171 = vmatpush1.msra.mxu0 0.0
    %172 = vmatprep.subr.mxu0 0.0
    %173 = vmatpush1.msra.mxu0 0.0
    %174 = vmatprep.subr.mxu0 0.0
    %175 = vmatpush1.msra.mxu0 0.0
    %176 = vmatprep.subr.mxu0 0.0
    %177 = vmatpush1.msra.mxu0 0.0
    %178 = vmatprep.subr.mxu0 0.0
    %179 = vmatpush1.msra.mxu0 0.0
    %180 = vmatprep.subr.mxu0 0.0
    %181 = vmatpush1.msra.mxu0 0.0
    %182 = vmatprep.subr.mxu0 0.0
    %183 = vmatpush1.msra.mxu0 0.0
    %184 = vmatprep.subr.mxu0 0.0
    %185 = vmatpush1.msra.mxu0 0.0
    %186 = vmatprep.subr.mxu0 0.0
    %187 = vmatpush1.msra.mxu0 0.0
    %188 = vmatprep.subr.mxu0 0.0
    %189 = vmatpush1.msra.mxu0 0.0
    %190 = vmatprep.subr.mxu0 0.0
    %191 = vmatpush1.msra.mxu0 0.0
    %192 = vmatprep.mubr.f32.mxu0 0.0
    %193 = vmatmul.mubr.f32.gmra.mrb[0].mxu0 %v116
    %v194 = vpop.f32.mrb[0].mxu0
    %v195 = vadd.f32 0.0, %v194
    %v196 = vpop.f32.mrb[0].mxu0
    %197 = vmatprep.mubr.f32.mxu0 0.0
    %198 = vmatmul.mubr.f32.gmra.mrb[0].mxu0 %v118
    %v199 = vpop.f32.mrb[0].mxu0
    %v200 = vadd.f32 0.0, %v199
    %v201 = vpop.f32.mrb[0].mxu0
    %202 = vmatprep.mubr.f32.mxu0 0.0
    %203 = vmatmul.mubr.f32.gmra.mrb[0].mxu0 %v120
    %v204 = vpop.f32.mrb[0].mxu0
    %v205 = vadd.f32 0.0, %v204
    %v206 = vpop.f32.mrb[0].mxu0
    %207 = vmatprep.mubr.f32.mxu0 0.0
    %208 = vmatmul.mubr.f32.gmra.mrb[0].mxu0 %v122
    %v209 = vpop.f32.mrb[0].mxu0
    %v210 = vadd.f32 0.0, %v209
    %v211 = vpop.f32.mrb[0].mxu0
    %212 = vdwg.mxu0
    %v213 = vsel %vm115, %v93, 0
    %v215 = vsel %vm115, %v85, 0
    %v217 = vsel %vm115, %v94, 0
    %v219 = vsel %vm115, %v88, 0
    %v222 = vsel %vm124, %v97, 0
    %224 = vmatprep.subr.mxu0 0.0
    %225 = vmatpush1.msra.mxu0 %v222
    %226 = vmatprep.subr.mxu0 0.0
    %227 = vmatpush1.msra.mxu0 0.0
    %228 = vmatprep.subr.mxu0 0.0
    %229 = vmatpush1.msra.mxu0 0.0
    %230 = vmatprep.subr.mxu0 0.0
    %231 = vmatpush1.msra.mxu0 0.0
    %232 = vmatprep.subr.mxu0 0.0
    %233 = vmatpush1.msra.mxu0 0.0
    %234 = vmatprep.subr.mxu0 0.0
    %235 = vmatpush1.msra.mxu0 0.0
    %236 = vmatprep.subr.mxu0 0.0
    %237 = vmatpush1.msra.mxu0 0.0
    %238 = vmatprep.subr.mxu0 0.0
    %239 = vmatpush1.msra.mxu0 0.0
    %240 = vmatprep.subr.mxu0 0.0
    %241 = vmatpush1.msra.mxu0 0.0
    %242 = vmatprep.subr.mxu0 0.0
    %243 = vmatpush1.msra.mxu0 0.0
    %244 = vmatprep.subr.mxu0 0.0
    %245 = vmatpush1.msra.mxu0 0.0
    %246 = vmatprep.subr.mxu0 0.0
    %247 = vmatpush1.msra.mxu0 0.0
    %248 = vmatprep.subr.mxu0 0.0
    %249 = vmatpush1.msra.mxu0 0.0
    %250 = vmatprep.subr.mxu0 0.0
    %251 = vmatpush1.msra.mxu0 0.0
    %252 = vmatprep.subr.mxu0 0.0
    %253 = vmatpush1.msra.mxu0 0.0
    %254 = vmatprep.subr.mxu0 0.0
    %255 = vmatpush1.msra.mxu0 0.0
    %256 = vmatprep.subr.mxu0 0.0
    %257 = vmatpush1.msra.mxu0 0.0
    %258 = vmatprep.subr.mxu0 0.0
    %259 = vmatpush1.msra.mxu0 0.0
    %260 = vmatprep.subr.mxu0 0.0
    %261 = vmatpush1.msra.mxu0 0.0
    %262 = vmatprep.subr.mxu0 0.0
    %263 = vmatpush1.msra.mxu0 0.0
    %264 = vmatprep.subr.mxu0 0.0
    %265 = vmatpush1.msra.mxu0 0.0
    %266 = vmatprep.subr.mxu0 0.0
    %267 = vmatpush1.msra.mxu0 0.0
    %268 = vmatprep.subr.mxu0 0.0
    %269 = vmatpush1.msra.mxu0 0.0
    %270 = vmatprep.subr.mxu0 0.0
    %271 = vmatpush1.msra.mxu0 0.0
    %272 = vmatprep.subr.mxu0 0.0
    %273 = vmatpush1.msra.mxu0 0.0
    %274 = vmatprep.subr.mxu0 0.0
    %275 = vmatpush1.msra.mxu0 0.0
    %276 = vmatprep.subr.mxu0 0.0
    %277 = vmatpush1.msra.mxu0 0.0
    %278 = vmatprep.subr.mxu0 0.0
    %279 = vmatpush1.msra.mxu0 0.0
    %280 = vmatprep.subr.mxu0 0.0
    %281 = vmatpush1.msra.mxu0 0.0
    %282 = vmatprep.subr.mxu0 0.0
    %283 = vmatpush1.msra.mxu0 0.0
    %284 = vmatprep.subr.mxu0 0.0
    %285 = vmatpush1.msra.mxu0 0.0
    %286 = vmatprep.subr.mxu0 0.0
    %287 = vmatpush1.msra.mxu0 0.0
    %288 = vmatprep.mubr.f32.mxu0 0.0
    %289 = vmatmul.mubr.f32.gmra.mrb[0].mxu0 %v213
    %v290 = vpop.f32.mrb[0].mxu0
    %v291 = vadd.f32 %v195, %v290
    %v292 = vpop.f32.mrb[0].mxu0
    %293 = vmatprep.mubr.f32.mxu0 0.0
    %294 = vmatmul.mubr.f32.gmra.mrb[0].mxu0 %v215
    %v295 = vpop.f32.mrb[0].mxu0
    %v296 = vadd.f32 %v200, %v295
    %v297 = vpop.f32.mrb[0].mxu0
    %298 = vmatprep.mubr.f32.mxu0 0.0
    %299 = vmatmul.mubr.f32.gmra.mrb[0].mxu0 %v217
    %v300 = vpop.f32.mrb[0].mxu0
    %v301 = vadd.f32 %v205, %v300
    %v302 = vpop.f32.mrb[0].mxu0
    %303 = vmatprep.mubr.f32.mxu0 0.0
    %304 = vmatmul.mubr.f32.gmra.mrb[0].mxu0 %v219
    %v305 = vpop.f32.mrb[0].mxu0
    %v306 = vadd.f32 %v210, %v305
    %v307 = vpop.f32.mrb[0].mxu0
    %308 = vdwg.mxu0
    %vm309 = vcmask 1045504
    %v310 = vrot.slane %v93, 2
    %v311 = vrot.slane %v85, 2
    %v312 = vsel %vm309, %v310, %v311
    %v313 = vrot.slane %v95, 2
    %v314 = vsel %vm309, %v311, %v313
    %v315 = vrot.slane %v94, 2
    %v316 = vrot.slane %v88, 2
    %v317 = vsel %vm309, %v315, %v316
    %v318 = vrot.slane %v96, 2
    %v319 = vsel %vm309, %v316, %v318
    %s320 = scalar_lea.vmem %s1, 8
    %v321 = vld [vmem:[%s320] sm:$0xf]
    %v322 = vsel %vm115, %v312, 0
    %v324 = vsel %vm115, %v314, 0
    %v326 = vsel %vm115, %v317, 0
    %v328 = vsel %vm115, %v319, 0
    %v331 = vsel %vm124, %v321, 0
    %333 = vmatprep.subr.mxu0 0.0
    %334 = vmatpush1.msra.mxu0 %v331
    %335 = vmatprep.subr.mxu0 0.0
    %336 = vmatpush1.msra.mxu0 0.0
    %337 = vmatprep.subr.mxu0 0.0
    %338 = vmatpush1.msra.mxu0 0.0
    %339 = vmatprep.subr.mxu0 0.0
    %340 = vmatpush1.msra.mxu0 0.0
    %341 = vmatprep.subr.mxu0 0.0
    %342 = vmatpush1.msra.mxu0 0.0
    %343 = vmatprep.subr.mxu0 0.0
    %344 = vmatpush1.msra.mxu0 0.0
    %345 = vmatprep.subr.mxu0 0.0
    %346 = vmatpush1.msra.mxu0 0.0
    %347 = vmatprep.subr.mxu0 0.0
    %348 = vmatpush1.msra.mxu0 0.0
    %349 = vmatprep.subr.mxu0 0.0
    %350 = vmatpush1.msra.mxu0 0.0
    %351 = vmatprep.subr.mxu0 0.0
    %352 = vmatpush1.msra.mxu0 0.0
    %353 = vmatprep.subr.mxu0 0.0
    %354 = vmatpush1.msra.mxu0 0.0
    %355 = vmatprep.subr.mxu0 0.0
    %356 = vmatpush1.msra.mxu0 0.0
    %357 = vmatprep.subr.mxu0 0.0
    %358 = vmatpush1.msra.mxu0 0.0
    %359 = vmatprep.subr.mxu0 0.0
    %360 = vmatpush1.msra.mxu0 0.0
    %361 = vmatprep.subr.mxu0 0.0
    %362 = vmatpush1.msra.mxu0 0.0
    %363 = vmatprep.subr.mxu0 0.0
    %364 = vmatpush1.msra.mxu0 0.0
    %365 = vmatprep.subr.mxu0 0.0
    %366 = vmatpush1.msra.mxu0 0.0
    %367 = vmatprep.subr.mxu0 0.0
    %368 = vmatpush1.msra.mxu0 0.0
    %369 = vmatprep.subr.mxu0 0.0
    %370 = vmatpush1.msra.mxu0 0.0
    %371 = vmatprep.subr.mxu0 0.0
    %372 = vmatpush1.msra.mxu0 0.0
    %373 = vmatprep.subr.mxu0 0.0
    %374 = vmatpush1.msra.mxu0 0.0
    %375 = vmatprep.subr.mxu0 0.0
    %376 = vmatpush1.msra.mxu0 0.0
    %377 = vmatprep.subr.mxu0 0.0
    %378 = vmatpush1.msra.mxu0 0.0
    %379 = vmatprep.subr.mxu0 0.0
    %380 = vmatpush1.msra.mxu0 0.0
    %381 = vmatprep.subr.mxu0 0.0
    %382 = vmatpush1.msra.mxu0 0.0
    %383 = vmatprep.subr.mxu0 0.0
    %384 = vmatpush1.msra.mxu0 0.0
    %385 = vmatprep.subr.mxu0 0.0
    %386 = vmatpush1.msra.mxu0 0.0
    %387 = vmatprep.subr.mxu0 0.0
    %388 = vmatpush1.msra.mxu0 0.0
    %389 = vmatprep.subr.mxu0 0.0
    %390 = vmatpush1.msra.mxu0 0.0
    %391 = vmatprep.subr.mxu0 0.0
    %392 = vmatpush1.msra.mxu0 0.0
    %393 = vmatprep.subr.mxu0 0.0
    %394 = vmatpush1.msra.mxu0 0.0
    %395 = vmatprep.subr.mxu0 0.0
    %396 = vmatpush1.msra.mxu0 0.0
    %397 = vmatprep.mubr.f32.mxu0 0.0
    %398 = vmatmul.mubr.f32.gmra.mrb[0].mxu0 %v322
    %v399 = vpop.f32.mrb[0].mxu0
    %v400 = vadd.f32 0.0, %v399
    %v401 = vpop.f32.mrb[0].mxu0
    %402 = vmatprep.mubr.f32.mxu0 0.0
    %403 = vmatmul.mubr.f32.gmra.mrb[0].mxu0 %v324
    %v404 = vpop.f32.mrb[0].mxu0
    %v405 = vadd.f32 0.0, %v404
    %v406 = vpop.f32.mrb[0].mxu0
    %407 = vmatprep.mubr.f32.mxu0 0.0
    %408 = vmatmul.mubr.f32.gmra.mrb[0].mxu0 %v326
    %v409 = vpop.f32.mrb[0].mxu0
    %v410 = vadd.f32 0.0, %v409
    %v411 = vpop.f32.mrb[0].mxu0
    %412 = vmatprep.mubr.f32.mxu0 0.0
    %413 = vmatmul.mubr.f32.gmra.mrb[0].mxu0 %v328
    %v414 = vpop.f32.mrb[0].mxu0
    %v415 = vadd.f32 0.0, %v414
    %v416 = vpop.f32.mrb[0].mxu0
    %417 = vdwg.mxu0
    %v418 = vadd.f32 %v291, %v400
    %v419 = vadd.f32 %v296, %v405
    %v420 = vadd.f32 %v301, %v410
    %v421 = vadd.f32 %v306, %v415
    %vm422 = vcmask 1044480
    %v423 = vrot.slane %v93, 3
    %v424 = vrot.slane %v85, 3
    %v425 = vsel %vm422, %v423, %v424
    %v426 = vrot.slane %v95, 3
    %v427 = vsel %vm422, %v424, %v426
    %v428 = vrot.slane %v94, 3
    %v429 = vrot.slane %v88, 3
    %v430 = vsel %vm422, %v428, %v429
    %v431 = vrot.slane %v96, 3
    %v432 = vsel %vm422, %v429, %v431
    %s433 = scalar_lea.vmem %s1, 12
    %v434 = vld [vmem:[%s433] sm:$0xf]
    %v435 = vsel %vm115, %v425, 0
    %v437 = vsel %vm115, %v427, 0
    %v439 = vsel %vm115, %v430, 0
    %v441 = vsel %vm115, %v432, 0
    %v444 = vsel %vm124, %v434, 0
    %446 = vmatprep.subr.mxu0 0.0
    %447 = vmatpush1.msra.mxu0 %v444
    %448 = vmatprep.subr.mxu0 0.0
    %449 = vmatpush1.msra.mxu0 0.0
    %450 = vmatprep.subr.mxu0 0.0
    %451 = vmatpush1.msra.mxu0 0.0
    %452 = vmatprep.subr.mxu0 0.0
    %453 = vmatpush1.msra.mxu0 0.0
    %454 = vmatprep.subr.mxu0 0.0
    %455 = vmatpush1.msra.mxu0 0.0
    %456 = vmatprep.subr.mxu0 0.0
    %457 = vmatpush1.msra.mxu0 0.0
    %458 = vmatprep.subr.mxu0 0.0
    %459 = vmatpush1.msra.mxu0 0.0
    %460 = vmatprep.subr.mxu0 0.0
    %461 = vmatpush1.msra.mxu0 0.0
    %462 = vmatprep.subr.mxu0 0.0
    %463 = vmatpush1.msra.mxu0 0.0
    %464 = vmatprep.subr.mxu0 0.0
    %465 = vmatpush1.msra.mxu0 0.0
    %466 = vmatprep.subr.mxu0 0.0
    %467 = vmatpush1.msra.mxu0 0.0
    %468 = vmatprep.subr.mxu0 0.0
    %469 = vmatpush1.msra.mxu0 0.0
    %470 = vmatprep.subr.mxu0 0.0
    %471 = vmatpush1.msra.mxu0 0.0
    %472 = vmatprep.subr.mxu0 0.0
    %473 = vmatpush1.msra.mxu0 0.0
    %474 = vmatprep.subr.mxu0 0.0
    %475 = vmatpush1.msra.mxu0 0.0
    %476 = vmatprep.subr.mxu0 0.0
    %477 = vmatpush1.msra.mxu0 0.0
    %478 = vmatprep.subr.mxu0 0.0
    %479 = vmatpush1.msra.mxu0 0.0
    %480 = vmatprep.subr.mxu0 0.0
    %481 = vmatpush1.msra.mxu0 0.0
    %482 = vmatprep.subr.mxu0 0.0
    %483 = vmatpush1.msra.mxu0 0.0
    %484 = vmatprep.subr.mxu0 0.0
    %485 = vmatpush1.msra.mxu0 0.0
    %486 = vmatprep.subr.mxu0 0.0
    %487 = vmatpush1.msra.mxu0 0.0
    %488 = vmatprep.subr.mxu0 0.0
    %489 = vmatpush1.msra.mxu0 0.0
    %490 = vmatprep.subr.mxu0 0.0
    %491 = vmatpush1.msra.mxu0 0.0
    %492 = vmatprep.subr.mxu0 0.0
    %493 = vmatpush1.msra.mxu0 0.0
    %494 = vmatprep.subr.mxu0 0.0
    %495 = vmatpush1.msra.mxu0 0.0
    %496 = vmatprep.subr.mxu0 0.0
    %497 = vmatpush1.msra.mxu0 0.0
    %498 = vmatprep.subr.mxu0 0.0
    %499 = vmatpush1.msra.mxu0 0.0
    %500 = vmatprep.subr.mxu0 0.0
    %501 = vmatpush1.msra.mxu0 0.0
    %502 = vmatprep.subr.mxu0 0.0
    %503 = vmatpush1.msra.mxu0 0.0
    %504 = vmatprep.subr.mxu0 0.0
    %505 = vmatpush1.msra.mxu0 0.0
    %506 = vmatprep.subr.mxu0 0.0
    %507 = vmatpush1.msra.mxu0 0.0
    %508 = vmatprep.subr.mxu0 0.0
    %509 = vmatpush1.msra.mxu0 0.0
    %510 = vmatprep.mubr.f32.mxu0 0.0
    %511 = vmatmul.mubr.f32.gmra.mrb[0].mxu0 %v435
    %v512 = vpop.f32.mrb[0].mxu0
    %v513 = vadd.f32 0.0, %v512
    %v514 = vpop.f32.mrb[0].mxu0
    %515 = vmatprep.mubr.f32.mxu0 0.0
    %516 = vmatmul.mubr.f32.gmra.mrb[0].mxu0 %v437
    %v517 = vpop.f32.mrb[0].mxu0
    %v518 = vadd.f32 0.0, %v517
    %v519 = vpop.f32.mrb[0].mxu0
    %520 = vmatprep.mubr.f32.mxu0 0.0
    %521 = vmatmul.mubr.f32.gmra.mrb[0].mxu0 %v439
    %v522 = vpop.f32.mrb[0].mxu0
    %v523 = vadd.f32 0.0, %v522
    %v524 = vpop.f32.mrb[0].mxu0
    %525 = vmatprep.mubr.f32.mxu0 0.0
    %526 = vmatmul.mubr.f32.gmra.mrb[0].mxu0 %v441
    %v527 = vpop.f32.mrb[0].mxu0
    %v528 = vadd.f32 0.0, %v527
    %v529 = vpop.f32.mrb[0].mxu0
    %530 = vdwg.mxu0
    %v531 = vadd.f32 %v418, %v513
    %v532 = vadd.f32 %v419, %v518
    %v533 = vadd.f32 %v420, %v523
    %v534 = vadd.f32 %v421, %v528
    %v535 = vld [vmem:[%s2] sm:$0x1]
    %v537 = vlaneseq
    %v538 = vshrl.u32 %v537, 7
    %v539 = vsub.s32 0, %v538
    %v540 = vrot.slane %v535, %v539
    %v542 = vadd.f32 %v531, %v540
    %v543 = vadd.f32 %v532, %v540
    %v544 = vadd.f32 %v533, %v540
    %v545 = vadd.f32 %v534, %v540
    %vm550 = vcmask 1042432
    %v551 = vrot.slane %v542, 5
    %v552 = vrot.slane %v543, 5
    %v553 = vsel %vm550, %v551, %v552
    %v554 = vrot.slane %v544, 5
    %v555 = vrot.slane %v545, 5
    %v556 = vsel %vm550, %v554, %v555
    %v563 = vsel %vm550, 0.0, %v551
    %v564 = vsel %vm550, 0.0, %v554
    %v565 = vsel %vm550, %v552, 0.0
    %v566 = vsel %vm550, %v555, 0.0
    %v571 = vrot.slane %v563, 1
    %v572 = vrot.slane %v553, 1
    %v573 = vsel %vm102, %v571, %v572
    %v574 = vrot.slane %v565, 1
    %v575 = vsel %vm102, %v572, %v574
    %v576 = vrot.slane %v564, 1
    %v577 = vrot.slane %v556, 1
    %v578 = vsel %vm102, %v576, %v577
    %v579 = vrot.slane %v566, 1
    %v580 = vsel %vm102, %v577, %v579
    %v585 = vrot.slane %v563, 2
    %v586 = vrot.slane %v553, 2
    %v587 = vsel %vm309, %v585, %v586
    %v588 = vrot.slane %v565, 2
    %v589 = vsel %vm309, %v586, %v588
    %v590 = vrot.slane %v564, 2
    %v591 = vrot.slane %v556, 2
    %v592 = vsel %vm309, %v590, %v591
    %v593 = vrot.slane %v566, 2
    %v594 = vsel %vm309, %v591, %v593
    %v599 = vrot.slane %v563, 3
    %v600 = vrot.slane %v553, 3
    %v601 = vsel %vm422, %v599, %v600
    %v602 = vrot.slane %v565, 3
    %v603 = vsel %vm422, %v600, %v602
    %v604 = vrot.slane %v564, 3
    %v605 = vrot.slane %v556, 3
    %v606 = vsel %vm422, %v604, %v605
    %v607 = vrot.slane %v566, 3
    %v608 = vsel %vm422, %v605, %v607
    %v613 = vrot.slane %v563, 4
    %v614 = vrot.slane %v553, 4
    %v615 = vsel %vm124, %v613, %v614
    %v616 = vrot.slane %v565, 4
    %v617 = vsel %vm124, %v614, %v616
    %v618 = vrot.slane %v564, 4
    %v619 = vrot.slane %v556, 4
    %v620 = vsel %vm124, %v618, %v619
    %v621 = vrot.slane %v566, 4
    %v622 = vsel %vm124, %v619, %v621
    %v627 = vrot.slane %v563, 5
    %v628 = vrot.slane %v553, 5
    %v629 = vsel %vm550, %v627, %v628
    %v630 = vrot.slane %v565, 5
    %v631 = vsel %vm550, %v628, %v630
    %v632 = vrot.slane %v564, 5
    %v633 = vrot.slane %v556, 5
    %v634 = vsel %vm550, %v632, %v633
    %v635 = vrot.slane %v566, 5
    %v636 = vsel %vm550, %v633, %v635
    %vm641 = vcmask 1041408
    %v642 = vrot.slane %v563, 6
    %v643 = vrot.slane %v553, 6
    %v644 = vsel %vm641, %v642, %v643
    %v645 = vrot.slane %v565, 6
    %v646 = vsel %vm641, %v643, %v645
    %v647 = vrot.slane %v564, 6
    %v648 = vrot.slane %v556, 6
    %v649 = vsel %vm641, %v647, %v648
    %v650 = vrot.slane %v566, 6
    %v651 = vsel %vm641, %v648, %v650
    %v656 = vrot.slane %v563, 7
    %v657 = vrot.slane %v553, 7
    %v658 = vsel %vm82, %v656, %v657
    %v659 = vrot.slane %v565, 7
    %v660 = vsel %vm82, %v657, %v659
    %v661 = vrot.slane %v564, 7
    %v662 = vrot.slane %v556, 7
    %v663 = vsel %vm82, %v661, %v662
    %v664 = vrot.slane %v566, 7
    %v665 = vsel %vm82, %v662, %v664
    %v670 = vld [vmem:[#allocation2] sm:$0xff]
    %v671 = vld [vmem:[#allocation2 + $0x8] sm:$0xff]
    %v672 = vld [vmem:[#allocation2 + $0x10] sm:$0xff]
    %v673 = vld [vmem:[#allocation2 + $0x18] sm:$0xff]
    %v674 = vld [vmem:[#allocation2 + $0x20] sm:$0xff]
    %v675 = vld [vmem:[#allocation2 + $0x28] sm:$0xff]
    %v676 = vld [vmem:[#allocation2 + $0x30] sm:$0xff]
    %v677 = vld [vmem:[#allocation2 + $0x38] sm:$0xff]
    %v678 = vld [vmem:[#allocation2 + $0x40] sm:$0xff]
    %v679 = vld [vmem:[#allocation2 + $0x48] sm:$0xff]
    %v680 = vld [vmem:[#allocation2 + $0x50] sm:$0xff]
    %v681 = vld [vmem:[#allocation2 + $0x58] sm:$0xff]
    %v682 = vld [vmem:[#allocation2 + $0x60] sm:$0xff]
    %v683 = vld [vmem:[#allocation2 + $0x68] sm:$0xff]
    %v684 = vld [vmem:[#allocation2 + $0x70] sm:$0xff]
    %v685 = vld [vmem:[#allocation2 + $0x78] sm:$0xff]
    %v686 = vld [vmem:[#allocation2 + $0x80] sm:$0xff]
    %v687 = vld [vmem:[#allocation2 + $0x88] sm:$0xff]
    %v688 = vld [vmem:[#allocation2 + $0x90] sm:$0xff]
    %v689 = vld [vmem:[#allocation2 + $0x98] sm:$0xff]
    %v690 = vld [vmem:[#allocation2 + $0xa0] sm:$0xff]
    %v691 = vld [vmem:[#allocation2 + $0xa8] sm:$0xff]
    %v692 = vld [vmem:[#allocation2 + $0xb0] sm:$0xff]
    %v693 = vld [vmem:[#allocation2 + $0xb8] sm:$0xff]
    %v694 = vld [vmem:[#allocation2 + $0xc0] sm:$0xff]
    %v695 = vld [vmem:[#allocation2 + $0xc8] sm:$0xff]
    %v696 = vld [vmem:[#allocation2 + $0xd0] sm:$0xff]
    %v697 = vld [vmem:[#allocation2 + $0xd8] sm:$0xff]
    %v698 = vld [vmem:[#allocation2 + $0xe0] sm:$0xff]
    %v699 = vld [vmem:[#allocation2 + $0xe8] sm:$0xff]
    %v700 = vld [vmem:[#allocation2 + $0xf0] sm:$0xff]
    %v701 = vld [vmem:[#allocation2 + $0xf8] sm:$0xff]
    %v702 = vld [vmem:[#allocation2 + $0x100] sm:$0xff]
    %v703 = vld [vmem:[#allocation2 + $0x108] sm:$0xff]
    %v704 = vld [vmem:[#allocation2 + $0x110] sm:$0xff]
    %v705 = vld [vmem:[#allocation2 + $0x118] sm:$0xff]
    %v706 = vld [vmem:[#allocation2 + $0x120] sm:$0xff]
    %v707 = vld [vmem:[#allocation2 + $0x128] sm:$0xff]
    %v708 = vld [vmem:[#allocation2 + $0x130] sm:$0xff]
    %v709 = vld [vmem:[#allocation2 + $0x138] sm:$0xff]
    %v710 = vld [vmem:[#allocation2 + $0x140] sm:$0xff]
    %v711 = vld [vmem:[#allocation2 + $0x148] sm:$0xff]
    %v712 = vld [vmem:[#allocation2 + $0x150] sm:$0xff]
    %v713 = vld [vmem:[#allocation2 + $0x158] sm:$0xff]
    %v714 = vld [vmem:[#allocation2 + $0x160] sm:$0xff]
    %v715 = vld [vmem:[#allocation2 + $0x168] sm:$0xff]
    %v716 = vld [vmem:[#allocation2 + $0x170] sm:$0xff]
    %v717 = vld [vmem:[#allocation2 + $0x178] sm:$0xff]
    %v718 = vld [vmem:[#allocation2 + $0x180] sm:$0xff]
    %v719 = vld [vmem:[#allocation2 + $0x188] sm:$0xff]
    %v720 = vld [vmem:[#allocation2 + $0x190] sm:$0xff]
    %v721 = vld [vmem:[#allocation2 + $0x198] sm:$0xff]
    %v722 = vld [vmem:[#allocation2 + $0x1a0] sm:$0xff]
    %v723 = vld [vmem:[#allocation2 + $0x1a8] sm:$0xff]
    %v724 = vld [vmem:[#allocation2 + $0x1b0] sm:$0xff]
    %v725 = vld [vmem:[#allocation2 + $0x1b8] sm:$0xff]
    %v726 = vld [vmem:[#allocation2 + $0x1c0] sm:$0xff]
    %v727 = vld [vmem:[#allocation2 + $0x1c8] sm:$0xff]
    %v728 = vld [vmem:[#allocation2 + $0x1d0] sm:$0xff]
    %v729 = vld [vmem:[#allocation2 + $0x1d8] sm:$0xff]
    %v730 = vld [vmem:[#allocation2 + $0x1e0] sm:$0xff]
    %v731 = vld [vmem:[#allocation2 + $0x1e8] sm:$0xff]
    %v732 = vld [vmem:[#allocation2 + $0x1f0] sm:$0xff]
    %v733 = vld [vmem:[#allocation2 + $0x1f8] sm:$0xff]
    %v734 = vld [vmem:[#allocation2 + $0x200] sm:$0xff]
    %v735 = vld [vmem:[#allocation2 + $0x208] sm:$0xff]
    %v736 = vld [vmem:[#allocation2 + $0x210] sm:$0xff]
    %v737 = vld [vmem:[#allocation2 + $0x218] sm:$0xff]
    %v738 = vld [vmem:[#allocation2 + $0x220] sm:$0xff]
    %v739 = vld [vmem:[#allocation2 + $0x228] sm:$0xff]
    %v740 = vld [vmem:[#allocation2 + $0x230] sm:$0xff]
    %v741 = vld [vmem:[#allocation2 + $0x238] sm:$0xff]
    %v742 = vld [vmem:[#allocation2 + $0x240] sm:$0xff]
    %v743 = vld [vmem:[#allocation2 + $0x248] sm:$0xff]
    %v744 = vld [vmem:[#allocation2 + $0x250] sm:$0xff]
    %v745 = vld [vmem:[#allocation2 + $0x258] sm:$0xff]
    %v746 = vld [vmem:[#allocation2 + $0x260] sm:$0xff]
    %v747 = vld [vmem:[#allocation2 + $0x268] sm:$0xff]
    %v748 = vld [vmem:[#allocation2 + $0x270] sm:$0xff]
    %v749 = vld [vmem:[#allocation2 + $0x278] sm:$0xff]
    %v750 = vld [vmem:[#allocation2 + $0x280] sm:$0xff]
    %v751 = vld [vmem:[#allocation2 + $0x288] sm:$0xff]
    %v752 = vld [vmem:[#allocation2 + $0x290] sm:$0xff]
    %v753 = vld [vmem:[#allocation2 + $0x298] sm:$0xff]
    %v754 = vld [vmem:[#allocation2 + $0x2a0] sm:$0xff]
    %v755 = vld [vmem:[#allocation2 + $0x2a8] sm:$0xff]
    %v756 = vld [vmem:[#allocation2 + $0x2b0] sm:$0xff]
    %v757 = vld [vmem:[#allocation2 + $0x2b8] sm:$0xff]
    %v758 = vld [vmem:[#allocation2 + $0x2c0] sm:$0xff]
    %v759 = vld [vmem:[#allocation2 + $0x2c8] sm:$0xff]
    %v760 = vld [vmem:[#allocation2 + $0x2d0] sm:$0xff]
    %v761 = vld [vmem:[#allocation2 + $0x2d8] sm:$0xff]
    %v762 = vld [vmem:[#allocation2 + $0x2e0] sm:$0xff]
    %v763 = vld [vmem:[#allocation2 + $0x2e8] sm:$0xff]
    %v764 = vld [vmem:[#allocation2 + $0x2f0] sm:$0xff]
    %v765 = vld [vmem:[#allocation2 + $0x2f8] sm:$0xff]
    %v766 = vld [vmem:[#allocation2 + $0x300] sm:$0xff]
    %v767 = vld [vmem:[#allocation2 + $0x308] sm:$0xff]
    %v768 = vld [vmem:[#allocation2 + $0x310] sm:$0xff]
    %v769 = vld [vmem:[#allocation2 + $0x318] sm:$0xff]
    %v770 = vld [vmem:[#allocation2 + $0x320] sm:$0xff]
    %v771 = vld [vmem:[#allocation2 + $0x328] sm:$0xff]
    %v772 = vld [vmem:[#allocation2 + $0x330] sm:$0xff]
    %v773 = vld [vmem:[#allocation2 + $0x338] sm:$0xff]
    %v774 = vld [vmem:[#allocation2 + $0x340] sm:$0xff]
    %v775 = vld [vmem:[#allocation2 + $0x348] sm:$0xff]
    %v776 = vld [vmem:[#allocation2 + $0x350] sm:$0xff]
    %v777 = vld [vmem:[#allocation2 + $0x358] sm:$0xff]
    %v778 = vld [vmem:[#allocation2 + $0x360] sm:$0xff]
    %v779 = vld [vmem:[#allocation2 + $0x368] sm:$0xff]
    %v780 = vld [vmem:[#allocation2 + $0x370] sm:$0xff]
    %v781 = vld [vmem:[#allocation2 + $0x378] sm:$0xff]
    %v782 = vld [vmem:[#allocation2 + $0x380] sm:$0xff]
    %v783 = vld [vmem:[#allocation2 + $0x388] sm:$0xff]
    %v784 = vld [vmem:[#allocation2 + $0x390] sm:$0xff]
    %v785 = vld [vmem:[#allocation2 + $0x398] sm:$0xff]
    %v786 = vld [vmem:[#allocation2 + $0x3a0] sm:$0xff]
    %v787 = vld [vmem:[#allocation2 + $0x3a8] sm:$0xff]
    %v788 = vld [vmem:[#allocation2 + $0x3b0] sm:$0xff]
    %v789 = vld [vmem:[#allocation2 + $0x3b8] sm:$0xff]
    %v790 = vld [vmem:[#allocation2 + $0x3c0] sm:$0xff]
    %v791 = vld [vmem:[#allocation2 + $0x3c8] sm:$0xff]
    %v792 = vld [vmem:[#allocation2 + $0x3d0] sm:$0xff]
    %v793 = vld [vmem:[#allocation2 + $0x3d8] sm:$0xff]
    %v794 = vld [vmem:[#allocation2 + $0x3e0] sm:$0xff]
    %v795 = vld [vmem:[#allocation2 + $0x3e8] sm:$0xff]
    %v796 = vld [vmem:[#allocation2 + $0x3f0] sm:$0xff]
    %v797 = vld [vmem:[#allocation2 + $0x3f8] sm:$0xff]
    %v798 = vld [vmem:[%s4] sm:$0x1]
    %v800 = vlaneseq
    %v801 = vshrl.u32 %v800, 7
    %v802 = vsub.s32 0, %v801
    %v803 = vrot.slane %v798, %v802
    %805 = vmatprep.subr.mxu0 0.0
    %806 = vmatpush1.msra.mxu0 %v670
    %807 = vmatprep.subr.mxu0 0.0
    %808 = vmatpush1.msra.mxu0 %v671
    %809 = vmatprep.subr.mxu0 0.0
    %810 = vmatpush1.msra.mxu0 %v672
    %811 = vmatprep.subr.mxu0 0.0
    %812 = vmatpush1.msra.mxu0 %v673
    %813 = vmatprep.subr.mxu0 0.0
    %814 = vmatpush1.msra.mxu0 %v674
    %815 = vmatprep.subr.mxu0 0.0
    %816 = vmatpush1.msra.mxu0 %v675
    %817 = vmatprep.subr.mxu0 0.0
    %818 = vmatpush1.msra.mxu0 %v676
    %819 = vmatprep.subr.mxu0 0.0
    %820 = vmatpush1.msra.mxu0 %v677
    %821 = vmatprep.subr.mxu0 0.0
    %822 = vmatpush1.msra.mxu0 %v678
    %823 = vmatprep.subr.mxu0 0.0
    %824 = vmatpush1.msra.mxu0 %v679
    %825 = vmatprep.subr.mxu0 0.0
    %826 = vmatpush1.msra.mxu0 %v680
    %827 = vmatprep.subr.mxu0 0.0
    %828 = vmatpush1.msra.mxu0 %v681
    %829 = vmatprep.subr.mxu0 0.0
    %830 = vmatpush1.msra.mxu0 %v682
    %831 = vmatprep.subr.mxu0 0.0
    %832 = vmatpush1.msra.mxu0 %v683
    %833 = vmatprep.subr.mxu0 0.0
    %834 = vmatpush1.msra.mxu0 %v684
    %835 = vmatprep.subr.mxu0 0.0
    %836 = vmatpush1.msra.mxu0 %v685
    %837 = vmatprep.subr.mxu0 0.0
    %838 = vmatpush1.msra.mxu0 %v686
    %839 = vmatprep.subr.mxu0 0.0
    %840 = vmatpush1.msra.mxu0 %v687
    %841 = vmatprep.subr.mxu0 0.0
    %842 = vmatpush1.msra.mxu0 %v688
    %843 = vmatprep.subr.mxu0 0.0
    %844 = vmatpush1.msra.mxu0 %v689
    %845 = vmatprep.subr.mxu0 0.0
    %846 = vmatpush1.msra.mxu0 %v690
    %847 = vmatprep.subr.mxu0 0.0
    %848 = vmatpush1.msra.mxu0 %v691
    %849 = vmatprep.subr.mxu0 0.0
    %850 = vmatpush1.msra.mxu0 %v692
    %851 = vmatprep.subr.mxu0 0.0
    %852 = vmatpush1.msra.mxu0 %v693
    %853 = vmatprep.subr.mxu0 0.0
    %854 = vmatpush1.msra.mxu0 %v694
    %855 = vmatprep.subr.mxu0 0.0
    %856 = vmatpush1.msra.mxu0 %v695
    %857 = vmatprep.subr.mxu0 0.0
    %858 = vmatpush1.msra.mxu0 %v696
    %859 = vmatprep.subr.mxu0 0.0
    %860 = vmatpush1.msra.mxu0 %v697
    %861 = vmatprep.subr.mxu0 0.0
    %862 = vmatpush1.msra.mxu0 %v698
    %863 = vmatprep.subr.mxu0 0.0
    %864 = vmatpush1.msra.mxu0 %v699
    %865 = vmatprep.subr.mxu0 0.0
    %866 = vmatpush1.msra.mxu0 %v700
    %867 = vmatprep.subr.mxu0 0.0
    %868 = vmatpush1.msra.mxu0 %v701
    %869 = vmatprep.mubr.f32.mxu0 %v573
    %870 = vmatmul.mubr.f32.gmra.mrb[0].mxu0 %v563
    %v871 = vpop.f32.mrb[0].mxu0
    %v872 = vadd.f32 %v803, %v871
    %v873 = vpop.f32.mrb[0].mxu0
    %874 = vmatprep.mubr.f32.mxu0 %v575
    %875 = vmatmul.mubr.f32.gmra.mrb[0].mxu0 %v553
    %v876 = vpop.f32.mrb[0].mxu0
    %v877 = vadd.f32 %v803, %v876
    %v878 = vpop.f32.mrb[0].mxu0
    %879 = vmatprep.mubr.f32.mxu0 %v578
    %880 = vmatmul.mubr.f32.gmra.mrb[0].mxu0 %v564
    %v881 = vpop.f32.mrb[0].mxu0
    %v882 = vadd.f32 %v803, %v881
    %v883 = vpop.f32.mrb[0].mxu0
    %884 = vmatprep.mubr.f32.mxu0 %v580
    %885 = vmatmul.mubr.f32.gmra.mrb[0].mxu0 %v556
    %v886 = vpop.f32.mrb[0].mxu0
    %v887 = vadd.f32 %v803, %v886
    %v888 = vpop.f32.mrb[0].mxu0
    %889 = vdwg.mxu0
    %890 = vmatprep.subr.mxu0 0.0
    %891 = vmatpush1.msra.mxu0 %v702
    %892 = vmatprep.subr.mxu0 0.0
    %893 = vmatpush1.msra.mxu0 %v703
    %894 = vmatprep.subr.mxu0 0.0
    %895 = vmatpush1.msra.mxu0 %v704
    %896 = vmatprep.subr.mxu0 0.0
    %897 = vmatpush1.msra.mxu0 %v705
    %898 = vmatprep.subr.mxu0 0.0
    %899 = vmatpush1.msra.mxu0 %v706
    %900 = vmatprep.subr.mxu0 0.0
    %901 = vmatpush1.msra.mxu0 %v707
    %902 = vmatprep.subr.mxu0 0.0
    %903 = vmatpush1.msra.mxu0 %v708
    %904 = vmatprep.subr.mxu0 0.0
    %905 = vmatpush1.msra.mxu0 %v709
    %906 = vmatprep.subr.mxu0 0.0
    %907 = vmatpush1.msra.mxu0 %v710
    %908 = vmatprep.subr.mxu0 0.0
    %909 = vmatpush1.msra.mxu0 %v711
    %910 = vmatprep.subr.mxu0 0.0
    %911 = vmatpush1.msra.mxu0 %v712
    %912 = vmatprep.subr.mxu0 0.0
    %913 = vmatpush1.msra.mxu0 %v713
    %914 = vmatprep.subr.mxu0 0.0
    %915 = vmatpush1.msra.mxu0 %v714
    %916 = vmatprep.subr.mxu0 0.0
    %917 = vmatpush1.msra.mxu0 %v715
    %918 = vmatprep.subr.mxu0 0.0
    %919 = vmatpush1.msra.mxu0 %v716
    %920 = vmatprep.subr.mxu0 0.0
    %921 = vmatpush1.msra.mxu0 %v717
    %922 = vmatprep.subr.mxu0 0.0
    %923 = vmatpush1.msra.mxu0 %v718
    %924 = vmatprep.subr.mxu0 0.0
    %925 = vmatpush1.msra.mxu0 %v719
    %926 = vmatprep.subr.mxu0 0.0
    %927 = vmatpush1.msra.mxu0 %v720
    %928 = vmatprep.subr.mxu0 0.0
    %929 = vmatpush1.msra.mxu0 %v721
    %930 = vmatprep.subr.mxu0 0.0
    %931 = vmatpush1.msra.mxu0 %v722
    %932 = vmatprep.subr.mxu0 0.0
    %933 = vmatpush1.msra.mxu0 %v723
    %934 = vmatprep.subr.mxu0 0.0
    %935 = vmatpush1.msra.mxu0 %v724
    %936 = vmatprep.subr.mxu0 0.0
    %937 = vmatpush1.msra.mxu0 %v725
    %938 = vmatprep.subr.mxu0 0.0
    %939 = vmatpush1.msra.mxu0 %v726
    %940 = vmatprep.subr.mxu0 0.0
    %941 = vmatpush1.msra.mxu0 %v727
    %942 = vmatprep.subr.mxu0 0.0
    %943 = vmatpush1.msra.mxu0 %v728
    %944 = vmatprep.subr.mxu0 0.0
    %945 = vmatpush1.msra.mxu0 %v729
    %946 = vmatprep.subr.mxu0 0.0
    %947 = vmatpush1.msra.mxu0 %v730
    %948 = vmatprep.subr.mxu0 0.0
    %949 = vmatpush1.msra.mxu0 %v731
    %950 = vmatprep.subr.mxu0 0.0
    %951 = vmatpush1.msra.mxu0 %v732
    %952 = vmatprep.subr.mxu0 0.0
    %953 = vmatpush1.msra.mxu0 %v733
    %954 = vmatprep.mubr.f32.mxu0 %v601
    %955 = vmatmul.mubr.f32.gmra.mrb[0].mxu0 %v587
    %v956 = vpop.f32.mrb[0].mxu0
    %v957 = vadd.f32 %v872, %v956
    %v958 = vpop.f32.mrb[0].mxu0
    %959 = vmatprep.mubr.f32.mxu0 %v603
    %960 = vmatmul.mubr.f32.gmra.mrb[0].mxu0 %v589
    %v961 = vpop.f32.mrb[0].mxu0
    %v962 = vadd.f32 %v877, %v961
    %v963 = vpop.f32.mrb[0].mxu0
    %964 = vmatprep.mubr.f32.mxu0 %v606
    %965 = vmatmul.mubr.f32.gmra.mrb[0].mxu0 %v592
    %v966 = vpop.f32.mrb[0].mxu0
    %v967 = vadd.f32 %v882, %v966
    %v968 = vpop.f32.mrb[0].mxu0
    %969 = vmatprep.mubr.f32.mxu0 %v608
    %970 = vmatmul.mubr.f32.gmra.mrb[0].mxu0 %v594
    %v971 = vpop.f32.mrb[0].mxu0
    %v972 = vadd.f32 %v887, %v971
    %v973 = vpop.f32.mrb[0].mxu0
    %974 = vdwg.mxu0
    %975 = vmatprep.subr.mxu0 0.0
    %976 = vmatpush1.msra.mxu0 %v734
    %977 = vmatprep.subr.mxu0 0.0
    %978 = vmatpush1.msra.mxu0 %v735
    %979 = vmatprep.subr.mxu0 0.0
    %980 = vmatpush1.msra.mxu0 %v736
    %981 = vmatprep.subr.mxu0 0.0
    %982 = vmatpush1.msra.mxu0 %v737
    %983 = vmatprep.subr.mxu0 0.0
    %984 = vmatpush1.msra.mxu0 %v738
    %985 = vmatprep.subr.mxu0 0.0
    %986 = vmatpush1.msra.mxu0 %v739
    %987 = vmatprep.subr.mxu0 0.0
    %988 = vmatpush1.msra.mxu0 %v740
    %989 = vmatprep.subr.mxu0 0.0
    %990 = vmatpush1.msra.mxu0 %v741
    %991 = vmatprep.subr.mxu0 0.0
    %992 = vmatpush1.msra.mxu0 %v742
    %993 = vmatprep.subr.mxu0 0.0
    %994 = vmatpush1.msra.mxu0 %v743
    %995 = vmatprep.subr.mxu0 0.0
    %996 = vmatpush1.msra.mxu0 %v744
    %997 = vmatprep.subr.mxu0 0.0
    %998 = vmatpush1.msra.mxu0 %v745
    %999 = vmatprep.subr.mxu0 0.0
    %1000 = vmatpush1.msra.mxu0 %v746
    %1001 = vmatprep.subr.mxu0 0.0
    %1002 = vmatpush1.msra.mxu0 %v747
    %1003 = vmatprep.subr.mxu0 0.0
    %1004 = vmatpush1.msra.mxu0 %v748
    %1005 = vmatprep.subr.mxu0 0.0
    %1006 = vmatpush1.msra.mxu0 %v749
    %1007 = vmatprep.subr.mxu0 0.0
    %1008 = vmatpush1.msra.mxu0 %v750
    %1009 = vmatprep.subr.mxu0 0.0
    %1010 = vmatpush1.msra.mxu0 %v751
    %1011 = vmatprep.subr.mxu0 0.0
    %1012 = vmatpush1.msra.mxu0 %v752
    %1013 = vmatprep.subr.mxu0 0.0
    %1014 = vmatpush1.msra.mxu0 %v753
    %1015 = vmatprep.subr.mxu0 0.0
    %1016 = vmatpush1.msra.mxu0 %v754
    %1017 = vmatprep.subr.mxu0 0.0
    %1018 = vmatpush1.msra.mxu0 %v755
    %1019 = vmatprep.subr.mxu0 0.0
    %1020 = vmatpush1.msra.mxu0 %v756
    %1021 = vmatprep.subr.mxu0 0.0
    %1022 = vmatpush1.msra.mxu0 %v757
    %1023 = vmatprep.subr.mxu0 0.0
    %1024 = vmatpush1.msra.mxu0 %v758
    %1025 = vmatprep.subr.mxu0 0.0
    %1026 = vmatpush1.msra.mxu0 %v759
    %1027 = vmatprep.subr.mxu0 0.0
    %1028 = vmatpush1.msra.mxu0 %v760
    %1029 = vmatprep.subr.mxu0 0.0
    %1030 = vmatpush1.msra.mxu0 %v761
    %1031 = vmatprep.subr.mxu0 0.0
    %1032 = vmatpush1.msra.mxu0 %v762
    %1033 = vmatprep.subr.mxu0 0.0
    %1034 = vmatpush1.msra.mxu0 %v763
    %1035 = vmatprep.subr.mxu0 0.0
    %1036 = vmatpush1.msra.mxu0 %v764
    %1037 = vmatprep.subr.mxu0 0.0
    %1038 = vmatpush1.msra.mxu0 %v765
    %1039 = vmatprep.mubr.f32.mxu0 %v629
    %1040 = vmatmul.mubr.f32.gmra.mrb[0].mxu0 %v615
    %v1041 = vpop.f32.mrb[0].mxu0
    %v1042 = vadd.f32 %v957, %v1041
    %v1043 = vpop.f32.mrb[0].mxu0
    %1044 = vmatprep.mubr.f32.mxu0 %v631
    %1045 = vmatmul.mubr.f32.gmra.mrb[0].mxu0 %v617
    %v1046 = vpop.f32.mrb[0].mxu0
    %v1047 = vadd.f32 %v962, %v1046
    %v1048 = vpop.f32.mrb[0].mxu0
    %1049 = vmatprep.mubr.f32.mxu0 %v634
    %1050 = vmatmul.mubr.f32.gmra.mrb[0].mxu0 %v620
    %v1051 = vpop.f32.mrb[0].mxu0
    %v1052 = vadd.f32 %v967, %v1051
    %v1053 = vpop.f32.mrb[0].mxu0
    %1054 = vmatprep.mubr.f32.mxu0 %v636
    %1055 = vmatmul.mubr.f32.gmra.mrb[0].mxu0 %v622
    %v1056 = vpop.f32.mrb[0].mxu0
    %v1057 = vadd.f32 %v972, %v1056
    %v1058 = vpop.f32.mrb[0].mxu0
    %1059 = vdwg.mxu0
    %1060 = vmatprep.subr.mxu0 0.0
    %1061 = vmatpush1.msra.mxu0 %v766
    %1062 = vmatprep.subr.mxu0 0.0
    %1063 = vmatpush1.msra.mxu0 %v767
    %1064 = vmatprep.subr.mxu0 0.0
    %1065 = vmatpush1.msra.mxu0 %v768
    %1066 = vmatprep.subr.mxu0 0.0
    %1067 = vmatpush1.msra.mxu0 %v769
    %1068 = vmatprep.subr.mxu0 0.0
    %1069 = vmatpush1.msra.mxu0 %v770
    %1070 = vmatprep.subr.mxu0 0.0
    %1071 = vmatpush1.msra.mxu0 %v771
    %1072 = vmatprep.subr.mxu0 0.0
    %1073 = vmatpush1.msra.mxu0 %v772
    %1074 = vmatprep.subr.mxu0 0.0
    %1075 = vmatpush1.msra.mxu0 %v773
    %1076 = vmatprep.subr.mxu0 0.0
    %1077 = vmatpush1.msra.mxu0 %v774
    %1078 = vmatprep.subr.mxu0 0.0
    %1079 = vmatpush1.msra.mxu0 %v775
    %1080 = vmatprep.subr.mxu0 0.0
    %1081 = vmatpush1.msra.mxu0 %v776
    %1082 = vmatprep.subr.mxu0 0.0
    %1083 = vmatpush1.msra.mxu0 %v777
    %1084 = vmatprep.subr.mxu0 0.0
    %1085 = vmatpush1.msra.mxu0 %v778
    %1086 = vmatprep.subr.mxu0 0.0
    %1087 = vmatpush1.msra.mxu0 %v779
    %1088 = vmatprep.subr.mxu0 0.0
    %1089 = vmatpush1.msra.mxu0 %v780
    %1090 = vmatprep.subr.mxu0 0.0
    %1091 = vmatpush1.msra.mxu0 %v781
    %1092 = vmatprep.subr.mxu0 0.0
    %1093 = vmatpush1.msra.mxu0 %v782
    %1094 = vmatprep.subr.mxu0 0.0
    %1095 = vmatpush1.msra.mxu0 %v783
    %1096 = vmatprep.subr.mxu0 0.0
    %1097 = vmatpush1.msra.mxu0 %v784
    %1098 = vmatprep.subr.mxu0 0.0
    %1099 = vmatpush1.msra.mxu0 %v785
    %1100 = vmatprep.subr.mxu0 0.0
    %1101 = vmatpush1.msra.mxu0 %v786
    %1102 = vmatprep.subr.mxu0 0.0
    %1103 = vmatpush1.msra.mxu0 %v787
    %1104 = vmatprep.subr.mxu0 0.0
    %1105 = vmatpush1.msra.mxu0 %v788
    %1106 = vmatprep.subr.mxu0 0.0
    %1107 = vmatpush1.msra.mxu0 %v789
    %1108 = vmatprep.subr.mxu0 0.0
    %1109 = vmatpush1.msra.mxu0 %v790
    %1110 = vmatprep.subr.mxu0 0.0
    %1111 = vmatpush1.msra.mxu0 %v791
    %1112 = vmatprep.subr.mxu0 0.0
    %1113 = vmatpush1.msra.mxu0 %v792
    %1114 = vmatprep.subr.mxu0 0.0
    %1115 = vmatpush1.msra.mxu0 %v793
    %1116 = vmatprep.subr.mxu0 0.0
    %1117 = vmatpush1.msra.mxu0 %v794
    %1118 = vmatprep.subr.mxu0 0.0
    %1119 = vmatpush1.msra.mxu0 %v795
    %1120 = vmatprep.subr.mxu0 0.0
    %1121 = vmatpush1.msra.mxu0 %v796
    %1122 = vmatprep.subr.mxu0 0.0
    %1123 = vmatpush1.msra.mxu0 %v797
    %1124 = vmatprep.mubr.f32.mxu0 %v658
    %1125 = vmatmul.mubr.f32.gmra.mrb[0].mxu0 %v644
    %v1126 = vpop.f32.mrb[0].mxu0
    %v1127 = vadd.f32 %v1042, %v1126
    %v1128 = vpop.f32.mrb[0].mxu0
    %1129 = vmatprep.mubr.f32.mxu0 %v660
    %1130 = vmatmul.mubr.f32.gmra.mrb[0].mxu0 %v646
    %v1131 = vpop.f32.mrb[0].mxu0
    %v1132 = vadd.f32 %v1047, %v1131
    %v1133 = vpop.f32.mrb[0].mxu0
    %1134 = vmatprep.mubr.f32.mxu0 %v663
    %1135 = vmatmul.mubr.f32.gmra.mrb[0].mxu0 %v649
    %v1136 = vpop.f32.mrb[0].mxu0
    %v1137 = vadd.f32 %v1052, %v1136
    %v1138 = vpop.f32.mrb[0].mxu0
    %1139 = vmatprep.mubr.f32.mxu0 %v665
    %1140 = vmatmul.mubr.f32.gmra.mrb[0].mxu0 %v651
    %v1141 = vpop.f32.mrb[0].mxu0
    %v1142 = vadd.f32 %v1057, %v1141
    %v1143 = vpop.f32.mrb[0].mxu0
    %1144 = vdwg.mxu0
    %v1149 = vrot.slane %v1127, 1
    %v1150 = vrot.slane %v1132, 1
    %v1151 = vsel %vm102, %v1149, %v1150
    %v1152 = vrot.slane %v1137, 1
    %v1153 = vrot.slane %v1142, 1
    %v1154 = vsel %vm102, %v1152, %v1153
    %v1161 = vsel %vm102, 0.0, %v1149
    %v1162 = vsel %vm102, 0.0, %v1152
    %v1163 = vsel %vm102, %v1150, 0.0
    %v1164 = vsel %vm102, %v1153, 0.0
    %v1169 = vrot.slane %v1161, 1
    %v1170 = vrot.slane %v1151, 1
    %v1171 = vsel %vm102, %v1169, %v1170
    %v1172 = vrot.slane %v1163, 1
    %v1173 = vsel %vm102, %v1170, %v1172
    %v1174 = vrot.slane %v1162, 1
    %v1175 = vrot.slane %v1154, 1
    %v1176 = vsel %vm102, %v1174, %v1175
    %v1177 = vrot.slane %v1164, 1
    %v1178 = vsel %vm102, %v1175, %v1177
    %v1183 = vrot.slane %v1161, 2
    %v1184 = vrot.slane %v1151, 2
    %v1185 = vsel %vm309, %v1183, %v1184
    %v1186 = vrot.slane %v1163, 2
    %v1187 = vsel %vm309, %v1184, %v1186
    %v1188 = vrot.slane %v1162, 2
    %v1189 = vrot.slane %v1154, 2
    %v1190 = vsel %vm309, %v1188, %v1189
    %v1191 = vrot.slane %v1164, 2
    %v1192 = vsel %vm309, %v1189, %v1191
    %v1197 = vrot.slane %v1161, 3
    %v1198 = vrot.slane %v1151, 3
    %v1199 = vsel %vm422, %v1197, %v1198
    %v1200 = vrot.slane %v1163, 3
    %v1201 = vsel %vm422, %v1198, %v1200
    %v1202 = vrot.slane %v1162, 3
    %v1203 = vrot.slane %v1154, 3
    %v1204 = vsel %vm422, %v1202, %v1203
    %v1205 = vrot.slane %v1164, 3
    %v1206 = vsel %vm422, %v1203, %v1205
    %v1211 = vrot.slane %v1161, 4
    %v1212 = vrot.slane %v1151, 4
    %v1213 = vsel %vm124, %v1211, %v1212
    %v1214 = vrot.slane %v1163, 4
    %v1215 = vsel %vm124, %v1212, %v1214
    %v1216 = vrot.slane %v1162, 4
    %v1217 = vrot.slane %v1154, 4
    %v1218 = vsel %vm124, %v1216, %v1217
    %v1219 = vrot.slane %v1164, 4
    %v1220 = vsel %vm124, %v1217, %v1219
    %v1225 = vrot.slane %v1161, 5
    %v1226 = vrot.slane %v1151, 5
    %v1227 = vsel %vm550, %v1225, %v1226
    %v1228 = vrot.slane %v1163, 5
    %v1229 = vsel %vm550, %v1226, %v1228
    %v1230 = vrot.slane %v1162, 5
    %v1231 = vrot.slane %v1154, 5
    %v1232 = vsel %vm550, %v1230, %v1231
    %v1233 = vrot.slane %v1164, 5
    %v1234 = vsel %vm550, %v1231, %v1233
    %v1239 = vrot.slane %v1161, 6
    %v1240 = vrot.slane %v1151, 6
    %v1241 = vsel %vm641, %v1239, %v1240
    %v1242 = vrot.slane %v1163, 6
    %v1243 = vsel %vm641, %v1240, %v1242
    %v1244 = vrot.slane %v1162, 6
    %v1245 = vrot.slane %v1154, 6
    %v1246 = vsel %vm641, %v1244, %v1245
    %v1247 = vrot.slane %v1164, 6
    %v1248 = vsel %vm641, %v1245, %v1247
    %v1253 = vrot.slane %v1161, 7
    %v1254 = vrot.slane %v1151, 7
    %v1255 = vsel %vm82, %v1253, %v1254
    %v1256 = vrot.slane %v1163, 7
    %v1257 = vsel %vm82, %v1254, %v1256
    %v1258 = vrot.slane %v1162, 7
    %v1259 = vrot.slane %v1154, 7
    %v1260 = vsel %vm82, %v1258, %v1259
    %v1261 = vrot.slane %v1164, 7
    %v1262 = vsel %vm82, %v1259, %v1261
    %v1268 = vrot.slane 0.0, 1
    %v1269 = vsel %vm102, %v1172, %v1268
    %v1270 = vsel %vm102, %v1177, %v1268
    %v1273 = vrot.slane 0.0, 2
    %v1274 = vsel %vm309, %v1186, %v1273
    %v1275 = vsel %vm309, %v1191, %v1273
    %v1278 = vrot.slane 0.0, 3
    %v1279 = vsel %vm422, %v1200, %v1278
    %v1280 = vsel %vm422, %v1205, %v1278
    %v1283 = vrot.slane 0.0, 4
    %v1284 = vsel %vm124, %v1214, %v1283
    %v1285 = vsel %vm124, %v1219, %v1283
    %v1288 = vrot.slane 0.0, 5
    %v1289 = vsel %vm550, %v1228, %v1288
    %v1290 = vsel %vm550, %v1233, %v1288
    %v1293 = vrot.slane 0.0, 6
    %v1294 = vsel %vm641, %v1242, %v1293
    %v1295 = vsel %vm641, %v1247, %v1293
    %v1298 = vrot.slane 0.0, 7
    %v1299 = vsel %vm82, %v1256, %v1298
    %v1300 = vsel %vm82, %v1261, %v1298
    %v1303 = vld [vmem:[#allocation5] sm:$0xff]
    %v1304 = vld [vmem:[#allocation5 + $0x8] sm:$0xff]
    %v1305 = vld [vmem:[#allocation5 + $0x10] sm:$0xff]
    %v1306 = vld [vmem:[#allocation5 + $0x18] sm:$0xff]
    %v1307 = vld [vmem:[#allocation5 + $0x20] sm:$0xff]
    %v1308 = vld [vmem:[#allocation5 + $0x28] sm:$0xff]
    %v1309 = vld [vmem:[#allocation5 + $0x30] sm:$0xff]
    %v1310 = vld [vmem:[#allocation5 + $0x38] sm:$0xff]
    %v1311 = vld [vmem:[#allocation5 + $0x40] sm:$0xff]
    %v1312 = vld [vmem:[#allocation5 + $0x48] sm:$0xff]
    %v1313 = vld [vmem:[#allocation5 + $0x50] sm:$0xff]
    %v1314 = vld [vmem:[#allocation5 + $0x58] sm:$0xff]
    %v1315 = vld [vmem:[#allocation5 + $0x60] sm:$0xff]
    %v1316 = vld [vmem:[#allocation5 + $0x68] sm:$0xff]
    %v1317 = vld [vmem:[#allocation5 + $0x70] sm:$0xff]
    %v1318 = vld [vmem:[#allocation5 + $0x78] sm:$0xff]
    %v1319 = vld [vmem:[#allocation5 + $0x80] sm:$0xff]
    %v1320 = vld [vmem:[#allocation5 + $0x88] sm:$0xff]
    %v1321 = vld [vmem:[#allocation5 + $0x90] sm:$0xff]
    %v1322 = vld [vmem:[#allocation5 + $0x98] sm:$0xff]
    %v1323 = vld [vmem:[#allocation5 + $0xa0] sm:$0xff]
    %v1324 = vld [vmem:[#allocation5 + $0xa8] sm:$0xff]
    %v1325 = vld [vmem:[#allocation5 + $0xb0] sm:$0xff]
    %v1326 = vld [vmem:[#allocation5 + $0xb8] sm:$0xff]
    %v1327 = vld [vmem:[#allocation5 + $0xc0] sm:$0xff]
    %v1328 = vld [vmem:[#allocation5 + $0xc8] sm:$0xff]
    %v1329 = vld [vmem:[#allocation5 + $0xd0] sm:$0xff]
    %v1330 = vld [vmem:[#allocation5 + $0xd8] sm:$0xff]
    %v1331 = vld [vmem:[#allocation5 + $0xe0] sm:$0xff]
    %v1332 = vld [vmem:[#allocation5 + $0xe8] sm:$0xff]
    %v1333 = vld [vmem:[#allocation5 + $0xf0] sm:$0xff]
    %v1334 = vld [vmem:[#allocation5 + $0xf8] sm:$0xff]
    %v1335 = vld [vmem:[#allocation5 + $0x100] sm:$0xff]
    %v1336 = vld [vmem:[#allocation5 + $0x108] sm:$0xff]
    %v1337 = vld [vmem:[#allocation5 + $0x110] sm:$0xff]
    %v1338 = vld [vmem:[#allocation5 + $0x118] sm:$0xff]
    %v1339 = vld [vmem:[#allocation5 + $0x120] sm:$0xff]
    %v1340 = vld [vmem:[#allocation5 + $0x128] sm:$0xff]
    %v1341 = vld [vmem:[#allocation5 + $0x130] sm:$0xff]
    %v1342 = vld [vmem:[#allocation5 + $0x138] sm:$0xff]
    %v1343 = vld [vmem:[#allocation5 + $0x140] sm:$0xff]
    %v1344 = vld [vmem:[#allocation5 + $0x148] sm:$0xff]
    %v1345 = vld [vmem:[#allocation5 + $0x150] sm:$0xff]
    %v1346 = vld [vmem:[#allocation5 + $0x158] sm:$0xff]
    %v1347 = vld [vmem:[#allocation5 + $0x160] sm:$0xff]
    %v1348 = vld [vmem:[#allocation5 + $0x168] sm:$0xff]
    %v1349 = vld [vmem:[#allocation5 + $0x170] sm:$0xff]
    %v1350 = vld [vmem:[#allocation5 + $0x178] sm:$0xff]
    %v1351 = vld [vmem:[#allocation5 + $0x180] sm:$0xff]
    %v1352 = vld [vmem:[#allocation5 + $0x188] sm:$0xff]
    %v1353 = vld [vmem:[#allocation5 + $0x190] sm:$0xff]
    %v1354 = vld [vmem:[#allocation5 + $0x198] sm:$0xff]
    %v1355 = vld [vmem:[#allocation5 + $0x1a0] sm:$0xff]
    %v1356 = vld [vmem:[#allocation5 + $0x1a8] sm:$0xff]
    %v1357 = vld [vmem:[#allocation5 + $0x1b0] sm:$0xff]
    %v1358 = vld [vmem:[#allocation5 + $0x1b8] sm:$0xff]
    %v1359 = vld [vmem:[#allocation5 + $0x1c0] sm:$0xff]
    %v1360 = vld [vmem:[#allocation5 + $0x1c8] sm:$0xff]
    %v1361 = vld [vmem:[#allocation5 + $0x1d0] sm:$0xff]
    %v1362 = vld [vmem:[#allocation5 + $0x1d8] sm:$0xff]
    %v1363 = vld [vmem:[#allocation5 + $0x1e0] sm:$0xff]
    %v1364 = vld [vmem:[#allocation5 + $0x1e8] sm:$0xff]
    %v1365 = vld [vmem:[#allocation5 + $0x1f0] sm:$0xff]
    %v1366 = vld [vmem:[#allocation5 + $0x1f8] sm:$0xff]
    %v1367 = vld [vmem:[#allocation5 + $0x200] sm:$0xff]
    %v1368 = vld [vmem:[#allocation5 + $0x208] sm:$0xff]
    %v1369 = vld [vmem:[#allocation5 + $0x210] sm:$0xff]
    %v1370 = vld [vmem:[#allocation5 + $0x218] sm:$0xff]
    %v1371 = vld [vmem:[#allocation5 + $0x220] sm:$0xff]
    %v1372 = vld [vmem:[#allocation5 + $0x228] sm:$0xff]
    %v1373 = vld [vmem:[#allocation5 + $0x230] sm:$0xff]
    %v1374 = vld [vmem:[#allocation5 + $0x238] sm:$0xff]
    %v1375 = vld [vmem:[#allocation5 + $0x240] sm:$0xff]
    %v1376 = vld [vmem:[#allocation5 + $0x248] sm:$0xff]
    %v1377 = vld [vmem:[#allocation5 + $0x250] sm:$0xff]
    %v1378 = vld [vmem:[#allocation5 + $0x258] sm:$0xff]
    %v1379 = vld [vmem:[#allocation5 + $0x260] sm:$0xff]
    %v1380 = vld [vmem:[#allocation5 + $0x268] sm:$0xff]
    %v1381 = vld [vmem:[#allocation5 + $0x270] sm:$0xff]
    %v1382 = vld [vmem:[#allocation5 + $0x278] sm:$0xff]
    %v1383 = vld [vmem:[#allocation5 + $0x280] sm:$0xff]
    %v1384 = vld [vmem:[#allocation5 + $0x288] sm:$0xff]
    %v1385 = vld [vmem:[#allocation5 + $0x290] sm:$0xff]
    %v1386 = vld [vmem:[#allocation5 + $0x298] sm:$0xff]
    %v1387 = vld [vmem:[#allocation5 + $0x2a0] sm:$0xff]
    %v1388 = vld [vmem:[#allocation5 + $0x2a8] sm:$0xff]
    %v1389 = vld [vmem:[#allocation5 + $0x2b0] sm:$0xff]
    %v1390 = vld [vmem:[#allocation5 + $0x2b8] sm:$0xff]
    %v1391 = vld [vmem:[#allocation5 + $0x2c0] sm:$0xff]
    %v1392 = vld [vmem:[#allocation5 + $0x2c8] sm:$0xff]
    %v1393 = vld [vmem:[#allocation5 + $0x2d0] sm:$0xff]
    %v1394 = vld [vmem:[#allocation5 + $0x2d8] sm:$0xff]
    %v1395 = vld [vmem:[#allocation5 + $0x2e0] sm:$0xff]
    %v1396 = vld [vmem:[#allocation5 + $0x2e8] sm:$0xff]
    %v1397 = vld [vmem:[#allocation5 + $0x2f0] sm:$0xff]
    %v1398 = vld [vmem:[#allocation5 + $0x2f8] sm:$0xff]
    %v1399 = vld [vmem:[#allocation5 + $0x300] sm:$0xff]
    %v1400 = vld [vmem:[#allocation5 + $0x308] sm:$0xff]
    %v1401 = vld [vmem:[#allocation5 + $0x310] sm:$0xff]
    %v1402 = vld [vmem:[#allocation5 + $0x318] sm:$0xff]
    %v1403 = vld [vmem:[#allocation5 + $0x320] sm:$0xff]
    %v1404 = vld [vmem:[#allocation5 + $0x328] sm:$0xff]
    %v1405 = vld [vmem:[#allocation5 + $0x330] sm:$0xff]
    %v1406 = vld [vmem:[#allocation5 + $0x338] sm:$0xff]
    %v1407 = vld [vmem:[#allocation5 + $0x340] sm:$0xff]
    %v1408 = vld [vmem:[#allocation5 + $0x348] sm:$0xff]
    %v1409 = vld [vmem:[#allocation5 + $0x350] sm:$0xff]
    %v1410 = vld [vmem:[#allocation5 + $0x358] sm:$0xff]
    %v1411 = vld [vmem:[#allocation5 + $0x360] sm:$0xff]
    %v1412 = vld [vmem:[#allocation5 + $0x368] sm:$0xff]
    %v1413 = vld [vmem:[#allocation5 + $0x370] sm:$0xff]
    %v1414 = vld [vmem:[#allocation5 + $0x378] sm:$0xff]
    %v1415 = vld [vmem:[#allocation5 + $0x380] sm:$0xff]
    %v1416 = vld [vmem:[#allocation5 + $0x388] sm:$0xff]
    %v1417 = vld [vmem:[#allocation5 + $0x390] sm:$0xff]
    %v1418 = vld [vmem:[#allocation5 + $0x398] sm:$0xff]
    %v1419 = vld [vmem:[#allocation5 + $0x3a0] sm:$0xff]
    %v1420 = vld [vmem:[#allocation5 + $0x3a8] sm:$0xff]
    %v1421 = vld [vmem:[#allocation5 + $0x3b0] sm:$0xff]
    %v1422 = vld [vmem:[#allocation5 + $0x3b8] sm:$0xff]
    %v1423 = vld [vmem:[#allocation5 + $0x3c0] sm:$0xff]
    %v1424 = vld [vmem:[#allocation5 + $0x3c8] sm:$0xff]
    %v1425 = vld [vmem:[#allocation5 + $0x3d0] sm:$0xff]
    %v1426 = vld [vmem:[#allocation5 + $0x3d8] sm:$0xff]
    %v1427 = vld [vmem:[#allocation5 + $0x3e0] sm:$0xff]
    %v1428 = vld [vmem:[#allocation5 + $0x3e8] sm:$0xff]
    %v1429 = vld [vmem:[#allocation5 + $0x3f0] sm:$0xff]
    %v1430 = vld [vmem:[#allocation5 + $0x3f8] sm:$0xff]
    %v1431 = vld [vmem:[#allocation5 + $0x400] sm:$0xff]
    %v1432 = vld [vmem:[#allocation5 + $0x408] sm:$0xff]
    %v1433 = vld [vmem:[#allocation5 + $0x410] sm:$0xff]
    %v1434 = vld [vmem:[#allocation5 + $0x418] sm:$0xff]
    %v1435 = vld [vmem:[#allocation5 + $0x420] sm:$0xff]
    %v1436 = vld [vmem:[#allocation5 + $0x428] sm:$0xff]
    %v1437 = vld [vmem:[#allocation5 + $0x430] sm:$0xff]
    %v1438 = vld [vmem:[#allocation5 + $0x438] sm:$0xff]
    %v1439 = vld [vmem:[#allocation5 + $0x440] sm:$0xff]
    %v1440 = vld [vmem:[#allocation5 + $0x448] sm:$0xff]
    %v1441 = vld [vmem:[#allocation5 + $0x450] sm:$0xff]
    %v1442 = vld [vmem:[#allocation5 + $0x458] sm:$0xff]
    %v1443 = vld [vmem:[#allocation5 + $0x460] sm:$0xff]
    %v1444 = vld [vmem:[#allocation5 + $0x468] sm:$0xff]
    %v1445 = vld [vmem:[#allocation5 + $0x470] sm:$0xff]
    %v1446 = vld [vmem:[#allocation5 + $0x478] sm:$0xff]
    %v1447 = vld [vmem:[#allocation5 + $0x480] sm:$0xff]
    %v1448 = vld [vmem:[#allocation5 + $0x488] sm:$0xff]
    %v1449 = vld [vmem:[#allocation5 + $0x490] sm:$0xff]
    %v1450 = vld [vmem:[#allocation5 + $0x498] sm:$0xff]
    %v1451 = vld [vmem:[#allocation5 + $0x4a0] sm:$0xff]
    %v1452 = vld [vmem:[#allocation5 + $0x4a8] sm:$0xff]
    %v1453 = vld [vmem:[#allocation5 + $0x4b0] sm:$0xff]
    %v1454 = vld [vmem:[#allocation5 + $0x4b8] sm:$0xff]
    %v1455 = vld [vmem:[#allocation5 + $0x4c0] sm:$0xff]
    %v1456 = vld [vmem:[#allocation5 + $0x4c8] sm:$0xff]
    %v1457 = vld [vmem:[#allocation5 + $0x4d0] sm:$0xff]
    %v1458 = vld [vmem:[#allocation5 + $0x4d8] sm:$0xff]
    %v1459 = vld [vmem:[#allocation5 + $0x4e0] sm:$0xff]
    %v1460 = vld [vmem:[#allocation5 + $0x4e8] sm:$0xff]
    %v1461 = vld [vmem:[#allocation5 + $0x4f0] sm:$0xff]
    %v1462 = vld [vmem:[#allocation5 + $0x4f8] sm:$0xff]
    %v1463 = vld [vmem:[#allocation5 + $0x500] sm:$0xff]
    %v1464 = vld [vmem:[#allocation5 + $0x508] sm:$0xff]
    %v1465 = vld [vmem:[#allocation5 + $0x510] sm:$0xff]
    %v1466 = vld [vmem:[#allocation5 + $0x518] sm:$0xff]
    %v1467 = vld [vmem:[#allocation5 + $0x520] sm:$0xff]
    %v1468 = vld [vmem:[#allocation5 + $0x528] sm:$0xff]
    %v1469 = vld [vmem:[#allocation5 + $0x530] sm:$0xff]
    %v1470 = vld [vmem:[#allocation5 + $0x538] sm:$0xff]
    %v1471 = vld [vmem:[#allocation5 + $0x540] sm:$0xff]
    %v1472 = vld [vmem:[#allocation5 + $0x548] sm:$0xff]
    %v1473 = vld [vmem:[#allocation5 + $0x550] sm:$0xff]
    %v1474 = vld [vmem:[#allocation5 + $0x558] sm:$0xff]
    %v1475 = vld [vmem:[#allocation5 + $0x560] sm:$0xff]
    %v1476 = vld [vmem:[#allocation5 + $0x568] sm:$0xff]
    %v1477 = vld [vmem:[#allocation5 + $0x570] sm:$0xff]
    %v1478 = vld [vmem:[#allocation5 + $0x578] sm:$0xff]
    %v1479 = vld [vmem:[#allocation5 + $0x580] sm:$0xff]
    %v1480 = vld [vmem:[#allocation5 + $0x588] sm:$0xff]
    %v1481 = vld [vmem:[#allocation5 + $0x590] sm:$0xff]
    %v1482 = vld [vmem:[#allocation5 + $0x598] sm:$0xff]
    %v1483 = vld [vmem:[#allocation5 + $0x5a0] sm:$0xff]
    %v1484 = vld [vmem:[#allocation5 + $0x5a8] sm:$0xff]
    %v1485 = vld [vmem:[#allocation5 + $0x5b0] sm:$0xff]
    %v1486 = vld [vmem:[#allocation5 + $0x5b8] sm:$0xff]
    %v1487 = vld [vmem:[#allocation5 + $0x5c0] sm:$0xff]
    %v1488 = vld [vmem:[#allocation5 + $0x5c8] sm:$0xff]
    %v1489 = vld [vmem:[#allocation5 + $0x5d0] sm:$0xff]
    %v1490 = vld [vmem:[#allocation5 + $0x5d8] sm:$0xff]
    %v1491 = vld [vmem:[#allocation5 + $0x5e0] sm:$0xff]
    %v1492 = vld [vmem:[#allocation5 + $0x5e8] sm:$0xff]
    %v1493 = vld [vmem:[#allocation5 + $0x5f0] sm:$0xff]
    %v1494 = vld [vmem:[#allocation5 + $0x5f8] sm:$0xff]
    %v1495 = vld [vmem:[#allocation5 + $0x600] sm:$0xff]
    %v1496 = vld [vmem:[#allocation5 + $0x608] sm:$0xff]
    %v1497 = vld [vmem:[#allocation5 + $0x610] sm:$0xff]
    %v1498 = vld [vmem:[#allocation5 + $0x618] sm:$0xff]
    %v1499 = vld [vmem:[#allocation5 + $0x620] sm:$0xff]
    %v1500 = vld [vmem:[#allocation5 + $0x628] sm:$0xff]
    %v1501 = vld [vmem:[#allocation5 + $0x630] sm:$0xff]
    %v1502 = vld [vmem:[#allocation5 + $0x638] sm:$0xff]
    %v1503 = vld [vmem:[#allocation5 + $0x640] sm:$0xff]
    %v1504 = vld [vmem:[#allocation5 + $0x648] sm:$0xff]
    %v1505 = vld [vmem:[#allocation5 + $0x650] sm:$0xff]
    %v1506 = vld [vmem:[#allocation5 + $0x658] sm:$0xff]
    %v1507 = vld [vmem:[#allocation5 + $0x660] sm:$0xff]
    %v1508 = vld [vmem:[#allocation5 + $0x668] sm:$0xff]
    %v1509 = vld [vmem:[#allocation5 + $0x670] sm:$0xff]
    %v1510 = vld [vmem:[#allocation5 + $0x678] sm:$0xff]
    %v1511 = vld [vmem:[#allocation5 + $0x680] sm:$0xff]
    %v1512 = vld [vmem:[#allocation5 + $0x688] sm:$0xff]
    %v1513 = vld [vmem:[#allocation5 + $0x690] sm:$0xff]
    %v1514 = vld [vmem:[#allocation5 + $0x698] sm:$0xff]
    %v1515 = vld [vmem:[#allocation5 + $0x6a0] sm:$0xff]
    %v1516 = vld [vmem:[#allocation5 + $0x6a8] sm:$0xff]
    %v1517 = vld [vmem:[#allocation5 + $0x6b0] sm:$0xff]
    %v1518 = vld [vmem:[#allocation5 + $0x6b8] sm:$0xff]
    %v1519 = vld [vmem:[#allocation5 + $0x6c0] sm:$0xff]
    %v1520 = vld [vmem:[#allocation5 + $0x6c8] sm:$0xff]
    %v1521 = vld [vmem:[#allocation5 + $0x6d0] sm:$0xff]
    %v1522 = vld [vmem:[#allocation5 + $0x6d8] sm:$0xff]
    %v1523 = vld [vmem:[#allocation5 + $0x6e0] sm:$0xff]
    %v1524 = vld [vmem:[#allocation5 + $0x6e8] sm:$0xff]
    %v1525 = vld [vmem:[#allocation5 + $0x6f0] sm:$0xff]
    %v1526 = vld [vmem:[#allocation5 + $0x6f8] sm:$0xff]
    %v1527 = vld [vmem:[#allocation5 + $0x700] sm:$0xff]
    %v1528 = vld [vmem:[#allocation5 + $0x708] sm:$0xff]
    %v1529 = vld [vmem:[#allocation5 + $0x710] sm:$0xff]
    %v1530 = vld [vmem:[#allocation5 + $0x718] sm:$0xff]
    %v1531 = vld [vmem:[#allocation5 + $0x720] sm:$0xff]
    %v1532 = vld [vmem:[#allocation5 + $0x728] sm:$0xff]
    %v1533 = vld [vmem:[#allocation5 + $0x730] sm:$0xff]
    %v1534 = vld [vmem:[#allocation5 + $0x738] sm:$0xff]
    %v1535 = vld [vmem:[#allocation5 + $0x740] sm:$0xff]
    %v1536 = vld [vmem:[#allocation5 + $0x748] sm:$0xff]
    %v1537 = vld [vmem:[#allocation5 + $0x750] sm:$0xff]
    %v1538 = vld [vmem:[#allocation5 + $0x758] sm:$0xff]
    %v1539 = vld [vmem:[#allocation5 + $0x760] sm:$0xff]
    %v1540 = vld [vmem:[#allocation5 + $0x768] sm:$0xff]
    %v1541 = vld [vmem:[#allocation5 + $0x770] sm:$0xff]
    %v1542 = vld [vmem:[#allocation5 + $0x778] sm:$0xff]
    %v1543 = vld [vmem:[#allocation5 + $0x780] sm:$0xff]
    %v1544 = vld [vmem:[#allocation5 + $0x788] sm:$0xff]
    %v1545 = vld [vmem:[#allocation5 + $0x790] sm:$0xff]
    %v1546 = vld [vmem:[#allocation5 + $0x798] sm:$0xff]
    %v1547 = vld [vmem:[#allocation5 + $0x7a0] sm:$0xff]
    %v1548 = vld [vmem:[#allocation5 + $0x7a8] sm:$0xff]
    %v1549 = vld [vmem:[#allocation5 + $0x7b0] sm:$0xff]
    %v1550 = vld [vmem:[#allocation5 + $0x7b8] sm:$0xff]
    %v1551 = vld [vmem:[#allocation5 + $0x7c0] sm:$0xff]
    %v1552 = vld [vmem:[#allocation5 + $0x7c8] sm:$0xff]
    %v1553 = vld [vmem:[#allocation5 + $0x7d0] sm:$0xff]
    %v1554 = vld [vmem:[#allocation5 + $0x7d8] sm:$0xff]
    %v1555 = vld [vmem:[#allocation5 + $0x7e0] sm:$0xff]
    %v1556 = vld [vmem:[#allocation5 + $0x7e8] sm:$0xff]
    %v1557 = vld [vmem:[#allocation5 + $0x7f0] sm:$0xff]
    %v1558 = vld [vmem:[#allocation5 + $0x7f8] sm:$0xff]
    %v1559 = vld [vmem:[%s6] sm:$0x1]
    %v1561 = vlaneseq
    %v1562 = vshrl.u32 %v1561, 7
    %v1563 = vsub.s32 0, %v1562
    %v1564 = vrot.slane %v1559, %v1563
    %1566 = vmatprep.subr.mxu0 0.0
    %1567 = vmatpush1.msra.mxu0 %v1303
    %1568 = vmatprep.subr.mxu0 0.0
    %1569 = vmatpush1.msra.mxu0 %v1304
    %1570 = vmatprep.subr.mxu0 0.0
    %1571 = vmatpush1.msra.mxu0 %v1305
    %1572 = vmatprep.subr.mxu0 0.0
    %1573 = vmatpush1.msra.mxu0 %v1306
    %1574 = vmatprep.subr.mxu0 0.0
    %1575 = vmatpush1.msra.mxu0 %v1307
    %1576 = vmatprep.subr.mxu0 0.0
    %1577 = vmatpush1.msra.mxu0 %v1308
    %1578 = vmatprep.subr.mxu0 0.0
    %1579 = vmatpush1.msra.mxu0 %v1309
    %1580 = vmatprep.subr.mxu0 0.0
    %1581 = vmatpush1.msra.mxu0 %v1310
    %1582 = vmatprep.subr.mxu0 0.0
    %1583 = vmatpush1.msra.mxu0 %v1311
    %1584 = vmatprep.subr.mxu0 0.0
    %1585 = vmatpush1.msra.mxu0 %v1312
    %1586 = vmatprep.subr.mxu0 0.0
    %1587 = vmatpush1.msra.mxu0 %v1313
    %1588 = vmatprep.subr.mxu0 0.0
    %1589 = vmatpush1.msra.mxu0 %v1314
    %1590 = vmatprep.subr.mxu0 0.0
    %1591 = vmatpush1.msra.mxu0 %v1315
    %1592 = vmatprep.subr.mxu0 0.0
    %1593 = vmatpush1.msra.mxu0 %v1316
    %1594 = vmatprep.subr.mxu0 0.0
    %1595 = vmatpush1.msra.mxu0 %v1317
    %1596 = vmatprep.subr.mxu0 0.0
    %1597 = vmatpush1.msra.mxu0 %v1318
    %1598 = vmatprep.subr.mxu0 0.0
    %1599 = vmatpush1.msra.mxu0 %v1319
    %1600 = vmatprep.subr.mxu0 0.0
    %1601 = vmatpush1.msra.mxu0 %v1320
    %1602 = vmatprep.subr.mxu0 0.0
    %1603 = vmatpush1.msra.mxu0 %v1321
    %1604 = vmatprep.subr.mxu0 0.0
    %1605 = vmatpush1.msra.mxu0 %v1322
    %1606 = vmatprep.subr.mxu0 0.0
    %1607 = vmatpush1.msra.mxu0 %v1323
    %1608 = vmatprep.subr.mxu0 0.0
    %1609 = vmatpush1.msra.mxu0 %v1324
    %1610 = vmatprep.subr.mxu0 0.0
    %1611 = vmatpush1.msra.mxu0 %v1325
    %1612 = vmatprep.subr.mxu0 0.0
    %1613 = vmatpush1.msra.mxu0 %v1326
    %1614 = vmatprep.subr.mxu0 0.0
    %1615 = vmatpush1.msra.mxu0 %v1327
    %1616 = vmatprep.subr.mxu0 0.0
    %1617 = vmatpush1.msra.mxu0 %v1328
    %1618 = vmatprep.subr.mxu0 0.0
    %1619 = vmatpush1.msra.mxu0 %v1329
    %1620 = vmatprep.subr.mxu0 0.0
    %1621 = vmatpush1.msra.mxu0 %v1330
    %1622 = vmatprep.subr.mxu0 0.0
    %1623 = vmatpush1.msra.mxu0 %v1331
    %1624 = vmatprep.subr.mxu0 0.0
    %1625 = vmatpush1.msra.mxu0 %v1332
    %1626 = vmatprep.subr.mxu0 0.0
    %1627 = vmatpush1.msra.mxu0 %v1333
    %1628 = vmatprep.subr.mxu0 0.0
    %1629 = vmatpush1.msra.mxu0 %v1334
    %1630 = vmatprep.mubr.f32.mxu0 %v1171
    %1631 = vmatmul.mubr.f32.gmra.mrb[0].mxu0 %v1161
    %v1632 = vpop.f32.mrb[0].mxu0
    %v1633 = vpop.f32.mrb[0].mxu0
    %1634 = vmatprep.mubr.f32.mxu0 %v1173
    %1635 = vmatmul.mubr.f32.gmra.mrb[0].mxu0 %v1151
    %v1636 = vpop.f32.mrb[0].mxu0
    %v1637 = vadd.f32 %v1564, %v1636
    %v1638 = vpop.f32.mrb[0].mxu0
    %1639 = vmatprep.mubr.f32.mxu0 %v1176
    %1640 = vmatmul.mubr.f32.gmra.mrb[0].mxu0 %v1162
    %v1641 = vpop.f32.mrb[0].mxu0
    %v1642 = vpop.f32.mrb[0].mxu0
    %1643 = vmatprep.mubr.f32.mxu0 %v1178
    %1644 = vmatmul.mubr.f32.gmra.mrb[0].mxu0 %v1154
    %v1645 = vpop.f32.mrb[0].mxu0
    %v1646 = vadd.f32 %v1564, %v1645
    %v1647 = vpop.f32.mrb[0].mxu0
    %1648 = vdwg.mxu0
    %1649 = vmatprep.subr.mxu0 0.0
    %1650 = vmatpush1.msra.mxu0 %v1335
    %1651 = vmatprep.subr.mxu0 0.0
    %1652 = vmatpush1.msra.mxu0 %v1336
    %1653 = vmatprep.subr.mxu0 0.0
    %1654 = vmatpush1.msra.mxu0 %v1337
    %1655 = vmatprep.subr.mxu0 0.0
    %1656 = vmatpush1.msra.mxu0 %v1338
    %1657 = vmatprep.subr.mxu0 0.0
    %1658 = vmatpush1.msra.mxu0 %v1339
    %1659 = vmatprep.subr.mxu0 0.0
    %1660 = vmatpush1.msra.mxu0 %v1340
    %1661 = vmatprep.subr.mxu0 0.0
    %1662 = vmatpush1.msra.mxu0 %v1341
    %1663 = vmatprep.subr.mxu0 0.0
    %1664 = vmatpush1.msra.mxu0 %v1342
    %1665 = vmatprep.subr.mxu0 0.0
    %1666 = vmatpush1.msra.mxu0 %v1343
    %1667 = vmatprep.subr.mxu0 0.0
    %1668 = vmatpush1.msra.mxu0 %v1344
    %1669 = vmatprep.subr.mxu0 0.0
    %1670 = vmatpush1.msra.mxu0 %v1345
    %1671 = vmatprep.subr.mxu0 0.0
    %1672 = vmatpush1.msra.mxu0 %v1346
    %1673 = vmatprep.subr.mxu0 0.0
    %1674 = vmatpush1.msra.mxu0 %v1347
    %1675 = vmatprep.subr.mxu0 0.0
    %1676 = vmatpush1.msra.mxu0 %v1348
    %1677 = vmatprep.subr.mxu0 0.0
    %1678 = vmatpush1.msra.mxu0 %v1349
    %1679 = vmatprep.subr.mxu0 0.0
    %1680 = vmatpush1.msra.mxu0 %v1350
    %1681 = vmatprep.subr.mxu0 0.0
    %1682 = vmatpush1.msra.mxu0 %v1351
    %1683 = vmatprep.subr.mxu0 0.0
    %1684 = vmatpush1.msra.mxu0 %v1352
    %1685 = vmatprep.subr.mxu0 0.0
    %1686 = vmatpush1.msra.mxu0 %v1353
    %1687 = vmatprep.subr.mxu0 0.0
    %1688 = vmatpush1.msra.mxu0 %v1354
    %1689 = vmatprep.subr.mxu0 0.0
    %1690 = vmatpush1.msra.mxu0 %v1355
    %1691 = vmatprep.subr.mxu0 0.0
    %1692 = vmatpush1.msra.mxu0 %v1356
    %1693 = vmatprep.subr.mxu0 0.0
    %1694 = vmatpush1.msra.mxu0 %v1357
    %1695 = vmatprep.subr.mxu0 0.0
    %1696 = vmatpush1.msra.mxu0 %v1358
    %1697 = vmatprep.subr.mxu0 0.0
    %1698 = vmatpush1.msra.mxu0 %v1359
    %1699 = vmatprep.subr.mxu0 0.0
    %1700 = vmatpush1.msra.mxu0 %v1360
    %1701 = vmatprep.subr.mxu0 0.0
    %1702 = vmatpush1.msra.mxu0 %v1361
    %1703 = vmatprep.subr.mxu0 0.0
    %1704 = vmatpush1.msra.mxu0 %v1362
    %1705 = vmatprep.subr.mxu0 0.0
    %1706 = vmatpush1.msra.mxu0 %v1363
    %1707 = vmatprep.subr.mxu0 0.0
    %1708 = vmatpush1.msra.mxu0 %v1364
    %1709 = vmatprep.subr.mxu0 0.0
    %1710 = vmatpush1.msra.mxu0 %v1365
    %1711 = vmatprep.subr.mxu0 0.0
    %1712 = vmatpush1.msra.mxu0 %v1366
    %1713 = vmatprep.mubr.f32.mxu0 %v1199
    %1714 = vmatmul.mubr.f32.gmra.mrb[0].mxu0 %v1185
    %v1715 = vpop.f32.mrb[0].mxu0
    %v1716 = vpop.f32.mrb[0].mxu0
    %1717 = vmatprep.mubr.f32.mxu0 %v1201
    %1718 = vmatmul.mubr.f32.gmra.mrb[0].mxu0 %v1187
    %v1719 = vpop.f32.mrb[0].mxu0
    %v1720 = vadd.f32 %v1637, %v1719
    %v1721 = vpop.f32.mrb[0].mxu0
    %1722 = vmatprep.mubr.f32.mxu0 %v1204
    %1723 = vmatmul.mubr.f32.gmra.mrb[0].mxu0 %v1190
    %v1724 = vpop.f32.mrb[0].mxu0
    %v1725 = vpop.f32.mrb[0].mxu0
    %1726 = vmatprep.mubr.f32.mxu0 %v1206
    %1727 = vmatmul.mubr.f32.gmra.mrb[0].mxu0 %v1192
    %v1728 = vpop.f32.mrb[0].mxu0
    %v1729 = vadd.f32 %v1646, %v1728
    %v1730 = vpop.f32.mrb[0].mxu0
    %1731 = vdwg.mxu0
    %1732 = vmatprep.subr.mxu0 0.0
    %1733 = vmatpush1.msra.mxu0 %v1367
    %1734 = vmatprep.subr.mxu0 0.0
    %1735 = vmatpush1.msra.mxu0 %v1368
    %1736 = vmatprep.subr.mxu0 0.0
    %1737 = vmatpush1.msra.mxu0 %v1369
    %1738 = vmatprep.subr.mxu0 0.0
    %1739 = vmatpush1.msra.mxu0 %v1370
    %1740 = vmatprep.subr.mxu0 0.0
    %1741 = vmatpush1.msra.mxu0 %v1371
    %1742 = vmatprep.subr.mxu0 0.0
    %1743 = vmatpush1.msra.mxu0 %v1372
    %1744 = vmatprep.subr.mxu0 0.0
    %1745 = vmatpush1.msra.mxu0 %v1373
    %1746 = vmatprep.subr.mxu0 0.0
    %1747 = vmatpush1.msra.mxu0 %v1374
    %1748 = vmatprep.subr.mxu0 0.0
    %1749 = vmatpush1.msra.mxu0 %v1375
    %1750 = vmatprep.subr.mxu0 0.0
    %1751 = vmatpush1.msra.mxu0 %v1376
    %1752 = vmatprep.subr.mxu0 0.0
    %1753 = vmatpush1.msra.mxu0 %v1377
    %1754 = vmatprep.subr.mxu0 0.0
    %1755 = vmatpush1.msra.mxu0 %v1378
    %1756 = vmatprep.subr.mxu0 0.0
    %1757 = vmatpush1.msra.mxu0 %v1379
    %1758 = vmatprep.subr.mxu0 0.0
    %1759 = vmatpush1.msra.mxu0 %v1380
    %1760 = vmatprep.subr.mxu0 0.0
    %1761 = vmatpush1.msra.mxu0 %v1381
    %1762 = vmatprep.subr.mxu0 0.0
    %1763 = vmatpush1.msra.mxu0 %v1382
    %1764 = vmatprep.subr.mxu0 0.0
    %1765 = vmatpush1.msra.mxu0 %v1383
    %1766 = vmatprep.subr.mxu0 0.0
    %1767 = vmatpush1.msra.mxu0 %v1384
    %1768 = vmatprep.subr.mxu0 0.0
    %1769 = vmatpush1.msra.mxu0 %v1385
    %1770 = vmatprep.subr.mxu0 0.0
    %1771 = vmatpush1.msra.mxu0 %v1386
    %1772 = vmatprep.subr.mxu0 0.0
    %1773 = vmatpush1.msra.mxu0 %v1387
    %1774 = vmatprep.subr.mxu0 0.0
    %1775 = vmatpush1.msra.mxu0 %v1388
    %1776 = vmatprep.subr.mxu0 0.0
    %1777 = vmatpush1.msra.mxu0 %v1389
    %1778 = vmatprep.subr.mxu0 0.0
    %1779 = vmatpush1.msra.mxu0 %v1390
    %1780 = vmatprep.subr.mxu0 0.0
    %1781 = vmatpush1.msra.mxu0 %v1391
    %1782 = vmatprep.subr.mxu0 0.0
    %1783 = vmatpush1.msra.mxu0 %v1392
    %1784 = vmatprep.subr.mxu0 0.0
    %1785 = vmatpush1.msra.mxu0 %v1393
    %1786 = vmatprep.subr.mxu0 0.0
    %1787 = vmatpush1.msra.mxu0 %v1394
    %1788 = vmatprep.subr.mxu0 0.0
    %1789 = vmatpush1.msra.mxu0 %v1395
    %1790 = vmatprep.subr.mxu0 0.0
    %1791 = vmatpush1.msra.mxu0 %v1396
    %1792 = vmatprep.subr.mxu0 0.0
    %1793 = vmatpush1.msra.mxu0 %v1397
    %1794 = vmatprep.subr.mxu0 0.0
    %1795 = vmatpush1.msra.mxu0 %v1398
    %1796 = vmatprep.mubr.f32.mxu0 %v1227
    %1797 = vmatmul.mubr.f32.gmra.mrb[0].mxu0 %v1213
    %v1798 = vpop.f32.mrb[0].mxu0
    %v1799 = vpop.f32.mrb[0].mxu0
    %1800 = vmatprep.mubr.f32.mxu0 %v1229
    %1801 = vmatmul.mubr.f32.gmra.mrb[0].mxu0 %v1215
    %v1802 = vpop.f32.mrb[0].mxu0
    %v1803 = vadd.f32 %v1720, %v1802
    %v1804 = vpop.f32.mrb[0].mxu0
    %1805 = vmatprep.mubr.f32.mxu0 %v1232
    %1806 = vmatmul.mubr.f32.gmra.mrb[0].mxu0 %v1218
    %v1807 = vpop.f32.mrb[0].mxu0
    %v1808 = vpop.f32.mrb[0].mxu0
    %1809 = vmatprep.mubr.f32.mxu0 %v1234
    %1810 = vmatmul.mubr.f32.gmra.mrb[0].mxu0 %v1220
    %v1811 = vpop.f32.mrb[0].mxu0
    %v1812 = vadd.f32 %v1729, %v1811
    %v1813 = vpop.f32.mrb[0].mxu0
    %1814 = vdwg.mxu0
    %1815 = vmatprep.subr.mxu0 0.0
    %1816 = vmatpush1.msra.mxu0 %v1399
    %1817 = vmatprep.subr.mxu0 0.0
    %1818 = vmatpush1.msra.mxu0 %v1400
    %1819 = vmatprep.subr.mxu0 0.0
    %1820 = vmatpush1.msra.mxu0 %v1401
    %1821 = vmatprep.subr.mxu0 0.0
    %1822 = vmatpush1.msra.mxu0 %v1402
    %1823 = vmatprep.subr.mxu0 0.0
    %1824 = vmatpush1.msra.mxu0 %v1403
    %1825 = vmatprep.subr.mxu0 0.0
    %1826 = vmatpush1.msra.mxu0 %v1404
    %1827 = vmatprep.subr.mxu0 0.0
    %1828 = vmatpush1.msra.mxu0 %v1405
    %1829 = vmatprep.subr.mxu0 0.0
    %1830 = vmatpush1.msra.mxu0 %v1406
    %1831 = vmatprep.subr.mxu0 0.0
    %1832 = vmatpush1.msra.mxu0 %v1407
    %1833 = vmatprep.subr.mxu0 0.0
    %1834 = vmatpush1.msra.mxu0 %v1408
    %1835 = vmatprep.subr.mxu0 0.0
    %1836 = vmatpush1.msra.mxu0 %v1409
    %1837 = vmatprep.subr.mxu0 0.0
    %1838 = vmatpush1.msra.mxu0 %v1410
    %1839 = vmatprep.subr.mxu0 0.0
    %1840 = vmatpush1.msra.mxu0 %v1411
    %1841 = vmatprep.subr.mxu0 0.0
    %1842 = vmatpush1.msra.mxu0 %v1412
    %1843 = vmatprep.subr.mxu0 0.0
    %1844 = vmatpush1.msra.mxu0 %v1413
    %1845 = vmatprep.subr.mxu0 0.0
    %1846 = vmatpush1.msra.mxu0 %v1414
    %1847 = vmatprep.subr.mxu0 0.0
    %1848 = vmatpush1.msra.mxu0 %v1415
    %1849 = vmatprep.subr.mxu0 0.0
    %1850 = vmatpush1.msra.mxu0 %v1416
    %1851 = vmatprep.subr.mxu0 0.0
    %1852 = vmatpush1.msra.mxu0 %v1417
    %1853 = vmatprep.subr.mxu0 0.0
    %1854 = vmatpush1.msra.mxu0 %v1418
    %1855 = vmatprep.subr.mxu0 0.0
    %1856 = vmatpush1.msra.mxu0 %v1419
    %1857 = vmatprep.subr.mxu0 0.0
    %1858 = vmatpush1.msra.mxu0 %v1420
    %1859 = vmatprep.subr.mxu0 0.0
    %1860 = vmatpush1.msra.mxu0 %v1421
    %1861 = vmatprep.subr.mxu0 0.0
    %1862 = vmatpush1.msra.mxu0 %v1422
    %1863 = vmatprep.subr.mxu0 0.0
    %1864 = vmatpush1.msra.mxu0 %v1423
    %1865 = vmatprep.subr.mxu0 0.0
    %1866 = vmatpush1.msra.mxu0 %v1424
    %1867 = vmatprep.subr.mxu0 0.0
    %1868 = vmatpush1.msra.mxu0 %v1425
    %1869 = vmatprep.subr.mxu0 0.0
    %1870 = vmatpush1.msra.mxu0 %v1426
    %1871 = vmatprep.subr.mxu0 0.0
    %1872 = vmatpush1.msra.mxu0 %v1427
    %1873 = vmatprep.subr.mxu0 0.0
    %1874 = vmatpush1.msra.mxu0 %v1428
    %1875 = vmatprep.subr.mxu0 0.0
    %1876 = vmatpush1.msra.mxu0 %v1429
    %1877 = vmatprep.subr.mxu0 0.0
    %1878 = vmatpush1.msra.mxu0 %v1430
    %1879 = vmatprep.mubr.f32.mxu0 %v1255
    %1880 = vmatmul.mubr.f32.gmra.mrb[0].mxu0 %v1241
    %v1881 = vpop.f32.mrb[0].mxu0
    %v1882 = vpop.f32.mrb[0].mxu0
    %1883 = vmatprep.mubr.f32.mxu0 %v1257
    %1884 = vmatmul.mubr.f32.gmra.mrb[0].mxu0 %v1243
    %v1885 = vpop.f32.mrb[0].mxu0
    %v1886 = vadd.f32 %v1803, %v1885
    %v1887 = vpop.f32.mrb[0].mxu0
    %1888 = vmatprep.mubr.f32.mxu0 %v1260
    %1889 = vmatmul.mubr.f32.gmra.mrb[0].mxu0 %v1246
    %v1890 = vpop.f32.mrb[0].mxu0
    %v1891 = vpop.f32.mrb[0].mxu0
    %1892 = vmatprep.mubr.f32.mxu0 %v1262
    %1893 = vmatmul.mubr.f32.gmra.mrb[0].mxu0 %v1248
    %v1894 = vpop.f32.mrb[0].mxu0
    %v1895 = vadd.f32 %v1812, %v1894
    %v1896 = vpop.f32.mrb[0].mxu0
    %1897 = vdwg.mxu0
    %1898 = vmatprep.subr.mxu0 0.0
    %1899 = vmatpush1.msra.mxu0 %v1431
    %1900 = vmatprep.subr.mxu0 0.0
    %1901 = vmatpush1.msra.mxu0 %v1432
    %1902 = vmatprep.subr.mxu0 0.0
    %1903 = vmatpush1.msra.mxu0 %v1433
    %1904 = vmatprep.subr.mxu0 0.0
    %1905 = vmatpush1.msra.mxu0 %v1434
    %1906 = vmatprep.subr.mxu0 0.0
    %1907 = vmatpush1.msra.mxu0 %v1435
    %1908 = vmatprep.subr.mxu0 0.0
    %1909 = vmatpush1.msra.mxu0 %v1436
    %1910 = vmatprep.subr.mxu0 0.0
    %1911 = vmatpush1.msra.mxu0 %v1437
    %1912 = vmatprep.subr.mxu0 0.0
    %1913 = vmatpush1.msra.mxu0 %v1438
    %1914 = vmatprep.subr.mxu0 0.0
    %1915 = vmatpush1.msra.mxu0 %v1439
    %1916 = vmatprep.subr.mxu0 0.0
    %1917 = vmatpush1.msra.mxu0 %v1440
    %1918 = vmatprep.subr.mxu0 0.0
    %1919 = vmatpush1.msra.mxu0 %v1441
    %1920 = vmatprep.subr.mxu0 0.0
    %1921 = vmatpush1.msra.mxu0 %v1442
    %1922 = vmatprep.subr.mxu0 0.0
    %1923 = vmatpush1.msra.mxu0 %v1443
    %1924 = vmatprep.subr.mxu0 0.0
    %1925 = vmatpush1.msra.mxu0 %v1444
    %1926 = vmatprep.subr.mxu0 0.0
    %1927 = vmatpush1.msra.mxu0 %v1445
    %1928 = vmatprep.subr.mxu0 0.0
    %1929 = vmatpush1.msra.mxu0 %v1446
    %1930 = vmatprep.subr.mxu0 0.0
    %1931 = vmatpush1.msra.mxu0 %v1447
    %1932 = vmatprep.subr.mxu0 0.0
    %1933 = vmatpush1.msra.mxu0 %v1448
    %1934 = vmatprep.subr.mxu0 0.0
    %1935 = vmatpush1.msra.mxu0 %v1449
    %1936 = vmatprep.subr.mxu0 0.0
    %1937 = vmatpush1.msra.mxu0 %v1450
    %1938 = vmatprep.subr.mxu0 0.0
    %1939 = vmatpush1.msra.mxu0 %v1451
    %1940 = vmatprep.subr.mxu0 0.0
    %1941 = vmatpush1.msra.mxu0 %v1452
    %1942 = vmatprep.subr.mxu0 0.0
    %1943 = vmatpush1.msra.mxu0 %v1453
    %1944 = vmatprep.subr.mxu0 0.0
    %1945 = vmatpush1.msra.mxu0 %v1454
    %1946 = vmatprep.subr.mxu0 0.0
    %1947 = vmatpush1.msra.mxu0 %v1455
    %1948 = vmatprep.subr.mxu0 0.0
    %1949 = vmatpush1.msra.mxu0 %v1456
    %1950 = vmatprep.subr.mxu0 0.0
    %1951 = vmatpush1.msra.mxu0 %v1457
    %1952 = vmatprep.subr.mxu0 0.0
    %1953 = vmatpush1.msra.mxu0 %v1458
    %1954 = vmatprep.subr.mxu0 0.0
    %1955 = vmatpush1.msra.mxu0 %v1459
    %1956 = vmatprep.subr.mxu0 0.0
    %1957 = vmatpush1.msra.mxu0 %v1460
    %1958 = vmatprep.subr.mxu0 0.0
    %1959 = vmatpush1.msra.mxu0 %v1461
    %1960 = vmatprep.subr.mxu0 0.0
    %1961 = vmatpush1.msra.mxu0 %v1462
    %1962 = vmatprep.mubr.f32.mxu0 %v1173
    %1963 = vmatmul.mubr.f32.gmra.mrb[0].mxu0 %v1151
    %v1964 = vpop.f32.mrb[0].mxu0
    %v1965 = vpop.f32.mrb[0].mxu0
    %1966 = vmatprep.mubr.f32.mxu0 %v1269
    %1967 = vmatmul.mubr.f32.gmra.mrb[0].mxu0 %v1163
    %v1968 = vpop.f32.mrb[0].mxu0
    %v1969 = vadd.f32 %v1886, %v1968
    %v1970 = vpop.f32.mrb[0].mxu0
    %1971 = vmatprep.mubr.f32.mxu0 %v1178
    %1972 = vmatmul.mubr.f32.gmra.mrb[0].mxu0 %v1154
    %v1973 = vpop.f32.mrb[0].mxu0
    %v1974 = vpop.f32.mrb[0].mxu0
    %1975 = vmatprep.mubr.f32.mxu0 %v1270
    %1976 = vmatmul.mubr.f32.gmra.mrb[0].mxu0 %v1164
    %v1977 = vpop.f32.mrb[0].mxu0
    %v1978 = vadd.f32 %v1895, %v1977
    %v1979 = vpop.f32.mrb[0].mxu0
    %1980 = vdwg.mxu0
    %1981 = vmatprep.subr.mxu0 0.0
    %1982 = vmatpush1.msra.mxu0 %v1463
    %1983 = vmatprep.subr.mxu0 0.0
    %1984 = vmatpush1.msra.mxu0 %v1464
    %1985 = vmatprep.subr.mxu0 0.0
    %1986 = vmatpush1.msra.mxu0 %v1465
    %1987 = vmatprep.subr.mxu0 0.0
    %1988 = vmatpush1.msra.mxu0 %v1466
    %1989 = vmatprep.subr.mxu0 0.0
    %1990 = vmatpush1.msra.mxu0 %v1467
    %1991 = vmatprep.subr.mxu0 0.0
    %1992 = vmatpush1.msra.mxu0 %v1468
    %1993 = vmatprep.subr.mxu0 0.0
    %1994 = vmatpush1.msra.mxu0 %v1469
    %1995 = vmatprep.subr.mxu0 0.0
    %1996 = vmatpush1.msra.mxu0 %v1470
    %1997 = vmatprep.subr.mxu0 0.0
    %1998 = vmatpush1.msra.mxu0 %v1471
    %1999 = vmatprep.subr.mxu0 0.0
    %2000 = vmatpush1.msra.mxu0 %v1472
    %2001 = vmatprep.subr.mxu0 0.0
    %2002 = vmatpush1.msra.mxu0 %v1473
    %2003 = vmatprep.subr.mxu0 0.0
    %2004 = vmatpush1.msra.mxu0 %v1474
    %2005 = vmatprep.subr.mxu0 0.0
    %2006 = vmatpush1.msra.mxu0 %v1475
    %2007 = vmatprep.subr.mxu0 0.0
    %2008 = vmatpush1.msra.mxu0 %v1476
    %2009 = vmatprep.subr.mxu0 0.0
    %2010 = vmatpush1.msra.mxu0 %v1477
    %2011 = vmatprep.subr.mxu0 0.0
    %2012 = vmatpush1.msra.mxu0 %v1478
    %2013 = vmatprep.subr.mxu0 0.0
    %2014 = vmatpush1.msra.mxu0 %v1479
    %2015 = vmatprep.subr.mxu0 0.0
    %2016 = vmatpush1.msra.mxu0 %v1480
    %2017 = vmatprep.subr.mxu0 0.0
    %2018 = vmatpush1.msra.mxu0 %v1481
    %2019 = vmatprep.subr.mxu0 0.0
    %2020 = vmatpush1.msra.mxu0 %v1482
    %2021 = vmatprep.subr.mxu0 0.0
    %2022 = vmatpush1.msra.mxu0 %v1483
    %2023 = vmatprep.subr.mxu0 0.0
    %2024 = vmatpush1.msra.mxu0 %v1484
    %2025 = vmatprep.subr.mxu0 0.0
    %2026 = vmatpush1.msra.mxu0 %v1485
    %2027 = vmatprep.subr.mxu0 0.0
    %2028 = vmatpush1.msra.mxu0 %v1486
    %2029 = vmatprep.subr.mxu0 0.0
    %2030 = vmatpush1.msra.mxu0 %v1487
    %2031 = vmatprep.subr.mxu0 0.0
    %2032 = vmatpush1.msra.mxu0 %v1488
    %2033 = vmatprep.subr.mxu0 0.0
    %2034 = vmatpush1.msra.mxu0 %v1489
    %2035 = vmatprep.subr.mxu0 0.0
    %2036 = vmatpush1.msra.mxu0 %v1490
    %2037 = vmatprep.subr.mxu0 0.0
    %2038 = vmatpush1.msra.mxu0 %v1491
    %2039 = vmatprep.subr.mxu0 0.0
    %2040 = vmatpush1.msra.mxu0 %v1492
    %2041 = vmatprep.subr.mxu0 0.0
    %2042 = vmatpush1.msra.mxu0 %v1493
    %2043 = vmatprep.subr.mxu0 0.0
    %2044 = vmatpush1.msra.mxu0 %v1494
    %2045 = vmatprep.mubr.f32.mxu0 %v1201
    %2046 = vmatmul.mubr.f32.gmra.mrb[0].mxu0 %v1187
    %v2047 = vpop.f32.mrb[0].mxu0
    %v2048 = vpop.f32.mrb[0].mxu0
    %2049 = vmatprep.mubr.f32.mxu0 %v1279
    %2050 = vmatmul.mubr.f32.gmra.mrb[0].mxu0 %v1274
    %v2051 = vpop.f32.mrb[0].mxu0
    %v2052 = vadd.f32 %v1969, %v2051
    %v2053 = vpop.f32.mrb[0].mxu0
    %2054 = vmatprep.mubr.f32.mxu0 %v1206
    %2055 = vmatmul.mubr.f32.gmra.mrb[0].mxu0 %v1192
    %v2056 = vpop.f32.mrb[0].mxu0
    %v2057 = vpop.f32.mrb[0].mxu0
    %2058 = vmatprep.mubr.f32.mxu0 %v1280
    %2059 = vmatmul.mubr.f32.gmra.mrb[0].mxu0 %v1275
    %v2060 = vpop.f32.mrb[0].mxu0
    %v2061 = vadd.f32 %v1978, %v2060
    %v2062 = vpop.f32.mrb[0].mxu0
    %2063 = vdwg.mxu0
    %2064 = vmatprep.subr.mxu0 0.0
    %2065 = vmatpush1.msra.mxu0 %v1495
    %2066 = vmatprep.subr.mxu0 0.0
    %2067 = vmatpush1.msra.mxu0 %v1496
    %2068 = vmatprep.subr.mxu0 0.0
    %2069 = vmatpush1.msra.mxu0 %v1497
    %2070 = vmatprep.subr.mxu0 0.0
    %2071 = vmatpush1.msra.mxu0 %v1498
    %2072 = vmatprep.subr.mxu0 0.0
    %2073 = vmatpush1.msra.mxu0 %v1499
    %2074 = vmatprep.subr.mxu0 0.0
    %2075 = vmatpush1.msra.mxu0 %v1500
    %2076 = vmatprep.subr.mxu0 0.0
    %2077 = vmatpush1.msra.mxu0 %v1501
    %2078 = vmatprep.subr.mxu0 0.0
    %2079 = vmatpush1.msra.mxu0 %v1502
    %2080 = vmatprep.subr.mxu0 0.0
    %2081 = vmatpush1.msra.mxu0 %v1503
    %2082 = vmatprep.subr.mxu0 0.0
    %2083 = vmatpush1.msra.mxu0 %v1504
    %2084 = vmatprep.subr.mxu0 0.0
    %2085 = vmatpush1.msra.mxu0 %v1505
    %2086 = vmatprep.subr.mxu0 0.0
    %2087 = vmatpush1.msra.mxu0 %v1506
    %2088 = vmatprep.subr.mxu0 0.0
    %2089 = vmatpush1.msra.mxu0 %v1507
    %2090 = vmatprep.subr.mxu0 0.0
    %2091 = vmatpush1.msra.mxu0 %v1508
    %2092 = vmatprep.subr.mxu0 0.0
    %2093 = vmatpush1.msra.mxu0 %v1509
    %2094 = vmatprep.subr.mxu0 0.0
    %2095 = vmatpush1.msra.mxu0 %v1510
    %2096 = vmatprep.subr.mxu0 0.0
    %2097 = vmatpush1.msra.mxu0 %v1511
    %2098 = vmatprep.subr.mxu0 0.0
    %2099 = vmatpush1.msra.mxu0 %v1512
    %2100 = vmatprep.subr.mxu0 0.0
    %2101 = vmatpush1.msra.mxu0 %v1513
    %2102 = vmatprep.subr.mxu0 0.0
    %2103 = vmatpush1.msra.mxu0 %v1514
    %2104 = vmatprep.subr.mxu0 0.0
    %2105 = vmatpush1.msra.mxu0 %v1515
    %2106 = vmatprep.subr.mxu0 0.0
    %2107 = vmatpush1.msra.mxu0 %v1516
    %2108 = vmatprep.subr.mxu0 0.0
    %2109 = vmatpush1.msra.mxu0 %v1517
    %2110 = vmatprep.subr.mxu0 0.0
    %2111 = vmatpush1.msra.mxu0 %v1518
    %2112 = vmatprep.subr.mxu0 0.0
    %2113 = vmatpush1.msra.mxu0 %v1519
    %2114 = vmatprep.subr.mxu0 0.0
    %2115 = vmatpush1.msra.mxu0 %v1520
    %2116 = vmatprep.subr.mxu0 0.0
    %2117 = vmatpush1.msra.mxu0 %v1521
    %2118 = vmatprep.subr.mxu0 0.0
    %2119 = vmatpush1.msra.mxu0 %v1522
    %2120 = vmatprep.subr.mxu0 0.0
    %2121 = vmatpush1.msra.mxu0 %v1523
    %2122 = vmatprep.subr.mxu0 0.0
    %2123 = vmatpush1.msra.mxu0 %v1524
    %2124 = vmatprep.subr.mxu0 0.0
    %2125 = vmatpush1.msra.mxu0 %v1525
    %2126 = vmatprep.subr.mxu0 0.0
    %2127 = vmatpush1.msra.mxu0 %v1526
    %2128 = vmatprep.mubr.f32.mxu0 %v1229
    %2129 = vmatmul.mubr.f32.gmra.mrb[0].mxu0 %v1215
    %v2130 = vpop.f32.mrb[0].mxu0
    %v2131 = vpop.f32.mrb[0].mxu0
    %2132 = vmatprep.mubr.f32.mxu0 %v1289
    %2133 = vmatmul.mubr.f32.gmra.mrb[0].mxu0 %v1284
    %v2134 = vpop.f32.mrb[0].mxu0
    %v2135 = vadd.f32 %v2052, %v2134
    %v2136 = vpop.f32.mrb[0].mxu0
    %2137 = vmatprep.mubr.f32.mxu0 %v1234
    %2138 = vmatmul.mubr.f32.gmra.mrb[0].mxu0 %v1220
    %v2139 = vpop.f32.mrb[0].mxu0
    %v2140 = vpop.f32.mrb[0].mxu0
    %2141 = vmatprep.mubr.f32.mxu0 %v1290
    %2142 = vmatmul.mubr.f32.gmra.mrb[0].mxu0 %v1285
    %v2143 = vpop.f32.mrb[0].mxu0
    %v2144 = vadd.f32 %v2061, %v2143
    %v2145 = vpop.f32.mrb[0].mxu0
    %2146 = vdwg.mxu0
    %2147 = vmatprep.subr.mxu0 0.0
    %2148 = vmatpush1.msra.mxu0 %v1527
    %2149 = vmatprep.subr.mxu0 0.0
    %2150 = vmatpush1.msra.mxu0 %v1528
    %2151 = vmatprep.subr.mxu0 0.0
    %2152 = vmatpush1.msra.mxu0 %v1529
    %2153 = vmatprep.subr.mxu0 0.0
    %2154 = vmatpush1.msra.mxu0 %v1530
    %2155 = vmatprep.subr.mxu0 0.0
    %2156 = vmatpush1.msra.mxu0 %v1531
    %2157 = vmatprep.subr.mxu0 0.0
    %2158 = vmatpush1.msra.mxu0 %v1532
    %2159 = vmatprep.subr.mxu0 0.0
    %2160 = vmatpush1.msra.mxu0 %v1533
    %2161 = vmatprep.subr.mxu0 0.0
    %2162 = vmatpush1.msra.mxu0 %v1534
    %2163 = vmatprep.subr.mxu0 0.0
    %2164 = vmatpush1.msra.mxu0 %v1535
    %2165 = vmatprep.subr.mxu0 0.0
    %2166 = vmatpush1.msra.mxu0 %v1536
    %2167 = vmatprep.subr.mxu0 0.0
    %2168 = vmatpush1.msra.mxu0 %v1537
    %2169 = vmatprep.subr.mxu0 0.0
    %2170 = vmatpush1.msra.mxu0 %v1538
    %2171 = vmatprep.subr.mxu0 0.0
    %2172 = vmatpush1.msra.mxu0 %v1539
    %2173 = vmatprep.subr.mxu0 0.0
    %2174 = vmatpush1.msra.mxu0 %v1540
    %2175 = vmatprep.subr.mxu0 0.0
    %2176 = vmatpush1.msra.mxu0 %v1541
    %2177 = vmatprep.subr.mxu0 0.0
    %2178 = vmatpush1.msra.mxu0 %v1542
    %2179 = vmatprep.subr.mxu0 0.0
    %2180 = vmatpush1.msra.mxu0 %v1543
    %2181 = vmatprep.subr.mxu0 0.0
    %2182 = vmatpush1.msra.mxu0 %v1544
    %2183 = vmatprep.subr.mxu0 0.0
    %2184 = vmatpush1.msra.mxu0 %v1545
    %2185 = vmatprep.subr.mxu0 0.0
    %2186 = vmatpush1.msra.mxu0 %v1546
    %2187 = vmatprep.subr.mxu0 0.0
    %2188 = vmatpush1.msra.mxu0 %v1547
    %2189 = vmatprep.subr.mxu0 0.0
    %2190 = vmatpush1.msra.mxu0 %v1548
    %2191 = vmatprep.subr.mxu0 0.0
    %2192 = vmatpush1.msra.mxu0 %v1549
    %2193 = vmatprep.subr.mxu0 0.0
    %2194 = vmatpush1.msra.mxu0 %v1550
    %2195 = vmatprep.subr.mxu0 0.0
    %2196 = vmatpush1.msra.mxu0 %v1551
    %2197 = vmatprep.subr.mxu0 0.0
    %2198 = vmatpush1.msra.mxu0 %v1552
    %2199 = vmatprep.subr.mxu0 0.0
    %2200 = vmatpush1.msra.mxu0 %v1553
    %2201 = vmatprep.subr.mxu0 0.0
    %2202 = vmatpush1.msra.mxu0 %v1554
    %2203 = vmatprep.subr.mxu0 0.0
    %2204 = vmatpush1.msra.mxu0 %v1555
    %2205 = vmatprep.subr.mxu0 0.0
    %2206 = vmatpush1.msra.mxu0 %v1556
    %2207 = vmatprep.subr.mxu0 0.0
    %2208 = vmatpush1.msra.mxu0 %v1557
    %2209 = vmatprep.subr.mxu0 0.0
    %2210 = vmatpush1.msra.mxu0 %v1558
    %2211 = vmatprep.mubr.f32.mxu0 %v1257
    %2212 = vmatmul.mubr.f32.gmra.mrb[0].mxu0 %v1243
    %v2213 = vpop.f32.mrb[0].mxu0
    %v2214 = vpop.f32.mrb[0].mxu0
    %2215 = vmatprep.mubr.f32.mxu0 %v1299
    %2216 = vmatmul.mubr.f32.gmra.mrb[0].mxu0 %v1294
    %v2217 = vpop.f32.mrb[0].mxu0
    %v2218 = vadd.f32 %v2135, %v2217
    %v2219 = vpop.f32.mrb[0].mxu0
    %2220 = vmatprep.mubr.f32.mxu0 %v1262
    %2221 = vmatmul.mubr.f32.gmra.mrb[0].mxu0 %v1248
    %v2222 = vpop.f32.mrb[0].mxu0
    %v2223 = vpop.f32.mrb[0].mxu0
    %2224 = vmatprep.mubr.f32.mxu0 %v1300
    %2225 = vmatmul.mubr.f32.gmra.mrb[0].mxu0 %v1295
    %v2226 = vpop.f32.mrb[0].mxu0
    %v2227 = vadd.f32 %v2144, %v2226
    %v2228 = vpop.f32.mrb[0].mxu0
    %2229 = vdwg.mxu0
    %v2230 = vmax.f32 %v2218, 0.0
    %v2231 = vmax.f32 %v2227, 0.0
    %v2234 = vrot.slane %v2231, 7
    %vm2235 = vcmask 1041409
    %v2236 = vsel %vm2235, %v2234, %v2230
    %v2238 = vrot.slane %v2230, 1
    %v2239 = vsel %vm2235, %v2231, %v2238
    %v2241 = vrot.slane %v2230, 2
    %v2242 = vrot.slane %v2231, 1
    %v2243 = vsel %vm2235, %v2242, %v2241
    %v2245 = vrot.slane %v2230, 3
    %v2246 = vrot.slane %v2231, 2
    %v2247 = vsel %vm2235, %v2246, %v2245
    %v2249 = vrot.slane %v2230, 4
    %v2250 = vrot.slane %v2231, 3
    %v2251 = vsel %vm2235, %v2250, %v2249
    %v2253 = vrot.slane %v2230, 5
    %v2254 = vrot.slane %v2231, 4
    %v2255 = vsel %vm2235, %v2254, %v2253
    %v2257 = vrot.slane %v2230, 6
    %v2258 = vrot.slane %v2231, 5
    %v2259 = vsel %vm2235, %v2258, %v2257
    %v2261 = vrot.slane %v2230, 7
    %v2262 = vrot.slane %v2231, 6
    %v2263 = vsel %vm2235, %v2262, %v2261
    %v2265 = vld [vmem:[#allocation7] sm:$0xff]
    %v2266 = vld [vmem:[#allocation7 + $0x8] sm:$0xff]
    %v2267 = vld [vmem:[#allocation7 + $0x10] sm:$0xff]
    %v2268 = vld [vmem:[#allocation7 + $0x18] sm:$0xff]
    %v2269 = vld [vmem:[#allocation7 + $0x20] sm:$0xff]
    %v2270 = vld [vmem:[#allocation7 + $0x28] sm:$0xff]
    %v2271 = vld [vmem:[#allocation7 + $0x30] sm:$0xff]
    %v2272 = vld [vmem:[#allocation7 + $0x38] sm:$0xff]
    %v2273 = vld [vmem:[#allocation7 + $0x40] sm:$0xff]
    %v2274 = vld [vmem:[#allocation7 + $0x48] sm:$0xff]
    %v2275 = vld [vmem:[#allocation7 + $0x50] sm:$0xff]
    %v2276 = vld [vmem:[#allocation7 + $0x58] sm:$0xff]
    %v2277 = vld [vmem:[#allocation7 + $0x60] sm:$0xff]
    %v2278 = vld [vmem:[#allocation7 + $0x68] sm:$0xff]
    %v2279 = vld [vmem:[#allocation7 + $0x70] sm:$0xff]
    %v2280 = vld [vmem:[#allocation7 + $0x78] sm:$0xff]
    %v2281 = vld [vmem:[#allocation7 + $0x80] sm:$0xff]
    %v2282 = vld [vmem:[#allocation7 + $0x88] sm:$0xff]
    %v2283 = vld [vmem:[#allocation7 + $0x90] sm:$0xff]
    %v2284 = vld [vmem:[#allocation7 + $0x98] sm:$0xff]
    %v2285 = vld [vmem:[#allocation7 + $0xa0] sm:$0xff]
    %v2286 = vld [vmem:[#allocation7 + $0xa8] sm:$0xff]
    %v2287 = vld [vmem:[#allocation7 + $0xb0] sm:$0xff]
    %v2288 = vld [vmem:[#allocation7 + $0xb8] sm:$0xff]
    %v2289 = vld [vmem:[#allocation7 + $0xc0] sm:$0xff]
    %v2290 = vld [vmem:[#allocation7 + $0xc8] sm:$0xff]
    %v2291 = vld [vmem:[#allocation7 + $0xd0] sm:$0xff]
    %v2292 = vld [vmem:[#allocation7 + $0xd8] sm:$0xff]
    %v2293 = vld [vmem:[#allocation7 + $0xe0] sm:$0xff]
    %v2294 = vld [vmem:[#allocation7 + $0xe8] sm:$0xff]
    %v2295 = vld [vmem:[#allocation7 + $0xf0] sm:$0xff]
    %v2296 = vld [vmem:[#allocation7 + $0xf8] sm:$0xff]
    %v2297 = vld [vmem:[#allocation7 + $0x100] sm:$0xff]
    %v2298 = vld [vmem:[#allocation7 + $0x108] sm:$0xff]
    %v2299 = vld [vmem:[#allocation7 + $0x110] sm:$0xff]
    %v2300 = vld [vmem:[#allocation7 + $0x118] sm:$0xff]
    %v2301 = vld [vmem:[#allocation7 + $0x120] sm:$0xff]
    %v2302 = vld [vmem:[#allocation7 + $0x128] sm:$0xff]
    %v2303 = vld [vmem:[#allocation7 + $0x130] sm:$0xff]
    %v2304 = vld [vmem:[#allocation7 + $0x138] sm:$0xff]
    %v2305 = vld [vmem:[#allocation7 + $0x140] sm:$0xff]
    %v2306 = vld [vmem:[#allocation7 + $0x148] sm:$0xff]
    %v2307 = vld [vmem:[#allocation7 + $0x150] sm:$0xff]
    %v2308 = vld [vmem:[#allocation7 + $0x158] sm:$0xff]
    %v2309 = vld [vmem:[#allocation7 + $0x160] sm:$0xff]
    %v2310 = vld [vmem:[#allocation7 + $0x168] sm:$0xff]
    %v2311 = vld [vmem:[#allocation7 + $0x170] sm:$0xff]
    %v2312 = vld [vmem:[#allocation7 + $0x178] sm:$0xff]
    %v2313 = vld [vmem:[#allocation7 + $0x180] sm:$0xff]
    %v2314 = vld [vmem:[#allocation7 + $0x188] sm:$0xff]
    %v2315 = vld [vmem:[#allocation7 + $0x190] sm:$0xff]
    %v2316 = vld [vmem:[#allocation7 + $0x198] sm:$0xff]
    %v2317 = vld [vmem:[#allocation7 + $0x1a0] sm:$0xff]
    %v2318 = vld [vmem:[#allocation7 + $0x1a8] sm:$0xff]
    %v2319 = vld [vmem:[#allocation7 + $0x1b0] sm:$0xff]
    %v2320 = vld [vmem:[#allocation7 + $0x1b8] sm:$0xff]
    %v2321 = vld [vmem:[#allocation7 + $0x1c0] sm:$0xff]
    %v2322 = vld [vmem:[#allocation7 + $0x1c8] sm:$0xff]
    %v2323 = vld [vmem:[#allocation7 + $0x1d0] sm:$0xff]
    %v2324 = vld [vmem:[#allocation7 + $0x1d8] sm:$0xff]
    %v2325 = vld [vmem:[#allocation7 + $0x1e0] sm:$0xff]
    %v2326 = vld [vmem:[#allocation7 + $0x1e8] sm:$0xff]
    %v2327 = vld [vmem:[#allocation7 + $0x1f0] sm:$0xff]
    %v2328 = vld [vmem:[#allocation7 + $0x1f8] sm:$0xff]
    %v2329 = vld [vmem:[#allocation7 + $0x200] sm:$0xff]
    %v2330 = vld [vmem:[#allocation7 + $0x208] sm:$0xff]
    %v2331 = vld [vmem:[#allocation7 + $0x210] sm:$0xff]
    %v2332 = vld [vmem:[#allocation7 + $0x218] sm:$0xff]
    %v2333 = vld [vmem:[#allocation7 + $0x220] sm:$0xff]
    %v2334 = vld [vmem:[#allocation7 + $0x228] sm:$0xff]
    %v2335 = vld [vmem:[#allocation7 + $0x230] sm:$0xff]
    %v2336 = vld [vmem:[#allocation7 + $0x238] sm:$0xff]
    %v2337 = vld [vmem:[#allocation7 + $0x240] sm:$0xff]
    %v2338 = vld [vmem:[#allocation7 + $0x248] sm:$0xff]
    %v2339 = vld [vmem:[#allocation7 + $0x250] sm:$0xff]
    %v2340 = vld [vmem:[#allocation7 + $0x258] sm:$0xff]
    %v2341 = vld [vmem:[#allocation7 + $0x260] sm:$0xff]
    %v2342 = vld [vmem:[#allocation7 + $0x268] sm:$0xff]
    %v2343 = vld [vmem:[#allocation7 + $0x270] sm:$0xff]
    %v2344 = vld [vmem:[#allocation7 + $0x278] sm:$0xff]
    %v2345 = vld [vmem:[#allocation7 + $0x280] sm:$0xff]
    %v2346 = vld [vmem:[#allocation7 + $0x288] sm:$0xff]
    %v2347 = vld [vmem:[#allocation7 + $0x290] sm:$0xff]
    %v2348 = vld [vmem:[#allocation7 + $0x298] sm:$0xff]
    %v2349 = vld [vmem:[#allocation7 + $0x2a0] sm:$0xff]
    %v2350 = vld [vmem:[#allocation7 + $0x2a8] sm:$0xff]
    %v2351 = vld [vmem:[#allocation7 + $0x2b0] sm:$0xff]
    %v2352 = vld [vmem:[#allocation7 + $0x2b8] sm:$0xff]
    %v2353 = vld [vmem:[#allocation7 + $0x2c0] sm:$0xff]
    %v2354 = vld [vmem:[#allocation7 + $0x2c8] sm:$0xff]
    %v2355 = vld [vmem:[#allocation7 + $0x2d0] sm:$0xff]
    %v2356 = vld [vmem:[#allocation7 + $0x2d8] sm:$0xff]
    %v2357 = vld [vmem:[#allocation7 + $0x2e0] sm:$0xff]
    %v2358 = vld [vmem:[#allocation7 + $0x2e8] sm:$0xff]
    %v2359 = vld [vmem:[#allocation7 + $0x2f0] sm:$0xff]
    %v2360 = vld [vmem:[#allocation7 + $0x2f8] sm:$0xff]
    %v2361 = vld [vmem:[#allocation7 + $0x300] sm:$0xff]
    %v2362 = vld [vmem:[#allocation7 + $0x308] sm:$0xff]
    %v2363 = vld [vmem:[#allocation7 + $0x310] sm:$0xff]
    %v2364 = vld [vmem:[#allocation7 + $0x318] sm:$0xff]
    %v2365 = vld [vmem:[#allocation7 + $0x320] sm:$0xff]
    %v2366 = vld [vmem:[#allocation7 + $0x328] sm:$0xff]
    %v2367 = vld [vmem:[#allocation7 + $0x330] sm:$0xff]
    %v2368 = vld [vmem:[#allocation7 + $0x338] sm:$0xff]
    %v2369 = vld [vmem:[#allocation7 + $0x340] sm:$0xff]
    %v2370 = vld [vmem:[#allocation7 + $0x348] sm:$0xff]
    %v2371 = vld [vmem:[#allocation7 + $0x350] sm:$0xff]
    %v2372 = vld [vmem:[#allocation7 + $0x358] sm:$0xff]
    %v2373 = vld [vmem:[#allocation7 + $0x360] sm:$0xff]
    %v2374 = vld [vmem:[#allocation7 + $0x368] sm:$0xff]
    %v2375 = vld [vmem:[#allocation7 + $0x370] sm:$0xff]
    %v2376 = vld [vmem:[#allocation7 + $0x378] sm:$0xff]
    %v2377 = vld [vmem:[#allocation7 + $0x380] sm:$0xff]
    %v2378 = vld [vmem:[#allocation7 + $0x388] sm:$0xff]
    %v2379 = vld [vmem:[#allocation7 + $0x390] sm:$0xff]
    %v2380 = vld [vmem:[#allocation7 + $0x398] sm:$0xff]
    %v2381 = vld [vmem:[#allocation7 + $0x3a0] sm:$0xff]
    %v2382 = vld [vmem:[#allocation7 + $0x3a8] sm:$0xff]
    %v2383 = vld [vmem:[#allocation7 + $0x3b0] sm:$0xff]
    %v2384 = vld [vmem:[#allocation7 + $0x3b8] sm:$0xff]
    %v2385 = vld [vmem:[#allocation7 + $0x3c0] sm:$0xff]
    %v2386 = vld [vmem:[#allocation7 + $0x3c8] sm:$0xff]
    %v2387 = vld [vmem:[#allocation7 + $0x3d0] sm:$0xff]
    %v2388 = vld [vmem:[#allocation7 + $0x3d8] sm:$0xff]
    %v2389 = vld [vmem:[#allocation7 + $0x3e0] sm:$0xff]
    %v2390 = vld [vmem:[#allocation7 + $0x3e8] sm:$0xff]
    %v2391 = vld [vmem:[#allocation7 + $0x3f0] sm:$0xff]
    %v2392 = vld [vmem:[#allocation7 + $0x3f8] sm:$0xff]
    %v2393 = vld [vmem:[%s8] sm:$0x1]
    %v2395 = vlaneseq
    %v2396 = vshrl.u32 %v2395, 7
    %v2397 = vsub.s32 0, %v2396
    %v2398 = vrot.slane %v2393, %v2397
    %2400 = vmatprep.subr.mxu0 0.0
    %2401 = vmatpush1.msra.mxu0 %v2265
    %2402 = vmatprep.subr.mxu0 0.0
    %2403 = vmatpush1.msra.mxu0 %v2266
    %2404 = vmatprep.subr.mxu0 0.0
    %2405 = vmatpush1.msra.mxu0 %v2267
    %2406 = vmatprep.subr.mxu0 0.0
    %2407 = vmatpush1.msra.mxu0 %v2268
    %2408 = vmatprep.subr.mxu0 0.0
    %2409 = vmatpush1.msra.mxu0 %v2269
    %2410 = vmatprep.subr.mxu0 0.0
    %2411 = vmatpush1.msra.mxu0 %v2270
    %2412 = vmatprep.subr.mxu0 0.0
    %2413 = vmatpush1.msra.mxu0 %v2271
    %2414 = vmatprep.subr.mxu0 0.0
    %2415 = vmatpush1.msra.mxu0 %v2272
    %2416 = vmatprep.subr.mxu0 0.0
    %2417 = vmatpush1.msra.mxu0 %v2273
    %2418 = vmatprep.subr.mxu0 0.0
    %2419 = vmatpush1.msra.mxu0 %v2274
    %2420 = vmatprep.subr.mxu0 0.0
    %2421 = vmatpush1.msra.mxu0 %v2275
    %2422 = vmatprep.subr.mxu0 0.0
    %2423 = vmatpush1.msra.mxu0 %v2276
    %2424 = vmatprep.subr.mxu0 0.0
    %2425 = vmatpush1.msra.mxu0 %v2277
    %2426 = vmatprep.subr.mxu0 0.0
    %2427 = vmatpush1.msra.mxu0 %v2278
    %2428 = vmatprep.subr.mxu0 0.0
    %2429 = vmatpush1.msra.mxu0 %v2279
    %2430 = vmatprep.subr.mxu0 0.0
    %2431 = vmatpush1.msra.mxu0 %v2280
    %2432 = vmatprep.subr.mxu0 0.0
    %2433 = vmatpush1.msra.mxu0 %v2281
    %2434 = vmatprep.subr.mxu0 0.0
    %2435 = vmatpush1.msra.mxu0 %v2282
    %2436 = vmatprep.subr.mxu0 0.0
    %2437 = vmatpush1.msra.mxu0 %v2283
    %2438 = vmatprep.subr.mxu0 0.0
    %2439 = vmatpush1.msra.mxu0 %v2284
    %2440 = vmatprep.subr.mxu0 0.0
    %2441 = vmatpush1.msra.mxu0 %v2285
    %2442 = vmatprep.subr.mxu0 0.0
    %2443 = vmatpush1.msra.mxu0 %v2286
    %2444 = vmatprep.subr.mxu0 0.0
    %2445 = vmatpush1.msra.mxu0 %v2287
    %2446 = vmatprep.subr.mxu0 0.0
    %2447 = vmatpush1.msra.mxu0 %v2288
    %2448 = vmatprep.subr.mxu0 0.0
    %2449 = vmatpush1.msra.mxu0 %v2289
    %2450 = vmatprep.subr.mxu0 0.0
    %2451 = vmatpush1.msra.mxu0 %v2290
    %2452 = vmatprep.subr.mxu0 0.0
    %2453 = vmatpush1.msra.mxu0 %v2291
    %2454 = vmatprep.subr.mxu0 0.0
    %2455 = vmatpush1.msra.mxu0 %v2292
    %2456 = vmatprep.subr.mxu0 0.0
    %2457 = vmatpush1.msra.mxu0 %v2293
    %2458 = vmatprep.subr.mxu0 0.0
    %2459 = vmatpush1.msra.mxu0 %v2294
    %2460 = vmatprep.subr.mxu0 0.0
    %2461 = vmatpush1.msra.mxu0 %v2295
    %2462 = vmatprep.subr.mxu0 0.0
    %2463 = vmatpush1.msra.mxu0 %v2296
    %2464 = vmatprep.mubr.f32.mxu0 %v2239
    %2465 = vmatmul.mubr.f32.gmra.mrb[0].mxu0 %v2236
    %v2466 = vpop.f32.mrb[0].mxu0
    %v2467 = vadd.f32 %v2398, %v2466
    %v2468 = vpop.f32.mrb[0].mxu0
    %2469 = vdwg.mxu0
    %2470 = vmatprep.subr.mxu0 0.0
    %2471 = vmatpush1.msra.mxu0 %v2297
    %2472 = vmatprep.subr.mxu0 0.0
    %2473 = vmatpush1.msra.mxu0 %v2298
    %2474 = vmatprep.subr.mxu0 0.0
    %2475 = vmatpush1.msra.mxu0 %v2299
    %2476 = vmatprep.subr.mxu0 0.0
    %2477 = vmatpush1.msra.mxu0 %v2300
    %2478 = vmatprep.subr.mxu0 0.0
    %2479 = vmatpush1.msra.mxu0 %v2301
    %2480 = vmatprep.subr.mxu0 0.0
    %2481 = vmatpush1.msra.mxu0 %v2302
    %2482 = vmatprep.subr.mxu0 0.0
    %2483 = vmatpush1.msra.mxu0 %v2303
    %2484 = vmatprep.subr.mxu0 0.0
    %2485 = vmatpush1.msra.mxu0 %v2304
    %2486 = vmatprep.subr.mxu0 0.0
    %2487 = vmatpush1.msra.mxu0 %v2305
    %2488 = vmatprep.subr.mxu0 0.0
    %2489 = vmatpush1.msra.mxu0 %v2306
    %2490 = vmatprep.subr.mxu0 0.0
    %2491 = vmatpush1.msra.mxu0 %v2307
    %2492 = vmatprep.subr.mxu0 0.0
    %2493 = vmatpush1.msra.mxu0 %v2308
    %2494 = vmatprep.subr.mxu0 0.0
    %2495 = vmatpush1.msra.mxu0 %v2309
    %2496 = vmatprep.subr.mxu0 0.0
    %2497 = vmatpush1.msra.mxu0 %v2310
    %2498 = vmatprep.subr.mxu0 0.0
    %2499 = vmatpush1.msra.mxu0 %v2311
    %2500 = vmatprep.subr.mxu0 0.0
    %2501 = vmatpush1.msra.mxu0 %v2312
    %2502 = vmatprep.subr.mxu0 0.0
    %2503 = vmatpush1.msra.mxu0 %v2313
    %2504 = vmatprep.subr.mxu0 0.0
    %2505 = vmatpush1.msra.mxu0 %v2314
    %2506 = vmatprep.subr.mxu0 0.0
    %2507 = vmatpush1.msra.mxu0 %v2315
    %2508 = vmatprep.subr.mxu0 0.0
    %2509 = vmatpush1.msra.mxu0 %v2316
    %2510 = vmatprep.subr.mxu0 0.0
    %2511 = vmatpush1.msra.mxu0 %v2317
    %2512 = vmatprep.subr.mxu0 0.0
    %2513 = vmatpush1.msra.mxu0 %v2318
    %2514 = vmatprep.subr.mxu0 0.0
    %2515 = vmatpush1.msra.mxu0 %v2319
    %2516 = vmatprep.subr.mxu0 0.0
    %2517 = vmatpush1.msra.mxu0 %v2320
    %2518 = vmatprep.subr.mxu0 0.0
    %2519 = vmatpush1.msra.mxu0 %v2321
    %2520 = vmatprep.subr.mxu0 0.0
    %2521 = vmatpush1.msra.mxu0 %v2322
    %2522 = vmatprep.subr.mxu0 0.0
    %2523 = vmatpush1.msra.mxu0 %v2323
    %2524 = vmatprep.subr.mxu0 0.0
    %2525 = vmatpush1.msra.mxu0 %v2324
    %2526 = vmatprep.subr.mxu0 0.0
    %2527 = vmatpush1.msra.mxu0 %v2325
    %2528 = vmatprep.subr.mxu0 0.0
    %2529 = vmatpush1.msra.mxu0 %v2326
    %2530 = vmatprep.subr.mxu0 0.0
    %2531 = vmatpush1.msra.mxu0 %v2327
    %2532 = vmatprep.subr.mxu0 0.0
    %2533 = vmatpush1.msra.mxu0 %v2328
    %2534 = vmatprep.mubr.f32.mxu0 %v2247
    %2535 = vmatmul.mubr.f32.gmra.mrb[0].mxu0 %v2243
    %v2536 = vpop.f32.mrb[0].mxu0
    %v2537 = vadd.f32 %v2467, %v2536
    %v2538 = vpop.f32.mrb[0].mxu0
    %2539 = vdwg.mxu0
    %2540 = vmatprep.subr.mxu0 0.0
    %2541 = vmatpush1.msra.mxu0 %v2329
    %2542 = vmatprep.subr.mxu0 0.0
    %2543 = vmatpush1.msra.mxu0 %v2330
    %2544 = vmatprep.subr.mxu0 0.0
    %2545 = vmatpush1.msra.mxu0 %v2331
    %2546 = vmatprep.subr.mxu0 0.0
    %2547 = vmatpush1.msra.mxu0 %v2332
    %2548 = vmatprep.subr.mxu0 0.0
    %2549 = vmatpush1.msra.mxu0 %v2333
    %2550 = vmatprep.subr.mxu0 0.0
    %2551 = vmatpush1.msra.mxu0 %v2334
    %2552 = vmatprep.subr.mxu0 0.0
    %2553 = vmatpush1.msra.mxu0 %v2335
    %2554 = vmatprep.subr.mxu0 0.0
    %2555 = vmatpush1.msra.mxu0 %v2336
    %2556 = vmatprep.subr.mxu0 0.0
    %2557 = vmatpush1.msra.mxu0 %v2337
    %2558 = vmatprep.subr.mxu0 0.0
    %2559 = vmatpush1.msra.mxu0 %v2338
    %2560 = vmatprep.subr.mxu0 0.0
    %2561 = vmatpush1.msra.mxu0 %v2339
    %2562 = vmatprep.subr.mxu0 0.0
    %2563 = vmatpush1.msra.mxu0 %v2340
    %2564 = vmatprep.subr.mxu0 0.0
    %2565 = vmatpush1.msra.mxu0 %v2341
    %2566 = vmatprep.subr.mxu0 0.0
    %2567 = vmatpush1.msra.mxu0 %v2342
    %2568 = vmatprep.subr.mxu0 0.0
    %2569 = vmatpush1.msra.mxu0 %v2343
    %2570 = vmatprep.subr.mxu0 0.0
    %2571 = vmatpush1.msra.mxu0 %v2344
    %2572 = vmatprep.subr.mxu0 0.0
    %2573 = vmatpush1.msra.mxu0 %v2345
    %2574 = vmatprep.subr.mxu0 0.0
    %2575 = vmatpush1.msra.mxu0 %v2346
    %2576 = vmatprep.subr.mxu0 0.0
    %2577 = vmatpush1.msra.mxu0 %v2347
    %2578 = vmatprep.subr.mxu0 0.0
    %2579 = vmatpush1.msra.mxu0 %v2348
    %2580 = vmatprep.subr.mxu0 0.0
    %2581 = vmatpush1.msra.mxu0 %v2349
    %2582 = vmatprep.subr.mxu0 0.0
    %2583 = vmatpush1.msra.mxu0 %v2350
    %2584 = vmatprep.subr.mxu0 0.0
    %2585 = vmatpush1.msra.mxu0 %v2351
    %2586 = vmatprep.subr.mxu0 0.0
    %2587 = vmatpush1.msra.mxu0 %v2352
    %2588 = vmatprep.subr.mxu0 0.0
    %2589 = vmatpush1.msra.mxu0 %v2353
    %2590 = vmatprep.subr.mxu0 0.0
    %2591 = vmatpush1.msra.mxu0 %v2354
    %2592 = vmatprep.subr.mxu0 0.0
    %2593 = vmatpush1.msra.mxu0 %v2355
    %2594 = vmatprep.subr.mxu0 0.0
    %2595 = vmatpush1.msra.mxu0 %v2356
    %2596 = vmatprep.subr.mxu0 0.0
    %2597 = vmatpush1.msra.mxu0 %v2357
    %2598 = vmatprep.subr.mxu0 0.0
    %2599 = vmatpush1.msra.mxu0 %v2358
    %2600 = vmatprep.subr.mxu0 0.0
    %2601 = vmatpush1.msra.mxu0 %v2359
    %2602 = vmatprep.subr.mxu0 0.0
    %2603 = vmatpush1.msra.mxu0 %v2360
    %2604 = vmatprep.mubr.f32.mxu0 %v2255
    %2605 = vmatmul.mubr.f32.gmra.mrb[0].mxu0 %v2251
    %v2606 = vpop.f32.mrb[0].mxu0
    %v2607 = vadd.f32 %v2537, %v2606
    %v2608 = vpop.f32.mrb[0].mxu0
    %2609 = vdwg.mxu0
    %2610 = vmatprep.subr.mxu0 0.0
    %2611 = vmatpush1.msra.mxu0 %v2361
    %2612 = vmatprep.subr.mxu0 0.0
    %2613 = vmatpush1.msra.mxu0 %v2362
    %2614 = vmatprep.subr.mxu0 0.0
    %2615 = vmatpush1.msra.mxu0 %v2363
    %2616 = vmatprep.subr.mxu0 0.0
    %2617 = vmatpush1.msra.mxu0 %v2364
    %2618 = vmatprep.subr.mxu0 0.0
    %2619 = vmatpush1.msra.mxu0 %v2365
    %2620 = vmatprep.subr.mxu0 0.0
    %2621 = vmatpush1.msra.mxu0 %v2366
    %2622 = vmatprep.subr.mxu0 0.0
    %2623 = vmatpush1.msra.mxu0 %v2367
    %2624 = vmatprep.subr.mxu0 0.0
    %2625 = vmatpush1.msra.mxu0 %v2368
    %2626 = vmatprep.subr.mxu0 0.0
    %2627 = vmatpush1.msra.mxu0 %v2369
    %2628 = vmatprep.subr.mxu0 0.0
    %2629 = vmatpush1.msra.mxu0 %v2370
    %2630 = vmatprep.subr.mxu0 0.0
    %2631 = vmatpush1.msra.mxu0 %v2371
    %2632 = vmatprep.subr.mxu0 0.0
    %2633 = vmatpush1.msra.mxu0 %v2372
    %2634 = vmatprep.subr.mxu0 0.0
    %2635 = vmatpush1.msra.mxu0 %v2373
    %2636 = vmatprep.subr.mxu0 0.0
    %2637 = vmatpush1.msra.mxu0 %v2374
    %2638 = vmatprep.subr.mxu0 0.0
    %2639 = vmatpush1.msra.mxu0 %v2375
    %2640 = vmatprep.subr.mxu0 0.0
    %2641 = vmatpush1.msra.mxu0 %v2376
    %2642 = vmatprep.subr.mxu0 0.0
    %2643 = vmatpush1.msra.mxu0 %v2377
    %2644 = vmatprep.subr.mxu0 0.0
    %2645 = vmatpush1.msra.mxu0 %v2378
    %2646 = vmatprep.subr.mxu0 0.0
    %2647 = vmatpush1.msra.mxu0 %v2379
    %2648 = vmatprep.subr.mxu0 0.0
    %2649 = vmatpush1.msra.mxu0 %v2380
    %2650 = vmatprep.subr.mxu0 0.0
    %2651 = vmatpush1.msra.mxu0 %v2381
    %2652 = vmatprep.subr.mxu0 0.0
    %2653 = vmatpush1.msra.mxu0 %v2382
    %2654 = vmatprep.subr.mxu0 0.0
    %2655 = vmatpush1.msra.mxu0 %v2383
    %2656 = vmatprep.subr.mxu0 0.0
    %2657 = vmatpush1.msra.mxu0 %v2384
    %2658 = vmatprep.subr.mxu0 0.0
    %2659 = vmatpush1.msra.mxu0 %v2385
    %2660 = vmatprep.subr.mxu0 0.0
    %2661 = vmatpush1.msra.mxu0 %v2386
    %2662 = vmatprep.subr.mxu0 0.0
    %2663 = vmatpush1.msra.mxu0 %v2387
    %2664 = vmatprep.subr.mxu0 0.0
    %2665 = vmatpush1.msra.mxu0 %v2388
    %2666 = vmatprep.subr.mxu0 0.0
    %2667 = vmatpush1.msra.mxu0 %v2389
    %2668 = vmatprep.subr.mxu0 0.0
    %2669 = vmatpush1.msra.mxu0 %v2390
    %2670 = vmatprep.subr.mxu0 0.0
    %2671 = vmatpush1.msra.mxu0 %v2391
    %2672 = vmatprep.subr.mxu0 0.0
    %2673 = vmatpush1.msra.mxu0 %v2392
    %2674 = vmatprep.mubr.f32.mxu0 %v2263
    %2675 = vmatmul.mubr.f32.gmra.mrb[0].mxu0 %v2259
    %v2676 = vpop.f32.mrb[0].mxu0
    %v2677 = vadd.f32 %v2607, %v2676
    %v2678 = vpop.f32.mrb[0].mxu0
    %2679 = vdwg.mxu0
    %2680 = vst [vmem:[#allocation8] sm:$0x3] %v2677
    // Predicated region
    $region50: #{tpu_custom_call.1} parent=1 // pred_check
      _
    $region51: #{tpu_custom_call.1} parent=1 // pred_check_branch
      %2682 = sbr.rel (0) target = $region53
    $region52: #{tpu_custom_call.1} parent=1 // pred_region
      %s2684 = ssub.s32 32, 32
      %2685 = vsyncadd [#allocation4], %s2684
      %s2687 = sshll.u32 [#allocation8], 4
      %s2688 = int_to_ptr.vmem [resolvable:$true] %s2687
      %2690 = dma.vmem_to_hbm [thread:$0]  %s2688, 32, %s9, [#allocation4]
    $region53: #{tpu_custom_call.1} parent=1 // pred_fallthru
      _
    // Predicated region
    $region54: #{tpu_custom_call.1} parent=1 // pred_check
      _
    $region55: #{tpu_custom_call.1} parent=1 // pred_check_branch
      %2692 = sbr.rel (0) target = $region57
    $region56: #{tpu_custom_call.1} parent=1 // pred_region
      %2693 = dma.done [#allocation4], 32
    $region57: #{tpu_custom_call.1} parent=1 // pred_fallthru
      _
    %2694 = vsyncpa [#allocation3], 1
    %2695 = vsyncpa [#allocation6], 1
    %2696 = vsyncpa [#allocation4], 1

</llo_original>
